<compile_context>
chip_gen: v7x
topology: tpu7x:2x2x1
jax: 0.10.0
libtpu: 0.0.40
codegen_flags: <defaults>
</compile_context>

<pallas_src>
import jax
import jax.numpy as jnp
from jax import lax
from jax.experimental import pallas as pl
from jax.experimental.pallas import tpu as pltpu

LEAKY_SLOPE = 0.01   # torch.nn.LeakyReLU default negative_slope
LN_EPS = 1e-5        # torch.nn.LayerNorm default eps

_MLP_KEYS = ("w1", "b1", "g1", "be1",
             "w2", "b2", "g2", "be2",
             "w3", "b3", "g3", "be3")


# ----------------------------------------------------------------------------
# Shared in-kernel helpers (operate on jnp values + param refs)
# ----------------------------------------------------------------------------
def _linear(h, w_ref, b_ref):
    w = w_ref[...]
    if w.shape[0] == 1:
        # (N,1) @ (1,H) == broadcast multiply; avoids a K=1 MXU matmul.
        return h * w + b_ref[...]
    return jnp.dot(h, w, preferred_element_type=jnp.float32) + b_ref[...]


def _ln_lrelu(h, g_ref, be_ref):
    mu = jnp.mean(h, axis=-1, keepdims=True)
    var = jnp.mean(jnp.square(h - mu), axis=-1, keepdims=True)
    h = (h - mu) * lax.rsqrt(var + LN_EPS)
    h = h * g_ref[...] + be_ref[...]
    return jnp.where(h >= 0.0, h, LEAKY_SLOPE * h)


def _mlp3_apply(h, p_refs):
    """p_refs: 12 refs ordered (w,b,g,be) x 3 layers."""
    for i in range(3):
        w_ref, b_ref, g_ref, be_ref = p_refs[4 * i:4 * i + 4]
        h = _linear(h, w_ref, b_ref)
        h = _ln_lrelu(h, g_ref, be_ref)
    return h


# ----------------------------------------------------------------------------
# Tiling helpers
# ----------------------------------------------------------------------------
def _row_tile(n, cap=512):
    """Row-tile for (N, C) slabs: divides N, multiple of 8 (or == N)."""
    if n <= cap:
        return n
    for tm in range(cap - cap % 8, 7, -8):
        if n % tm == 0:
            return tm
    return n


def _time_block(t, cap=32):
    """Time-block for the GRU: divides T, multiple of 8 (or == T)."""
    if t <= cap:
        return t
    for tt in range(cap - cap % 8, 7, -8):
        if t % tt == 0:
            return tt
    return t


def _full_spec(a):
    nd = a.ndim
    return pl.BlockSpec(a.shape, lambda i, _nd=nd: (0,) * _nd)


# ----------------------------------------------------------------------------
# Kernel 1: fused input MLPs + hoisted GRU input-to-hidden matmul.
#   gi = concat(mlp(f0), mlp(loud)) @ Wih + (bih + [bhh_r, bhh_z, 0])
# ----------------------------------------------------------------------------
def _encode_kernel(*refs):
    f0_ref, ld_ref = refs[0], refs[1]
    f0_p = refs[2:14]
    ld_p = refs[14:26]
    wih_f0_ref, wih_ld_ref, bgi_ref = refs[26], refs[27], refs[28]
    gi_ref = refs[-1]

    h_f0 = _mlp3_apply(f0_ref[...].astype(jnp.float32), f0_p)
    h_ld = _mlp3_apply(ld_ref[...].astype(jnp.float32), ld_p)
    # concat([h_f0, h_ld], -1) @ Wih  ==  h_f0 @ Wih[:H] + h_ld @ Wih[H:2H]
    gi = (jnp.dot(h_f0, wih_f0_ref[...], preferred_element_type=jnp.float32)
          + jnp.dot(h_ld, wih_ld_ref[...], preferred_element_type=jnp.float32)
          + bgi_ref[...])
    gi_ref[...] = gi.astype(gi_ref.dtype)


def encode(f0_flat, ld_flat, f0_p, ld_p, wih, bias_gi, hidden):
    n = f0_flat.shape[0]
    tm = _row_tile(n)
    args = [f0_p[k] for k in _MLP_KEYS] + [ld_p[k] for k in _MLP_KEYS]
    args += [wih[:hidden], wih[hidden:], bias_gi]

    in_specs = [pl.BlockSpec((tm, 1), lambda i: (i, 0)),
                pl.BlockSpec((tm, 1), lambda i: (i, 0))]
    in_specs += [_full_spec(a) for a in args]

    return pl.pallas_call(
        _encode_kernel,
        out_shape=jax.ShapeDtypeStruct((n, 3 * hidden), f0_flat.dtype),
        grid_spec=pltpu.PrefetchScalarGridSpec(
            num_scalar_prefetch=0,
            grid=(n // tm,),
            in_specs=in_specs,
            out_specs=pl.BlockSpec((tm, 3 * hidden), lambda i: (i, 0)),
        ),
        compiler_params=pltpu.CompilerParams(
            dimension_semantics=("parallel",)),
    )(f0_flat, ld_flat, *args)


# ----------------------------------------------------------------------------
# Kernel 2: GRU recurrence with precomputed gi, batch-first, Tt timesteps per
# grid step.  gi already contains bih + bhh_{r,z}; bhh_n added inside r*( . ).
# Gate order matches torch.nn.GRU: r, z, n.
# ----------------------------------------------------------------------------
def _gru_kernel(gi_ref, whh_ref, bhhn_ref, out_ref, h_sc):
    hdim = h_sc.shape[-1]
    tt = gi_ref.shape[1]

    @pl.when(pl.program_id(0) == 0)
    def _():
        h_sc[...] = jnp.zeros_like(h_sc)   # h0 = 0 (matches cache_gru buffer)

    whh = whh_ref[...]
    bhh_n = bhhn_ref[...]

    def step(t, h):
        gi_t = gi_ref[:, t, :].astype(jnp.float32)          # (B, 3H)
        gh = jnp.dot(h, whh, preferred_element_type=jnp.float32)  # (B, 3H)
        r = jax.nn.sigmoid(gi_t[:, :hdim] + gh[:, :hdim])
        z = jax.nn.sigmoid(gi_t[:, hdim:2 * hdim] + gh[:, hdim:2 * hdim])
        n = jnp.tanh(gi_t[:, 2 * hdim:] + r * (gh[:, 2 * hdim:] + bhh_n))
        h_new = (1.0 - z) * n + z * h
        out_ref[:, t, :] = h_new.astype(out_ref.dtype)
        return h_new

    if tt <= 32:
        # Statically unrolled: constant sublane offsets for loads/stores.
        h = h_sc[...]
        for t in range(tt):
            h = step(t, h)
        h_sc[...] = h
    else:
        # Fallback for large time blocks (dynamic sublane indexing).
        h_sc[...] = lax.fori_loop(0, tt, step, h_sc[...])


def gru_forward(gi_btc, whh, bhh_n, out_dtype):
    """gi_btc: (B, T, 3H) batch-first precomputed gates -> (B, T, H)."""
    b, t, three_h = gi_btc.shape
    hdim = whh.shape[0]
    tt = _time_block(t)

    return pl.pallas_call(
        _gru_kernel,
        out_shape=jax.ShapeDtypeStruct((b, t, hdim), out_dtype),
        grid_spec=pltpu.PrefetchScalarGridSpec(
            num_scalar_prefetch=0,
            grid=(t // tt,),
            in_specs=[
                pl.BlockSpec((b, tt, three_h), lambda i: (0, i, 0)),
                pl.BlockSpec(whh.shape, lambda i: (0, 0)),
                pl.BlockSpec(bhh_n.shape, lambda i: (0, 0)),
            ],
            out_specs=pl.BlockSpec((b, tt, hdim), lambda i: (0, i, 0)),
            scratch_shapes=[pltpu.VMEM((b, hdim), jnp.float32)],
        ),
        compiler_params=pltpu.CompilerParams(
            dimension_semantics=("arbitrary",)),   # sequential recurrence
    )(gi_btc, whh, bhh_n)


# ----------------------------------------------------------------------------
# Kernel 3: output MLP; layer 1 consumes gru_out, f0, loudness as separate
# refs (== concat([gru, f0, loud], -1) @ W1) so no HBM concat and K stays H.
# ----------------------------------------------------------------------------
def _outmlp_kernel(*refs):
    gru_ref, f0_ref, ld_ref = refs[0], refs[1], refs[2]
    w1h_ref, w1f_ref, w1l_ref, b1_ref, g1_ref, be1_ref = refs[3:9]
    l2 = refs[9:13]
    l3 = refs[13:17]
    out_ref = refs[-1]

    g = gru_ref[...].astype(jnp.float32)
    f0 = f0_ref[...].astype(jnp.float32)
    ld = ld_ref[...].astype(jnp.float32)

    h = (jnp.dot(g, w1h_ref[...], preferred_element_type=jnp.float32)
         + f0 * w1f_ref[...] + ld * w1l_ref[...] + b1_ref[...])
    h = _ln_lrelu(h, g1_ref, be1_ref)
    h = _ln_lrelu(_linear(h, l2[0], l2[1]), l2[2], l2[3])
    h = _ln_lrelu(_linear(h, l3[0], l3[1]), l3[2], l3[3])
    out_ref[...] = h.astype(out_ref.dtype)


def out_mlp(gru_flat, f0_flat, ld_flat, p, hidden):
    n = gru_flat.shape[0]
    tm = _row_tile(n)
    w1 = p["w1"]                                   # (H+2, H)
    args = [w1[:hidden], w1[hidden:hidden + 1], w1[hidden + 1:hidden + 2],
            p["b1"], p["g1"], p["be1"],
            p["w2"], p["b2"], p["g2"], p["be2"],
            p["w3"], p["b3"], p["g3"], p["be3"]]

    in_specs = [pl.BlockSpec((tm, hidden), lambda i: (i, 0)),
                pl.BlockSpec((tm, 1), lambda i: (i, 0)),
                pl.BlockSpec((tm, 1), lambda i: (i, 0))]
    in_specs += [_full_spec(a) for a in args]

    return pl.pallas_call(
        _outmlp_kernel,
        out_shape=jax.ShapeDtypeStruct((n, hidden), gru_flat.dtype),
        grid_spec=pltpu.PrefetchScalarGridSpec(
            num_scalar_prefetch=0,
            grid=(n // tm,),
            in_specs=in_specs,
            out_specs=pl.BlockSpec((tm, hidden), lambda i: (i, 0)),
        ),
        compiler_params=pltpu.CompilerParams(
            dimension_semantics=("parallel",)),
    )(gru_flat, f0_flat, ld_flat, *args)


# ----------------------------------------------------------------------------
# Parameter construction (deterministic, shapes as in the PyTorch __init__)
# ----------------------------------------------------------------------------
def _init_mlp(key, in_size, hidden):
    ks = jax.random.split(key, 6)

    def lin(kw, kb, fan_in, fan_out):
        bound = 1.0 / (fan_in ** 0.5)
        w = jax.random.uniform(kw, (fan_in, fan_out), jnp.float32, -bound, bound)
        b = jax.random.uniform(kb, (1, fan_out), jnp.float32, -bound, bound)
        return w, b

    w1, b1 = lin(ks[0], ks[1], in_size, hidden)
    w2, b2 = lin(ks[2], ks[3], hidden, hidden)
    w3, b3 = lin(ks[4], ks[5], hidden, hidden)
    ones = jnp.ones((1, hidden), jnp.float32)
    zeros = jnp.zeros((1, hidden), jnp.float32)
    return dict(w1=w1, b1=b1, g1=ones, be1=zeros,
                w2=w2, b2=b2, g2=ones, be2=zeros,
                w3=w3, b3=b3, g3=ones, be3=zeros)


def _init_gru(key, input_size, hidden):
    ks = jax.random.split(key, 4)
    bound = 1.0 / (hidden ** 0.5)
    # Stored transposed vs. torch (right-multiply layout), gate order r,z,n.
    wih = jax.random.uniform(ks[0], (input_size, 3 * hidden), jnp.float32, -bound, bound)
    whh = jax.random.uniform(ks[1], (hidden, 3 * hidden), jnp.float32, -bound, bound)
    bih = jax.random.uniform(ks[2], (1, 3 * hidden), jnp.float32, -bound, bound)
    bhh = jax.random.uniform(ks[3], (1, 3 * hidden), jnp.float32, -bound, bound)
    return dict(wih=wih, whh=whh, bih=bih, bhh=bhh)


def init_gru_decoder(key, hidden_size):
    k1, k2, k3, k4 = jax.random.split(key, 4)
    return {
        "f0_mlp": _init_mlp(k1, 1, hidden_size),
        "loudness_mlp": _init_mlp(k2, 1, hidden_size),
        "gru": _init_gru(k3, 2 * hidden_size, hidden_size),   # num_hiddens=2 (no z)
        "out_mlp": _init_mlp(k4, hidden_size + 2, hidden_size),
    }


# ----------------------------------------------------------------------------
# Full forward (only free reshapes in the wrapper; no transposes/concats)
# ----------------------------------------------------------------------------
def gru_decoder_forward(params, f0, loudness):
    b, t, _ = f0.shape
    hidden = params["gru"]["whh"].shape[0]

    f0_flat = f0.reshape(b * t, 1)
    ld_flat = loudness.reshape(b * t, 1)

    # Fold r/z recurrent biases into the precomputed gi bias; keep bhh_n apart.
    bih, bhh = params["gru"]["bih"], params["gru"]["bhh"]
    bias_gi = bih + jnp.concatenate(
        [bhh[:, :2 * hidden], jnp.zeros((1, hidden), bhh.dtype)], axis=-1)
    bhh_n = bhh[:, 2 * hidden:]

    gi = encode(f0_flat, ld_flat, params["f0_mlp"], params["loudness_mlp"],
                params["gru"]["wih"], bias_gi, hidden)        # (B*T, 3H)
    gi_btc = gi.reshape(b, t, 3 * hidden)                     # free reshape

    gru_out = gru_forward(gi_btc, params["gru"]["whh"], bhh_n, f0.dtype)  # (B,T,H)
    gru_flat = gru_out.reshape(b * t, hidden)                 # free reshape

    out = out_mlp(gru_flat, f0_flat, ld_flat, params["out_mlp"], hidden)
    return out.reshape(b, t, hidden)


# ----------------------------------------------------------------------------
# Pure-JAX reference (mirrors the PyTorch module) for a correctness check
# ----------------------------------------------------------------------------
def _ref_mlp3(x, p):
    h = x
    for i in (1, 2, 3):
        h = h @ p[f"w{i}"] + p[f"b{i}"]
        mu = h.mean(-1, keepdims=True)
        var = ((h - mu) ** 2).mean(-1, keepdims=True)
        h = (h - mu) / jnp.sqrt(var + LN_EPS)
        h = h * p[f"g{i}"] + p[f"be{i}"]
        h = jnp.where(h >= 0, h, LEAKY_SLOPE * h)
    return h


def _ref_forward(params, f0, loud):
    b, t, _ = f0.shape
    H = params["gru"]["whh"].shape[0]
    f0f, ldf = f0.reshape(-1, 1), loud.reshape(-1, 1)
    hid = jnp.concatenate([_ref_mlp3(f0f, params["f0_mlp"]),
                           _ref_mlp3(ldf, params["loudness_mlp"])], -1)
    x = hid.reshape(b, t, 2 * H)
    wih, whh = params["gru"]["wih"], params["gru"]["whh"]
    bih, bhh = params["gru"]["bih"][0], params["gru"]["bhh"][0]

    def cell(h, x_t):
        gi = x_t @ wih + bih
        gh = h @ whh + bhh
        r = jax.nn.sigmoid(gi[:, :H] + gh[:, :H])
        z = jax.nn.sigmoid(gi[:, H:2 * H] + gh[:, H:2 * H])
        n = jnp.tanh(gi[:, 2 * H:] + r * gh[:, 2 * H:])
        h = (1.0 - z) * n + z * h
        return h, h

    h0 = jnp.zeros((b, H), jnp.float32)
    _, ys = lax.scan(cell, h0, x.transpose(1, 0, 2))
    gru_out = ys.transpose(1, 0, 2).reshape(-1, H)
    h2 = jnp.concatenate([gru_out, f0f, ldf], -1)
    return _ref_mlp3(h2, params["out_mlp"]).reshape(b, t, H)


if __name__ == "__main__":
    HIDDEN = 32
    B, T = 2, 8

    key = jax.random.PRNGKey(0)
    kp, kf, kl = jax.random.split(key, 3)

    params = init_gru_decoder(kp, HIDDEN)
    f0 = jax.random.uniform(kf, (B, T, 1), jnp.float32, 0.1, 1.0)
    loudness = jax.random.normal(kl, (B, T, 1), jnp.float32)

    fwd = jax.jit(gru_decoder_forward)
    out = fwd(params, f0, loudness)
    jax.block_until_ready(out)

    assert out.shape == (B, T, HIDDEN), out.shape
    assert bool(jnp.all(jnp.isfinite(out)))

    ref = jax.jit(_ref_forward)(params, f0, loudness)
    max_err = float(jnp.max(jnp.abs(out - ref)))
    assert max_err < 2e-2, f"mismatch vs reference: {max_err}"

    print("KERNEL_OK")
</pallas_src>

<mosaic_0001>
module attributes {stable_mosaic.version = 11 : i64} {
  func.func @_encode_kernel(%arg0: i32, %arg1: memref<16x1xf32, #tpu.memory_space<vmem>>, %arg2: memref<16x1xf32, #tpu.memory_space<vmem>>, %arg3: memref<1x32xf32, #tpu.memory_space<vmem>>, %arg4: memref<1x32xf32, #tpu.memory_space<vmem>>, %arg5: memref<1x32xf32, #tpu.memory_space<vmem>>, %arg6: memref<1x32xf32, #tpu.memory_space<vmem>>, %arg7: memref<32x32xf32, #tpu.memory_space<vmem>>, %arg8: memref<1x32xf32, #tpu.memory_space<vmem>>, %arg9: memref<1x32xf32, #tpu.memory_space<vmem>>, %arg10: memref<1x32xf32, #tpu.memory_space<vmem>>, %arg11: memref<32x32xf32, #tpu.memory_space<vmem>>, %arg12: memref<1x32xf32, #tpu.memory_space<vmem>>, %arg13: memref<1x32xf32, #tpu.memory_space<vmem>>, %arg14: memref<1x32xf32, #tpu.memory_space<vmem>>, %arg15: memref<1x32xf32, #tpu.memory_space<vmem>>, %arg16: memref<1x32xf32, #tpu.memory_space<vmem>>, %arg17: memref<1x32xf32, #tpu.memory_space<vmem>>, %arg18: memref<1x32xf32, #tpu.memory_space<vmem>>, %arg19: memref<32x32xf32, #tpu.memory_space<vmem>>, %arg20: memref<1x32xf32, #tpu.memory_space<vmem>>, %arg21: memref<1x32xf32, #tpu.memory_space<vmem>>, %arg22: memref<1x32xf32, #tpu.memory_space<vmem>>, %arg23: memref<32x32xf32, #tpu.memory_space<vmem>>, %arg24: memref<1x32xf32, #tpu.memory_space<vmem>>, %arg25: memref<1x32xf32, #tpu.memory_space<vmem>>, %arg26: memref<1x32xf32, #tpu.memory_space<vmem>>, %arg27: memref<32x96xf32, #tpu.memory_space<vmem>>, %arg28: memref<32x96xf32, #tpu.memory_space<vmem>>, %arg29: memref<1x96xf32, #tpu.memory_space<vmem>>, %arg30: memref<16x96xf32, #tpu.memory_space<vmem>>) attributes {dimension_semantics = [#tpu.dimension_semantics<parallel>], iteration_bounds = array<i64: 1>, scalar_prefetch = 0 : i64, scratch_operands = 0 : i64, tpu.core_type = #tpu.core_type<tc>, window_params = [{transform_indices = @transform_0, window_bounds = array<i64: 16, 1>}, {transform_indices = @transform_1, window_bounds = array<i64: 16, 1>}, {pipeline_mode = #tpu.pipeline_mode<synchronous>, transform_indices = @transform_2, window_bounds = array<i64: 1, 32>}, {pipeline_mode = #tpu.pipeline_mode<synchronous>, transform_indices = @transform_3, window_bounds = array<i64: 1, 32>}, {pipeline_mode = #tpu.pipeline_mode<synchronous>, transform_indices = @transform_4, window_bounds = array<i64: 1, 32>}, {pipeline_mode = #tpu.pipeline_mode<synchronous>, transform_indices = @transform_5, window_bounds = array<i64: 1, 32>}, {pipeline_mode = #tpu.pipeline_mode<synchronous>, transform_indices = @transform_6, window_bounds = array<i64: 32, 32>}, {pipeline_mode = #tpu.pipeline_mode<synchronous>, transform_indices = @transform_7, window_bounds = array<i64: 1, 32>}, {pipeline_mode = #tpu.pipeline_mode<synchronous>, transform_indices = @transform_8, window_bounds = array<i64: 1, 32>}, {pipeline_mode = #tpu.pipeline_mode<synchronous>, transform_indices = @transform_9, window_bounds = array<i64: 1, 32>}, {pipeline_mode = #tpu.pipeline_mode<synchronous>, transform_indices = @transform_10, window_bounds = array<i64: 32, 32>}, {pipeline_mode = #tpu.pipeline_mode<synchronous>, transform_indices = @transform_11, window_bounds = array<i64: 1, 32>}, {pipeline_mode = #tpu.pipeline_mode<synchronous>, transform_indices = @transform_12, window_bounds = array<i64: 1, 32>}, {pipeline_mode = #tpu.pipeline_mode<synchronous>, transform_indices = @transform_13, window_bounds = array<i64: 1, 32>}, {pipeline_mode = #tpu.pipeline_mode<synchronous>, transform_indices = @transform_14, window_bounds = array<i64: 1, 32>}, {pipeline_mode = #tpu.pipeline_mode<synchronous>, transform_indices = @transform_15, window_bounds = array<i64: 1, 32>}, {pipeline_mode = #tpu.pipeline_mode<synchronous>, transform_indices = @transform_16, window_bounds = array<i64: 1, 32>}, {pipeline_mode = #tpu.pipeline_mode<synchronous>, transform_indices = @transform_17, window_bounds = array<i64: 1, 32>}, {pipeline_mode = #tpu.pipeline_mode<synchronous>, transform_indices = @transform_18, window_bounds = array<i64: 32, 32>}, {pipeline_mode = #tpu.pipeline_mode<synchronous>, transform_indices = @transform_19, window_bounds = array<i64: 1, 32>}, {pipeline_mode = #tpu.pipeline_mode<synchronous>, transform_indices = @transform_20, window_bounds = array<i64: 1, 32>}, {pipeline_mode = #tpu.pipeline_mode<synchronous>, transform_indices = @transform_21, window_bounds = array<i64: 1, 32>}, {pipeline_mode = #tpu.pipeline_mode<synchronous>, transform_indices = @transform_22, window_bounds = array<i64: 32, 32>}, {pipeline_mode = #tpu.pipeline_mode<synchronous>, transform_indices = @transform_23, window_bounds = array<i64: 1, 32>}, {pipeline_mode = #tpu.pipeline_mode<synchronous>, transform_indices = @transform_24, window_bounds = array<i64: 1, 32>}, {pipeline_mode = #tpu.pipeline_mode<synchronous>, transform_indices = @transform_25, window_bounds = array<i64: 1, 32>}, {pipeline_mode = #tpu.pipeline_mode<synchronous>, transform_indices = @transform_26, window_bounds = array<i64: 32, 96>}, {pipeline_mode = #tpu.pipeline_mode<synchronous>, transform_indices = @transform_27, window_bounds = array<i64: 32, 96>}, {pipeline_mode = #tpu.pipeline_mode<synchronous>, transform_indices = @transform_28, window_bounds = array<i64: 1, 96>}, {transform_indices = @transform_29, window_bounds = array<i64: 16, 96>}]} {
    %c0 = arith.constant 0 : index
    %c0_0 = arith.constant 0 : index
    %0 = vector.load %arg1[%c0, %c0_0] : memref<16x1xf32, #tpu.memory_space<vmem>>, vector<16x1xf32>
    %c0_1 = arith.constant 0 : index
    %c0_2 = arith.constant 0 : index
    %1 = vector.load %arg3[%c0_1, %c0_2] : memref<1x32xf32, #tpu.memory_space<vmem>>, vector<1x32xf32>
    %2 = vector.broadcast %0 : vector<16x1xf32> to vector<16x32xf32>
    %3 = vector.broadcast %1 : vector<1x32xf32> to vector<16x32xf32>
    %4 = arith.mulf %2, %3 : vector<16x32xf32>
    %c0_3 = arith.constant 0 : index
    %c0_4 = arith.constant 0 : index
    %5 = vector.load %arg4[%c0_3, %c0_4] : memref<1x32xf32, #tpu.memory_space<vmem>>, vector<1x32xf32>
    %6 = vector.broadcast %5 : vector<1x32xf32> to vector<16x32xf32>
    %7 = arith.addf %4, %6 : vector<16x32xf32>
    %cst = arith.constant dense<0.000000e+00> : vector<16xf32>
    %8 = vector.multi_reduction <add>, %7, %cst [1] : vector<16x32xf32> to vector<16xf32>
    %9 = vector.shape_cast %8 : vector<16xf32> to vector<16x1xf32>
    %cst_5 = arith.constant 3.200000e+01 : f32
    %10 = vector.broadcast %cst_5 : f32 to vector<16x1xf32>
    %11 = arith.divf %9, %10 : vector<16x1xf32>
    %12 = vector.broadcast %11 : vector<16x1xf32> to vector<16x32xf32>
    %13 = arith.subf %7, %12 : vector<16x32xf32>
    %14 = arith.mulf %13, %13 : vector<16x32xf32>
    %cst_6 = arith.constant dense<0.000000e+00> : vector<16xf32>
    %15 = vector.multi_reduction <add>, %14, %cst_6 [1] : vector<16x32xf32> to vector<16xf32>
    %16 = vector.shape_cast %15 : vector<16xf32> to vector<16x1xf32>
    %cst_7 = arith.constant 3.200000e+01 : f32
    %17 = vector.broadcast %cst_7 : f32 to vector<16x1xf32>
    %18 = arith.divf %16, %17 : vector<16x1xf32>
    %19 = vector.broadcast %11 : vector<16x1xf32> to vector<16x32xf32>
    %20 = arith.subf %7, %19 : vector<16x32xf32>
    %cst_8 = arith.constant 9.99999974E-6 : f32
    %21 = vector.broadcast %cst_8 : f32 to vector<16x1xf32>
    %22 = arith.addf %18, %21 : vector<16x1xf32>
    %23 = math.rsqrt %22 : vector<16x1xf32>
    %24 = vector.broadcast %23 : vector<16x1xf32> to vector<16x32xf32>
    %25 = arith.mulf %20, %24 : vector<16x32xf32>
    %c0_9 = arith.constant 0 : index
    %c0_10 = arith.constant 0 : index
    %26 = vector.load %arg5[%c0_9, %c0_10] : memref<1x32xf32, #tpu.memory_space<vmem>>, vector<1x32xf32>
    %27 = vector.broadcast %26 : vector<1x32xf32> to vector<16x32xf32>
    %28 = arith.mulf %25, %27 : vector<16x32xf32>
    %c0_11 = arith.constant 0 : index
    %c0_12 = arith.constant 0 : index
    %29 = vector.load %arg6[%c0_11, %c0_12] : memref<1x32xf32, #tpu.memory_space<vmem>>, vector<1x32xf32>
    %30 = vector.broadcast %29 : vector<1x32xf32> to vector<16x32xf32>
    %31 = arith.addf %28, %30 : vector<16x32xf32>
    %cst_13 = arith.constant 0.000000e+00 : f32
    %32 = vector.broadcast %cst_13 : f32 to vector<16x32xf32>
    %33 = arith.cmpf oge, %31, %32 : vector<16x32xf32>
    %cst_14 = arith.constant 0.00999999977 : f32
    %34 = vector.broadcast %cst_14 : f32 to vector<16x32xf32>
    %35 = arith.mulf %34, %31 : vector<16x32xf32>
    %36 = arith.select %33, %31, %35 : vector<16x32xi1>, vector<16x32xf32>
    %c0_15 = arith.constant 0 : index
    %c0_16 = arith.constant 0 : index
    %37 = vector.load %arg7[%c0_15, %c0_16] : memref<32x32xf32, #tpu.memory_space<vmem>>, vector<32x32xf32>
    %cst_17 = arith.constant dense<0.000000e+00> : vector<16x32xf32>
    %38 = tpu.matmul %36, %37, %cst_17 {dimension_numbers = #tpu.dot_dimension_numbers<[1], [0], [0], [1], [0, 0, 1, 1], [], []>} : vector<16x32xf32>, vector<32x32xf32>, vector<16x32xf32> -> vector<16x32xf32>
    %c0_18 = arith.constant 0 : index
    %c0_19 = arith.constant 0 : index
    %39 = vector.load %arg8[%c0_18, %c0_19] : memref<1x32xf32, #tpu.memory_space<vmem>>, vector<1x32xf32>
    %40 = vector.broadcast %39 : vector<1x32xf32> to vector<16x32xf32>
    %41 = arith.addf %38, %40 : vector<16x32xf32>
    %cst_20 = arith.constant dense<0.000000e+00> : vector<16xf32>
    %42 = vector.multi_reduction <add>, %41, %cst_20 [1] : vector<16x32xf32> to vector<16xf32>
    %43 = vector.shape_cast %42 : vector<16xf32> to vector<16x1xf32>
    %cst_21 = arith.constant 3.200000e+01 : f32
    %44 = vector.broadcast %cst_21 : f32 to vector<16x1xf32>
    %45 = arith.divf %43, %44 : vector<16x1xf32>
    %46 = vector.broadcast %45 : vector<16x1xf32> to vector<16x32xf32>
    %47 = arith.subf %41, %46 : vector<16x32xf32>
    %48 = arith.mulf %47, %47 : vector<16x32xf32>
    %cst_22 = arith.constant dense<0.000000e+00> : vector<16xf32>
    %49 = vector.multi_reduction <add>, %48, %cst_22 [1] : vector<16x32xf32> to vector<16xf32>
    %50 = vector.shape_cast %49 : vector<16xf32> to vector<16x1xf32>
    %cst_23 = arith.constant 3.200000e+01 : f32
    %51 = vector.broadcast %cst_23 : f32 to vector<16x1xf32>
    %52 = arith.divf %50, %51 : vector<16x1xf32>
    %53 = vector.broadcast %45 : vector<16x1xf32> to vector<16x32xf32>
    %54 = arith.subf %41, %53 : vector<16x32xf32>
    %cst_24 = arith.constant 9.99999974E-6 : f32
    %55 = vector.broadcast %cst_24 : f32 to vector<16x1xf32>
    %56 = arith.addf %52, %55 : vector<16x1xf32>
    %57 = math.rsqrt %56 : vector<16x1xf32>
    %58 = vector.broadcast %57 : vector<16x1xf32> to vector<16x32xf32>
    %59 = arith.mulf %54, %58 : vector<16x32xf32>
    %c0_25 = arith.constant 0 : index
    %c0_26 = arith.constant 0 : index
    %60 = vector.load %arg9[%c0_25, %c0_26] : memref<1x32xf32, #tpu.memory_space<vmem>>, vector<1x32xf32>
    %61 = vector.broadcast %60 : vector<1x32xf32> to vector<16x32xf32>
    %62 = arith.mulf %59, %61 : vector<16x32xf32>
    %c0_27 = arith.constant 0 : index
    %c0_28 = arith.constant 0 : index
    %63 = vector.load %arg10[%c0_27, %c0_28] : memref<1x32xf32, #tpu.memory_space<vmem>>, vector<1x32xf32>
    %64 = vector.broadcast %63 : vector<1x32xf32> to vector<16x32xf32>
    %65 = arith.addf %62, %64 : vector<16x32xf32>
    %cst_29 = arith.constant 0.000000e+00 : f32
    %66 = vector.broadcast %cst_29 : f32 to vector<16x32xf32>
    %67 = arith.cmpf oge, %65, %66 : vector<16x32xf32>
    %cst_30 = arith.constant 0.00999999977 : f32
    %68 = vector.broadcast %cst_30 : f32 to vector<16x32xf32>
    %69 = arith.mulf %68, %65 : vector<16x32xf32>
    %70 = arith.select %67, %65, %69 : vector<16x32xi1>, vector<16x32xf32>
    %c0_31 = arith.constant 0 : index
    %c0_32 = arith.constant 0 : index
    %71 = vector.load %arg11[%c0_31, %c0_32] : memref<32x32xf32, #tpu.memory_space<vmem>>, vector<32x32xf32>
    %cst_33 = arith.constant dense<0.000000e+00> : vector<16x32xf32>
    %72 = tpu.matmul %70, %71, %cst_33 {dimension_numbers = #tpu.dot_dimension_numbers<[1], [0], [0], [1], [0, 0, 1, 1], [], []>} : vector<16x32xf32>, vector<32x32xf32>, vector<16x32xf32> -> vector<16x32xf32>
    %c0_34 = arith.constant 0 : index
    %c0_35 = arith.constant 0 : index
    %73 = vector.load %arg12[%c0_34, %c0_35] : memref<1x32xf32, #tpu.memory_space<vmem>>, vector<1x32xf32>
    %74 = vector.broadcast %73 : vector<1x32xf32> to vector<16x32xf32>
    %75 = arith.addf %72, %74 : vector<16x32xf32>
    %cst_36 = arith.constant dense<0.000000e+00> : vector<16xf32>
    %76 = vector.multi_reduction <add>, %75, %cst_36 [1] : vector<16x32xf32> to vector<16xf32>
    %77 = vector.shape_cast %76 : vector<16xf32> to vector<16x1xf32>
    %cst_37 = arith.constant 3.200000e+01 : f32
    %78 = vector.broadcast %cst_37 : f32 to vector<16x1xf32>
    %79 = arith.divf %77, %78 : vector<16x1xf32>
    %80 = vector.broadcast %79 : vector<16x1xf32> to vector<16x32xf32>
    %81 = arith.subf %75, %80 : vector<16x32xf32>
    %82 = arith.mulf %81, %81 : vector<16x32xf32>
    %cst_38 = arith.constant dense<0.000000e+00> : vector<16xf32>
    %83 = vector.multi_reduction <add>, %82, %cst_38 [1] : vector<16x32xf32> to vector<16xf32>
    %84 = vector.shape_cast %83 : vector<16xf32> to vector<16x1xf32>
    %cst_39 = arith.constant 3.200000e+01 : f32
    %85 = vector.broadcast %cst_39 : f32 to vector<16x1xf32>
    %86 = arith.divf %84, %85 : vector<16x1xf32>
    %87 = vector.broadcast %79 : vector<16x1xf32> to vector<16x32xf32>
    %88 = arith.subf %75, %87 : vector<16x32xf32>
    %cst_40 = arith.constant 9.99999974E-6 : f32
    %89 = vector.broadcast %cst_40 : f32 to vector<16x1xf32>
    %90 = arith.addf %86, %89 : vector<16x1xf32>
    %91 = math.rsqrt %90 : vector<16x1xf32>
    %92 = vector.broadcast %91 : vector<16x1xf32> to vector<16x32xf32>
    %93 = arith.mulf %88, %92 : vector<16x32xf32>
    %c0_41 = arith.constant 0 : index
    %c0_42 = arith.constant 0 : index
    %94 = vector.load %arg13[%c0_41, %c0_42] : memref<1x32xf32, #tpu.memory_space<vmem>>, vector<1x32xf32>
    %95 = vector.broadcast %94 : vector<1x32xf32> to vector<16x32xf32>
    %96 = arith.mulf %93, %95 : vector<16x32xf32>
    %c0_43 = arith.constant 0 : index
    %c0_44 = arith.constant 0 : index
    %97 = vector.load %arg14[%c0_43, %c0_44] : memref<1x32xf32, #tpu.memory_space<vmem>>, vector<1x32xf32>
    %98 = vector.broadcast %97 : vector<1x32xf32> to vector<16x32xf32>
    %99 = arith.addf %96, %98 : vector<16x32xf32>
    %cst_45 = arith.constant 0.000000e+00 : f32
    %100 = vector.broadcast %cst_45 : f32 to vector<16x32xf32>
    %101 = arith.cmpf oge, %99, %100 : vector<16x32xf32>
    %cst_46 = arith.constant 0.00999999977 : f32
    %102 = vector.broadcast %cst_46 : f32 to vector<16x32xf32>
    %103 = arith.mulf %102, %99 : vector<16x32xf32>
    %104 = arith.select %101, %99, %103 : vector<16x32xi1>, vector<16x32xf32>
    %c0_47 = arith.constant 0 : index
    %c0_48 = arith.constant 0 : index
    %105 = vector.load %arg2[%c0_47, %c0_48] : memref<16x1xf32, #tpu.memory_space<vmem>>, vector<16x1xf32>
    %c0_49 = arith.constant 0 : index
    %c0_50 = arith.constant 0 : index
    %106 = vector.load %arg15[%c0_49, %c0_50] : memref<1x32xf32, #tpu.memory_space<vmem>>, vector<1x32xf32>
    %107 = vector.broadcast %105 : vector<16x1xf32> to vector<16x32xf32>
    %108 = vector.broadcast %106 : vector<1x32xf32> to vector<16x32xf32>
    %109 = arith.mulf %107, %108 : vector<16x32xf32>
    %c0_51 = arith.constant 0 : index
    %c0_52 = arith.constant 0 : index
    %110 = vector.load %arg16[%c0_51, %c0_52] : memref<1x32xf32, #tpu.memory_space<vmem>>, vector<1x32xf32>
    %111 = vector.broadcast %110 : vector<1x32xf32> to vector<16x32xf32>
    %112 = arith.addf %109, %111 : vector<16x32xf32>
    %cst_53 = arith.constant dense<0.000000e+00> : vector<16xf32>
    %113 = vector.multi_reduction <add>, %112, %cst_53 [1] : vector<16x32xf32> to vector<16xf32>
    %114 = vector.shape_cast %113 : vector<16xf32> to vector<16x1xf32>
    %cst_54 = arith.constant 3.200000e+01 : f32
    %115 = vector.broadcast %cst_54 : f32 to vector<16x1xf32>
    %116 = arith.divf %114, %115 : vector<16x1xf32>
    %117 = vector.broadcast %116 : vector<16x1xf32> to vector<16x32xf32>
    %118 = arith.subf %112, %117 : vector<16x32xf32>
    %119 = arith.mulf %118, %118 : vector<16x32xf32>
    %cst_55 = arith.constant dense<0.000000e+00> : vector<16xf32>
    %120 = vector.multi_reduction <add>, %119, %cst_55 [1] : vector<16x32xf32> to vector<16xf32>
    %121 = vector.shape_cast %120 : vector<16xf32> to vector<16x1xf32>
    %cst_56 = arith.constant 3.200000e+01 : f32
    %122 = vector.broadcast %cst_56 : f32 to vector<16x1xf32>
    %123 = arith.divf %121, %122 : vector<16x1xf32>
    %124 = vector.broadcast %116 : vector<16x1xf32> to vector<16x32xf32>
    %125 = arith.subf %112, %124 : vector<16x32xf32>
    %cst_57 = arith.constant 9.99999974E-6 : f32
    %126 = vector.broadcast %cst_57 : f32 to vector<16x1xf32>
    %127 = arith.addf %123, %126 : vector<16x1xf32>
    %128 = math.rsqrt %127 : vector<16x1xf32>
    %129 = vector.broadcast %128 : vector<16x1xf32> to vector<16x32xf32>
    %130 = arith.mulf %125, %129 : vector<16x32xf32>
    %c0_58 = arith.constant 0 : index
    %c0_59 = arith.constant 0 : index
    %131 = vector.load %arg17[%c0_58, %c0_59] : memref<1x32xf32, #tpu.memory_space<vmem>>, vector<1x32xf32>
    %132 = vector.broadcast %131 : vector<1x32xf32> to vector<16x32xf32>
    %133 = arith.mulf %130, %132 : vector<16x32xf32>
    %c0_60 = arith.constant 0 : index
    %c0_61 = arith.constant 0 : index
    %134 = vector.load %arg18[%c0_60, %c0_61] : memref<1x32xf32, #tpu.memory_space<vmem>>, vector<1x32xf32>
    %135 = vector.broadcast %134 : vector<1x32xf32> to vector<16x32xf32>
    %136 = arith.addf %133, %135 : vector<16x32xf32>
    %cst_62 = arith.constant 0.000000e+00 : f32
    %137 = vector.broadcast %cst_62 : f32 to vector<16x32xf32>
    %138 = arith.cmpf oge, %136, %137 : vector<16x32xf32>
    %cst_63 = arith.constant 0.00999999977 : f32
    %139 = vector.broadcast %cst_63 : f32 to vector<16x32xf32>
    %140 = arith.mulf %139, %136 : vector<16x32xf32>
    %141 = arith.select %138, %136, %140 : vector<16x32xi1>, vector<16x32xf32>
    %c0_64 = arith.constant 0 : index
    %c0_65 = arith.constant 0 : index
    %142 = vector.load %arg19[%c0_64, %c0_65] : memref<32x32xf32, #tpu.memory_space<vmem>>, vector<32x32xf32>
    %cst_66 = arith.constant dense<0.000000e+00> : vector<16x32xf32>
    %143 = tpu.matmul %141, %142, %cst_66 {dimension_numbers = #tpu.dot_dimension_numbers<[1], [0], [0], [1], [0, 0, 1, 1], [], []>} : vector<16x32xf32>, vector<32x32xf32>, vector<16x32xf32> -> vector<16x32xf32>
    %c0_67 = arith.constant 0 : index
    %c0_68 = arith.constant 0 : index
    %144 = vector.load %arg20[%c0_67, %c0_68] : memref<1x32xf32, #tpu.memory_space<vmem>>, vector<1x32xf32>
    %145 = vector.broadcast %144 : vector<1x32xf32> to vector<16x32xf32>
    %146 = arith.addf %143, %145 : vector<16x32xf32>
    %cst_69 = arith.constant dense<0.000000e+00> : vector<16xf32>
    %147 = vector.multi_reduction <add>, %146, %cst_69 [1] : vector<16x32xf32> to vector<16xf32>
    %148 = vector.shape_cast %147 : vector<16xf32> to vector<16x1xf32>
    %cst_70 = arith.constant 3.200000e+01 : f32
    %149 = vector.broadcast %cst_70 : f32 to vector<16x1xf32>
    %150 = arith.divf %148, %149 : vector<16x1xf32>
    %151 = vector.broadcast %150 : vector<16x1xf32> to vector<16x32xf32>
    %152 = arith.subf %146, %151 : vector<16x32xf32>
    %153 = arith.mulf %152, %152 : vector<16x32xf32>
    %cst_71 = arith.constant dense<0.000000e+00> : vector<16xf32>
    %154 = vector.multi_reduction <add>, %153, %cst_71 [1] : vector<16x32xf32> to vector<16xf32>
    %155 = vector.shape_cast %154 : vector<16xf32> to vector<16x1xf32>
    %cst_72 = arith.constant 3.200000e+01 : f32
    %156 = vector.broadcast %cst_72 : f32 to vector<16x1xf32>
    %157 = arith.divf %155, %156 : vector<16x1xf32>
    %158 = vector.broadcast %150 : vector<16x1xf32> to vector<16x32xf32>
    %159 = arith.subf %146, %158 : vector<16x32xf32>
    %cst_73 = arith.constant 9.99999974E-6 : f32
    %160 = vector.broadcast %cst_73 : f32 to vector<16x1xf32>
    %161 = arith.addf %157, %160 : vector<16x1xf32>
    %162 = math.rsqrt %161 : vector<16x1xf32>
    %163 = vector.broadcast %162 : vector<16x1xf32> to vector<16x32xf32>
    %164 = arith.mulf %159, %163 : vector<16x32xf32>
    %c0_74 = arith.constant 0 : index
    %c0_75 = arith.constant 0 : index
    %165 = vector.load %arg21[%c0_74, %c0_75] : memref<1x32xf32, #tpu.memory_space<vmem>>, vector<1x32xf32>
    %166 = vector.broadcast %165 : vector<1x32xf32> to vector<16x32xf32>
    %167 = arith.mulf %164, %166 : vector<16x32xf32>
    %c0_76 = arith.constant 0 : index
    %c0_77 = arith.constant 0 : index
    %168 = vector.load %arg22[%c0_76, %c0_77] : memref<1x32xf32, #tpu.memory_space<vmem>>, vector<1x32xf32>
    %169 = vector.broadcast %168 : vector<1x32xf32> to vector<16x32xf32>
    %170 = arith.addf %167, %169 : vector<16x32xf32>
    %cst_78 = arith.constant 0.000000e+00 : f32
    %171 = vector.broadcast %cst_78 : f32 to vector<16x32xf32>
    %172 = arith.cmpf oge, %170, %171 : vector<16x32xf32>
    %cst_79 = arith.constant 0.00999999977 : f32
    %173 = vector.broadcast %cst_79 : f32 to vector<16x32xf32>
    %174 = arith.mulf %173, %170 : vector<16x32xf32>
    %175 = arith.select %172, %170, %174 : vector<16x32xi1>, vector<16x32xf32>
    %c0_80 = arith.constant 0 : index
    %c0_81 = arith.constant 0 : index
    %176 = vector.load %arg23[%c0_80, %c0_81] : memref<32x32xf32, #tpu.memory_space<vmem>>, vector<32x32xf32>
    %cst_82 = arith.constant dense<0.000000e+00> : vector<16x32xf32>
    %177 = tpu.matmul %175, %176, %cst_82 {dimension_numbers = #tpu.dot_dimension_numbers<[1], [0], [0], [1], [0, 0, 1, 1], [], []>} : vector<16x32xf32>, vector<32x32xf32>, vector<16x32xf32> -> vector<16x32xf32>
    %c0_83 = arith.constant 0 : index
    %c0_84 = arith.constant 0 : index
    %178 = vector.load %arg24[%c0_83, %c0_84] : memref<1x32xf32, #tpu.memory_space<vmem>>, vector<1x32xf32>
    %179 = vector.broadcast %178 : vector<1x32xf32> to vector<16x32xf32>
    %180 = arith.addf %177, %179 : vector<16x32xf32>
    %cst_85 = arith.constant dense<0.000000e+00> : vector<16xf32>
    %181 = vector.multi_reduction <add>, %180, %cst_85 [1] : vector<16x32xf32> to vector<16xf32>
    %182 = vector.shape_cast %181 : vector<16xf32> to vector<16x1xf32>
    %cst_86 = arith.constant 3.200000e+01 : f32
    %183 = vector.broadcast %cst_86 : f32 to vector<16x1xf32>
    %184 = arith.divf %182, %183 : vector<16x1xf32>
    %185 = vector.broadcast %184 : vector<16x1xf32> to vector<16x32xf32>
    %186 = arith.subf %180, %185 : vector<16x32xf32>
    %187 = arith.mulf %186, %186 : vector<16x32xf32>
    %cst_87 = arith.constant dense<0.000000e+00> : vector<16xf32>
    %188 = vector.multi_reduction <add>, %187, %cst_87 [1] : vector<16x32xf32> to vector<16xf32>
    %189 = vector.shape_cast %188 : vector<16xf32> to vector<16x1xf32>
    %cst_88 = arith.constant 3.200000e+01 : f32
    %190 = vector.broadcast %cst_88 : f32 to vector<16x1xf32>
    %191 = arith.divf %189, %190 : vector<16x1xf32>
    %192 = vector.broadcast %184 : vector<16x1xf32> to vector<16x32xf32>
    %193 = arith.subf %180, %192 : vector<16x32xf32>
    %cst_89 = arith.constant 9.99999974E-6 : f32
    %194 = vector.broadcast %cst_89 : f32 to vector<16x1xf32>
    %195 = arith.addf %191, %194 : vector<16x1xf32>
    %196 = math.rsqrt %195 : vector<16x1xf32>
    %197 = vector.broadcast %196 : vector<16x1xf32> to vector<16x32xf32>
    %198 = arith.mulf %193, %197 : vector<16x32xf32>
    %c0_90 = arith.constant 0 : index
    %c0_91 = arith.constant 0 : index
    %199 = vector.load %arg25[%c0_90, %c0_91] : memref<1x32xf32, #tpu.memory_space<vmem>>, vector<1x32xf32>
    %200 = vector.broadcast %199 : vector<1x32xf32> to vector<16x32xf32>
    %201 = arith.mulf %198, %200 : vector<16x32xf32>
    %c0_92 = arith.constant 0 : index
    %c0_93 = arith.constant 0 : index
    %202 = vector.load %arg26[%c0_92, %c0_93] : memref<1x32xf32, #tpu.memory_space<vmem>>, vector<1x32xf32>
    %203 = vector.broadcast %202 : vector<1x32xf32> to vector<16x32xf32>
    %204 = arith.addf %201, %203 : vector<16x32xf32>
    %cst_94 = arith.constant 0.000000e+00 : f32
    %205 = vector.broadcast %cst_94 : f32 to vector<16x32xf32>
    %206 = arith.cmpf oge, %204, %205 : vector<16x32xf32>
    %cst_95 = arith.constant 0.00999999977 : f32
    %207 = vector.broadcast %cst_95 : f32 to vector<16x32xf32>
    %208 = arith.mulf %207, %204 : vector<16x32xf32>
    %209 = arith.select %206, %204, %208 : vector<16x32xi1>, vector<16x32xf32>
    %c0_96 = arith.constant 0 : index
    %c0_97 = arith.constant 0 : index
    %210 = vector.load %arg27[%c0_96, %c0_97] : memref<32x96xf32, #tpu.memory_space<vmem>>, vector<32x96xf32>
    %cst_98 = arith.constant dense<0.000000e+00> : vector<16x96xf32>
    %211 = tpu.matmul %104, %210, %cst_98 {dimension_numbers = #tpu.dot_dimension_numbers<[1], [0], [0], [1], [0, 0, 1, 1], [], []>} : vector<16x32xf32>, vector<32x96xf32>, vector<16x96xf32> -> vector<16x96xf32>
    %c0_99 = arith.constant 0 : index
    %c0_100 = arith.constant 0 : index
    %212 = vector.load %arg28[%c0_99, %c0_100] : memref<32x96xf32, #tpu.memory_space<vmem>>, vector<32x96xf32>
    %cst_101 = arith.constant dense<0.000000e+00> : vector<16x96xf32>
    %213 = tpu.matmul %209, %212, %cst_101 {dimension_numbers = #tpu.dot_dimension_numbers<[1], [0], [0], [1], [0, 0, 1, 1], [], []>} : vector<16x32xf32>, vector<32x96xf32>, vector<16x96xf32> -> vector<16x96xf32>
    %214 = arith.addf %211, %213 : vector<16x96xf32>
    %c0_102 = arith.constant 0 : index
    %c0_103 = arith.constant 0 : index
    %215 = vector.load %arg29[%c0_102, %c0_103] : memref<1x96xf32, #tpu.memory_space<vmem>>, vector<1x96xf32>
    %216 = vector.broadcast %215 : vector<1x96xf32> to vector<16x96xf32>
    %217 = arith.addf %214, %216 : vector<16x96xf32>
    %c0_104 = arith.constant 0 : index
    %c0_105 = arith.constant 0 : index
    %218 = vector.load %arg30[%c0_104, %c0_105] : memref<16x96xf32, #tpu.memory_space<vmem>>, vector<16x96xf32>
    tpu.vector_store %arg30[%c0_104, %c0_105], %217 {strides = array<i32>} : memref<16x96xf32, #tpu.memory_space<vmem>>, vector<16x96xf32>,
    return
  }
  func.func @transform_0(%arg0: i32) -> (i32, i32) {
    %c0_i32 = arith.constant 0 : i32
    %c0_i32_0 = arith.constant 0 : i32
    return %arg0, %c0_i32 : i32, i32
  }
  func.func @transform_1(%arg0: i32) -> (i32, i32) {
    %c0_i32 = arith.constant 0 : i32
    %c0_i32_0 = arith.constant 0 : i32
    return %arg0, %c0_i32 : i32, i32
  }
  func.func @transform_2(%arg0: i32) -> (i32, i32) {
    %c0_i32 = arith.constant 0 : i32
    %c0_i32_0 = arith.constant 0 : i32
    %c0_i32_1 = arith.constant 0 : i32
    return %c0_i32, %c0_i32_0 : i32, i32
  }
  func.func @transform_3(%arg0: i32) -> (i32, i32) {
    %c0_i32 = arith.constant 0 : i32
    %c0_i32_0 = arith.constant 0 : i32
    %c0_i32_1 = arith.constant 0 : i32
    return %c0_i32, %c0_i32_0 : i32, i32
  }
  func.func @transform_4(%arg0: i32) -> (i32, i32) {
    %c0_i32 = arith.constant 0 : i32
    %c0_i32_0 = arith.constant 0 : i32
    %c0_i32_1 = arith.constant 0 : i32
    return %c0_i32, %c0_i32_0 : i32, i32
  }
  func.func @transform_5(%arg0: i32) -> (i32, i32) {
    %c0_i32 = arith.constant 0 : i32
    %c0_i32_0 = arith.constant 0 : i32
    %c0_i32_1 = arith.constant 0 : i32
    return %c0_i32, %c0_i32_0 : i32, i32
  }
  func.func @transform_6(%arg0: i32) -> (i32, i32) {
    %c0_i32 = arith.constant 0 : i32
    %c0_i32_0 = arith.constant 0 : i32
    %c0_i32_1 = arith.constant 0 : i32
    return %c0_i32, %c0_i32_0 : i32, i32
  }
  func.func @transform_7(%arg0: i32) -> (i32, i32) {
    %c0_i32 = arith.constant 0 : i32
    %c0_i32_0 = arith.constant 0 : i32
    %c0_i32_1 = arith.constant 0 : i32
    return %c0_i32, %c0_i32_0 : i32, i32
  }
  func.func @transform_8(%arg0: i32) -> (i32, i32) {
    %c0_i32 = arith.constant 0 : i32
    %c0_i32_0 = arith.constant 0 : i32
    %c0_i32_1 = arith.constant 0 : i32
    return %c0_i32, %c0_i32_0 : i32, i32
  }
  func.func @transform_9(%arg0: i32) -> (i32, i32) {
    %c0_i32 = arith.constant 0 : i32
    %c0_i32_0 = arith.constant 0 : i32
    %c0_i32_1 = arith.constant 0 : i32
    return %c0_i32, %c0_i32_0 : i32, i32
  }
  func.func @transform_10(%arg0: i32) -> (i32, i32) {
    %c0_i32 = arith.constant 0 : i32
    %c0_i32_0 = arith.constant 0 : i32
    %c0_i32_1 = arith.constant 0 : i32
    return %c0_i32, %c0_i32_0 : i32, i32
  }
  func.func @transform_11(%arg0: i32) -> (i32, i32) {
    %c0_i32 = arith.constant 0 : i32
    %c0_i32_0 = arith.constant 0 : i32
    %c0_i32_1 = arith.constant 0 : i32
    return %c0_i32, %c0_i32_0 : i32, i32
  }
  func.func @transform_12(%arg0: i32) -> (i32, i32) {
    %c0_i32 = arith.constant 0 : i32
    %c0_i32_0 = arith.constant 0 : i32
    %c0_i32_1 = arith.constant 0 : i32
    return %c0_i32, %c0_i32_0 : i32, i32
  }
  func.func @transform_13(%arg0: i32) -> (i32, i32) {
    %c0_i32 = arith.constant 0 : i32
    %c0_i32_0 = arith.constant 0 : i32
    %c0_i32_1 = arith.constant 0 : i32
    return %c0_i32, %c0_i32_0 : i32, i32
  }
  func.func @transform_14(%arg0: i32) -> (i32, i32) {
    %c0_i32 = arith.constant 0 : i32
    %c0_i32_0 = arith.constant 0 : i32
    %c0_i32_1 = arith.constant 0 : i32
    return %c0_i32, %c0_i32_0 : i32, i32
  }
  func.func @transform_15(%arg0: i32) -> (i32, i32) {
    %c0_i32 = arith.constant 0 : i32
    %c0_i32_0 = arith.constant 0 : i32
    %c0_i32_1 = arith.constant 0 : i32
    return %c0_i32, %c0_i32_0 : i32, i32
  }
  func.func @transform_16(%arg0: i32) -> (i32, i32) {
    %c0_i32 = arith.constant 0 : i32
    %c0_i32_0 = arith.constant 0 : i32
    %c0_i32_1 = arith.constant 0 : i32
    return %c0_i32, %c0_i32_0 : i32, i32
  }
  func.func @transform_17(%arg0: i32) -> (i32, i32) {
    %c0_i32 = arith.constant 0 : i32
    %c0_i32_0 = arith.constant 0 : i32
    %c0_i32_1 = arith.constant 0 : i32
    return %c0_i32, %c0_i32_0 : i32, i32
  }
  func.func @transform_18(%arg0: i32) -> (i32, i32) {
    %c0_i32 = arith.constant 0 : i32
    %c0_i32_0 = arith.constant 0 : i32
    %c0_i32_1 = arith.constant 0 : i32
    return %c0_i32, %c0_i32_0 : i32, i32
  }
  func.func @transform_19(%arg0: i32) -> (i32, i32) {
    %c0_i32 = arith.constant 0 : i32
    %c0_i32_0 = arith.constant 0 : i32
    %c0_i32_1 = arith.constant 0 : i32
    return %c0_i32, %c0_i32_0 : i32, i32
  }
  func.func @transform_20(%arg0: i32) -> (i32, i32) {
    %c0_i32 = arith.constant 0 : i32
    %c0_i32_0 = arith.constant 0 : i32
    %c0_i32_1 = arith.constant 0 : i32
    return %c0_i32, %c0_i32_0 : i32, i32
  }
  func.func @transform_21(%arg0: i32) -> (i32, i32) {
    %c0_i32 = arith.constant 0 : i32
    %c0_i32_0 = arith.constant 0 : i32
    %c0_i32_1 = arith.constant 0 : i32
    return %c0_i32, %c0_i32_0 : i32, i32
  }
  func.func @transform_22(%arg0: i32) -> (i32, i32) {
    %c0_i32 = arith.constant 0 : i32
    %c0_i32_0 = arith.constant 0 : i32
    %c0_i32_1 = arith.constant 0 : i32
    return %c0_i32, %c0_i32_0 : i32, i32
  }
  func.func @transform_23(%arg0: i32) -> (i32, i32) {
    %c0_i32 = arith.constant 0 : i32
    %c0_i32_0 = arith.constant 0 : i32
    %c0_i32_1 = arith.constant 0 : i32
    return %c0_i32, %c0_i32_0 : i32, i32
  }
  func.func @transform_24(%arg0: i32) -> (i32, i32) {
    %c0_i32 = arith.constant 0 : i32
    %c0_i32_0 = arith.constant 0 : i32
    %c0_i32_1 = arith.constant 0 : i32
    return %c0_i32, %c0_i32_0 : i32, i32
  }
  func.func @transform_25(%arg0: i32) -> (i32, i32) {
    %c0_i32 = arith.constant 0 : i32
    %c0_i32_0 = arith.constant 0 : i32
    %c0_i32_1 = arith.constant 0 : i32
    return %c0_i32, %c0_i32_0 : i32, i32
  }
  func.func @transform_26(%arg0: i32) -> (i32, i32) {
    %c0_i32 = arith.constant 0 : i32
    %c0_i32_0 = arith.constant 0 : i32
    %c0_i32_1 = arith.constant 0 : i32
    return %c0_i32, %c0_i32_0 : i32, i32
  }
  func.func @transform_27(%arg0: i32) -> (i32, i32) {
    %c0_i32 = arith.constant 0 : i32
    %c0_i32_0 = arith.constant 0 : i32
    %c0_i32_1 = arith.constant 0 : i32
    return %c0_i32, %c0_i32_0 : i32, i32
  }
  func.func @transform_28(%arg0: i32) -> (i32, i32) {
    %c0_i32 = arith.constant 0 : i32
    %c0_i32_0 = arith.constant 0 : i32
    %c0_i32_1 = arith.constant 0 : i32
    return %c0_i32, %c0_i32_0 : i32, i32
  }
  func.func @transform_29(%arg0: i32) -> (i32, i32) {
    %c0_i32 = arith.constant 0 : i32
    %c0_i32_0 = arith.constant 0 : i32
    return %arg0, %c0_i32 : i32, i32
  }
}

module attributes {stable_mosaic.version = 11 : i64} {
  func.func @_gru_kernel(%arg0: i32, %arg1: memref<2x8x96xf32, #tpu.memory_space<vmem>>, %arg2: memref<32x96xf32, #tpu.memory_space<vmem>>, %arg3: memref<1x32xf32, #tpu.memory_space<vmem>>, %arg4: memref<2x8x32xf32, #tpu.memory_space<vmem>>, %arg5: memref<2x32xf32, #tpu.memory_space<vmem>>) attributes {dimension_semantics = [#tpu.dimension_semantics<arbitrary>], iteration_bounds = array<i64: 1>, scalar_prefetch = 0 : i64, scratch_operands = 1 : i64, tpu.core_type = #tpu.core_type<tc>, window_params = [{transform_indices = @transform_0, window_bounds = array<i64: 2, 8, 96>}, {pipeline_mode = #tpu.pipeline_mode<synchronous>, transform_indices = @transform_1, window_bounds = array<i64: 32, 96>}, {pipeline_mode = #tpu.pipeline_mode<synchronous>, transform_indices = @transform_2, window_bounds = array<i64: 1, 32>}, {transform_indices = @transform_3, window_bounds = array<i64: 2, 8, 32>}]} {
    %c0_i32 = arith.constant 0 : i32
    %0 = arith.cmpi eq, %arg0, %c0_i32 : i32
    %1 = arith.extui %0 : i1 to i32
    %c0_i32_0 = arith.constant 0 : i32
    %2 = arith.cmpi ne, %1, %c0_i32_0 : i32
    scf.if %2 {
      %cst_80 = arith.constant 0.000000e+00 : f32
      %279 = vector.broadcast %cst_80 : f32 to vector<2x32xf32>
      %c0_81 = arith.constant 0 : index
      %c0_82 = arith.constant 0 : index
      %280 = vector.load %arg5[%c0_81, %c0_82] : memref<2x32xf32, #tpu.memory_space<vmem>>, vector<2x32xf32>
      tpu.vector_store %arg5[%c0_81, %c0_82], %279 {strides = array<i32>} : memref<2x32xf32, #tpu.memory_space<vmem>>, vector<2x32xf32>,
    } else {
    }
    %c0 = arith.constant 0 : index
    %c0_1 = arith.constant 0 : index
    %3 = vector.load %arg2[%c0, %c0_1] : memref<32x96xf32, #tpu.memory_space<vmem>>, vector<32x96xf32>
    %c0_2 = arith.constant 0 : index
    %c0_3 = arith.constant 0 : index
    %4 = vector.load %arg3[%c0_2, %c0_3] : memref<1x32xf32, #tpu.memory_space<vmem>>, vector<1x32xf32>
    %c0_4 = arith.constant 0 : index
    %c0_5 = arith.constant 0 : index
    %5 = vector.load %arg5[%c0_4, %c0_5] : memref<2x32xf32, #tpu.memory_space<vmem>>, vector<2x32xf32>
    %c0_6 = arith.constant 0 : index
    %c0_7 = arith.constant 0 : index
    %c0_8 = arith.constant 0 : index
    %6 = vector.load %arg1[%c0_6, %c0_7, %c0_8] : memref<2x8x96xf32, #tpu.memory_space<vmem>>, vector<2x1x96xf32>
    %7 = vector.shape_cast %6 : vector<2x1x96xf32> to vector<2x96xf32>
    %cst = arith.constant dense<0.000000e+00> : vector<2x96xf32>
    %8 = tpu.matmul %5, %3, %cst {dimension_numbers = #tpu.dot_dimension_numbers<[1], [0], [0], [1], [0, 0, 1, 1], [], []>} : vector<2x32xf32>, vector<32x96xf32>, vector<2x96xf32> -> vector<2x96xf32>
    %9 = vector.extract_strided_slice %7 {offsets = [0, 0], sizes = [2, 32], strides = [1, 1]} : vector<2x96xf32> to vector<2x32xf32>
    %10 = vector.extract_strided_slice %8 {offsets = [0, 0], sizes = [2, 32], strides = [1, 1]} : vector<2x96xf32> to vector<2x32xf32>
    %11 = arith.addf %9, %10 : vector<2x32xf32>
    %12 = arith.negf %11 : vector<2x32xf32>
    %13 = math.exp %12 : vector<2x32xf32>
    %cst_9 = arith.constant 1.000000e+00 : f32
    %14 = vector.broadcast %cst_9 : f32 to vector<2x32xf32>
    %15 = arith.addf %14, %13 : vector<2x32xf32>
    %16 = arith.divf %14, %15 : vector<2x32xf32>
    %17 = vector.extract_strided_slice %7 {offsets = [0, 32], sizes = [2, 32], strides = [1, 1]} : vector<2x96xf32> to vector<2x32xf32>
    %18 = vector.extract_strided_slice %8 {offsets = [0, 32], sizes = [2, 32], strides = [1, 1]} : vector<2x96xf32> to vector<2x32xf32>
    %19 = arith.addf %17, %18 : vector<2x32xf32>
    %20 = arith.negf %19 : vector<2x32xf32>
    %21 = math.exp %20 : vector<2x32xf32>
    %cst_10 = arith.constant 1.000000e+00 : f32
    %22 = vector.broadcast %cst_10 : f32 to vector<2x32xf32>
    %23 = arith.addf %22, %21 : vector<2x32xf32>
    %24 = arith.divf %22, %23 : vector<2x32xf32>
    %25 = vector.extract_strided_slice %7 {offsets = [0, 64], sizes = [2, 32], strides = [1, 1]} : vector<2x96xf32> to vector<2x32xf32>
    %26 = vector.extract_strided_slice %8 {offsets = [0, 64], sizes = [2, 32], strides = [1, 1]} : vector<2x96xf32> to vector<2x32xf32>
    %27 = vector.broadcast %4 : vector<1x32xf32> to vector<2x32xf32>
    %28 = arith.addf %26, %27 : vector<2x32xf32>
    %29 = arith.mulf %16, %28 : vector<2x32xf32>
    %30 = arith.addf %25, %29 : vector<2x32xf32>
    %31 = math.tanh %30 : vector<2x32xf32>
    %cst_11 = arith.constant 1.000000e+00 : f32
    %32 = vector.broadcast %cst_11 : f32 to vector<2x32xf32>
    %33 = arith.subf %32, %24 : vector<2x32xf32>
    %34 = arith.mulf %33, %31 : vector<2x32xf32>
    %35 = arith.mulf %24, %5 : vector<2x32xf32>
    %36 = arith.addf %34, %35 : vector<2x32xf32>
    %c0_12 = arith.constant 0 : index
    %c0_13 = arith.constant 0 : index
    %c0_14 = arith.constant 0 : index
    %37 = vector.load %arg4[%c0_12, %c0_13, %c0_14] : memref<2x8x32xf32, #tpu.memory_space<vmem>>, vector<2x1x32xf32>
    %38 = vector.shape_cast %37 : vector<2x1x32xf32> to vector<2x32xf32>
    %39 = vector.shape_cast %36 : vector<2x32xf32> to vector<2x1x32xf32>
    tpu.vector_store %arg4[%c0_12, %c0_13, %c0_14], %39 {strides = array<i32>} : memref<2x8x32xf32, #tpu.memory_space<vmem>>, vector<2x1x32xf32>,
    %c0_15 = arith.constant 0 : index
    %c1 = arith.constant 1 : index
    %c0_16 = arith.constant 0 : index
    %40 = vector.load %arg1[%c0_15, %c1, %c0_16] : memref<2x8x96xf32, #tpu.memory_space<vmem>>, vector<2x1x96xf32>
    %41 = vector.shape_cast %40 : vector<2x1x96xf32> to vector<2x96xf32>
    %cst_17 = arith.constant dense<0.000000e+00> : vector<2x96xf32>
    %42 = tpu.matmul %36, %3, %cst_17 {dimension_numbers = #tpu.dot_dimension_numbers<[1], [0], [0], [1], [0, 0, 1, 1], [], []>} : vector<2x32xf32>, vector<32x96xf32>, vector<2x96xf32> -> vector<2x96xf32>
    %43 = vector.extract_strided_slice %41 {offsets = [0, 0], sizes = [2, 32], strides = [1, 1]} : vector<2x96xf32> to vector<2x32xf32>
    %44 = vector.extract_strided_slice %42 {offsets = [0, 0], sizes = [2, 32], strides = [1, 1]} : vector<2x96xf32> to vector<2x32xf32>
    %45 = arith.addf %43, %44 : vector<2x32xf32>
    %46 = arith.negf %45 : vector<2x32xf32>
    %47 = math.exp %46 : vector<2x32xf32>
    %cst_18 = arith.constant 1.000000e+00 : f32
    %48 = vector.broadcast %cst_18 : f32 to vector<2x32xf32>
    %49 = arith.addf %48, %47 : vector<2x32xf32>
    %50 = arith.divf %48, %49 : vector<2x32xf32>
    %51 = vector.extract_strided_slice %41 {offsets = [0, 32], sizes = [2, 32], strides = [1, 1]} : vector<2x96xf32> to vector<2x32xf32>
    %52 = vector.extract_strided_slice %42 {offsets = [0, 32], sizes = [2, 32], strides = [1, 1]} : vector<2x96xf32> to vector<2x32xf32>
    %53 = arith.addf %51, %52 : vector<2x32xf32>
    %54 = arith.negf %53 : vector<2x32xf32>
    %55 = math.exp %54 : vector<2x32xf32>
    %cst_19 = arith.constant 1.000000e+00 : f32
    %56 = vector.broadcast %cst_19 : f32 to vector<2x32xf32>
    %57 = arith.addf %56, %55 : vector<2x32xf32>
    %58 = arith.divf %56, %57 : vector<2x32xf32>
    %59 = vector.extract_strided_slice %41 {offsets = [0, 64], sizes = [2, 32], strides = [1, 1]} : vector<2x96xf32> to vector<2x32xf32>
    %60 = vector.extract_strided_slice %42 {offsets = [0, 64], sizes = [2, 32], strides = [1, 1]} : vector<2x96xf32> to vector<2x32xf32>
    %61 = vector.broadcast %4 : vector<1x32xf32> to vector<2x32xf32>
    %62 = arith.addf %60, %61 : vector<2x32xf32>
    %63 = arith.mulf %50, %62 : vector<2x32xf32>
    %64 = arith.addf %59, %63 : vector<2x32xf32>
    %65 = math.tanh %64 : vector<2x32xf32>
    %cst_20 = arith.constant 1.000000e+00 : f32
    %66 = vector.broadcast %cst_20 : f32 to vector<2x32xf32>
    %67 = arith.subf %66, %58 : vector<2x32xf32>
    %68 = arith.mulf %67, %65 : vector<2x32xf32>
    %69 = arith.mulf %58, %36 : vector<2x32xf32>
    %70 = arith.addf %68, %69 : vector<2x32xf32>
    %c0_21 = arith.constant 0 : index
    %c1_22 = arith.constant 1 : index
    %c0_23 = arith.constant 0 : index
    %71 = vector.load %arg4[%c0_21, %c1_22, %c0_23] : memref<2x8x32xf32, #tpu.memory_space<vmem>>, vector<2x1x32xf32>
    %72 = vector.shape_cast %71 : vector<2x1x32xf32> to vector<2x32xf32>
    %73 = vector.shape_cast %70 : vector<2x32xf32> to vector<2x1x32xf32>
    tpu.vector_store %arg4[%c0_21, %c1_22, %c0_23], %73 {strides = array<i32>} : memref<2x8x32xf32, #tpu.memory_space<vmem>>, vector<2x1x32xf32>,
    %c0_24 = arith.constant 0 : index
    %c2 = arith.constant 2 : index
    %c0_25 = arith.constant 0 : index
    %74 = vector.load %arg1[%c0_24, %c2, %c0_25] : memref<2x8x96xf32, #tpu.memory_space<vmem>>, vector<2x1x96xf32>
    %75 = vector.shape_cast %74 : vector<2x1x96xf32> to vector<2x96xf32>
    %cst_26 = arith.constant dense<0.000000e+00> : vector<2x96xf32>
    %76 = tpu.matmul %70, %3, %cst_26 {dimension_numbers = #tpu.dot_dimension_numbers<[1], [0], [0], [1], [0, 0, 1, 1], [], []>} : vector<2x32xf32>, vector<32x96xf32>, vector<2x96xf32> -> vector<2x96xf32>
    %77 = vector.extract_strided_slice %75 {offsets = [0, 0], sizes = [2, 32], strides = [1, 1]} : vector<2x96xf32> to vector<2x32xf32>
    %78 = vector.extract_strided_slice %76 {offsets = [0, 0], sizes = [2, 32], strides = [1, 1]} : vector<2x96xf32> to vector<2x32xf32>
    %79 = arith.addf %77, %78 : vector<2x32xf32>
    %80 = arith.negf %79 : vector<2x32xf32>
    %81 = math.exp %80 : vector<2x32xf32>
    %cst_27 = arith.constant 1.000000e+00 : f32
    %82 = vector.broadcast %cst_27 : f32 to vector<2x32xf32>
    %83 = arith.addf %82, %81 : vector<2x32xf32>
    %84 = arith.divf %82, %83 : vector<2x32xf32>
    %85 = vector.extract_strided_slice %75 {offsets = [0, 32], sizes = [2, 32], strides = [1, 1]} : vector<2x96xf32> to vector<2x32xf32>
    %86 = vector.extract_strided_slice %76 {offsets = [0, 32], sizes = [2, 32], strides = [1, 1]} : vector<2x96xf32> to vector<2x32xf32>
    %87 = arith.addf %85, %86 : vector<2x32xf32>
    %88 = arith.negf %87 : vector<2x32xf32>
    %89 = math.exp %88 : vector<2x32xf32>
    %cst_28 = arith.constant 1.000000e+00 : f32
    %90 = vector.broadcast %cst_28 : f32 to vector<2x32xf32>
    %91 = arith.addf %90, %89 : vector<2x32xf32>
    %92 = arith.divf %90, %91 : vector<2x32xf32>
    %93 = vector.extract_strided_slice %75 {offsets = [0, 64], sizes = [2, 32], strides = [1, 1]} : vector<2x96xf32> to vector<2x32xf32>
    %94 = vector.extract_strided_slice %76 {offsets = [0, 64], sizes = [2, 32], strides = [1, 1]} : vector<2x96xf32> to vector<2x32xf32>
    %95 = vector.broadcast %4 : vector<1x32xf32> to vector<2x32xf32>
    %96 = arith.addf %94, %95 : vector<2x32xf32>
    %97 = arith.mulf %84, %96 : vector<2x32xf32>
    %98 = arith.addf %93, %97 : vector<2x32xf32>
    %99 = math.tanh %98 : vector<2x32xf32>
    %cst_29 = arith.constant 1.000000e+00 : f32
    %100 = vector.broadcast %cst_29 : f32 to vector<2x32xf32>
    %101 = arith.subf %100, %92 : vector<2x32xf32>
    %102 = arith.mulf %101, %99 : vector<2x32xf32>
    %103 = arith.mulf %92, %70 : vector<2x32xf32>
    %104 = arith.addf %102, %103 : vector<2x32xf32>
    %c0_30 = arith.constant 0 : index
    %c2_31 = arith.constant 2 : index
    %c0_32 = arith.constant 0 : index
    %105 = vector.load %arg4[%c0_30, %c2_31, %c0_32] : memref<2x8x32xf32, #tpu.memory_space<vmem>>, vector<2x1x32xf32>
    %106 = vector.shape_cast %105 : vector<2x1x32xf32> to vector<2x32xf32>
    %107 = vector.shape_cast %104 : vector<2x32xf32> to vector<2x1x32xf32>
    tpu.vector_store %arg4[%c0_30, %c2_31, %c0_32], %107 {strides = array<i32>} : memref<2x8x32xf32, #tpu.memory_space<vmem>>, vector<2x1x32xf32>,
    %c0_33 = arith.constant 0 : index
    %c3 = arith.constant 3 : index
    %c0_34 = arith.constant 0 : index
    %108 = vector.load %arg1[%c0_33, %c3, %c0_34] : memref<2x8x96xf32, #tpu.memory_space<vmem>>, vector<2x1x96xf32>
    %109 = vector.shape_cast %108 : vector<2x1x96xf32> to vector<2x96xf32>
    %cst_35 = arith.constant dense<0.000000e+00> : vector<2x96xf32>
    %110 = tpu.matmul %104, %3, %cst_35 {dimension_numbers = #tpu.dot_dimension_numbers<[1], [0], [0], [1], [0, 0, 1, 1], [], []>} : vector<2x32xf32>, vector<32x96xf32>, vector<2x96xf32> -> vector<2x96xf32>
    %111 = vector.extract_strided_slice %109 {offsets = [0, 0], sizes = [2, 32], strides = [1, 1]} : vector<2x96xf32> to vector<2x32xf32>
    %112 = vector.extract_strided_slice %110 {offsets = [0, 0], sizes = [2, 32], strides = [1, 1]} : vector<2x96xf32> to vector<2x32xf32>
    %113 = arith.addf %111, %112 : vector<2x32xf32>
    %114 = arith.negf %113 : vector<2x32xf32>
    %115 = math.exp %114 : vector<2x32xf32>
    %cst_36 = arith.constant 1.000000e+00 : f32
    %116 = vector.broadcast %cst_36 : f32 to vector<2x32xf32>
    %117 = arith.addf %116, %115 : vector<2x32xf32>
    %118 = arith.divf %116, %117 : vector<2x32xf32>
    %119 = vector.extract_strided_slice %109 {offsets = [0, 32], sizes = [2, 32], strides = [1, 1]} : vector<2x96xf32> to vector<2x32xf32>
    %120 = vector.extract_strided_slice %110 {offsets = [0, 32], sizes = [2, 32], strides = [1, 1]} : vector<2x96xf32> to vector<2x32xf32>
    %121 = arith.addf %119, %120 : vector<2x32xf32>
    %122 = arith.negf %121 : vector<2x32xf32>
    %123 = math.exp %122 : vector<2x32xf32>
    %cst_37 = arith.constant 1.000000e+00 : f32
    %124 = vector.broadcast %cst_37 : f32 to vector<2x32xf32>
    %125 = arith.addf %124, %123 : vector<2x32xf32>
    %126 = arith.divf %124, %125 : vector<2x32xf32>
    %127 = vector.extract_strided_slice %109 {offsets = [0, 64], sizes = [2, 32], strides = [1, 1]} : vector<2x96xf32> to vector<2x32xf32>
    %128 = vector.extract_strided_slice %110 {offsets = [0, 64], sizes = [2, 32], strides = [1, 1]} : vector<2x96xf32> to vector<2x32xf32>
    %129 = vector.broadcast %4 : vector<1x32xf32> to vector<2x32xf32>
    %130 = arith.addf %128, %129 : vector<2x32xf32>
    %131 = arith.mulf %118, %130 : vector<2x32xf32>
    %132 = arith.addf %127, %131 : vector<2x32xf32>
    %133 = math.tanh %132 : vector<2x32xf32>
    %cst_38 = arith.constant 1.000000e+00 : f32
    %134 = vector.broadcast %cst_38 : f32 to vector<2x32xf32>
    %135 = arith.subf %134, %126 : vector<2x32xf32>
    %136 = arith.mulf %135, %133 : vector<2x32xf32>
    %137 = arith.mulf %126, %104 : vector<2x32xf32>
    %138 = arith.addf %136, %137 : vector<2x32xf32>
    %c0_39 = arith.constant 0 : index
    %c3_40 = arith.constant 3 : index
    %c0_41 = arith.constant 0 : index
    %139 = vector.load %arg4[%c0_39, %c3_40, %c0_41] : memref<2x8x32xf32, #tpu.memory_space<vmem>>, vector<2x1x32xf32>
    %140 = vector.shape_cast %139 : vector<2x1x32xf32> to vector<2x32xf32>
    %141 = vector.shape_cast %138 : vector<2x32xf32> to vector<2x1x32xf32>
    tpu.vector_store %arg4[%c0_39, %c3_40, %c0_41], %141 {strides = array<i32>} : memref<2x8x32xf32, #tpu.memory_space<vmem>>, vector<2x1x32xf32>,
    %c0_42 = arith.constant 0 : index
    %c4 = arith.constant 4 : index
    %c0_43 = arith.constant 0 : index
    %142 = vector.load %arg1[%c0_42, %c4, %c0_43] : memref<2x8x96xf32, #tpu.memory_space<vmem>>, vector<2x1x96xf32>
    %143 = vector.shape_cast %142 : vector<2x1x96xf32> to vector<2x96xf32>
    %cst_44 = arith.constant dense<0.000000e+00> : vector<2x96xf32>
    %144 = tpu.matmul %138, %3, %cst_44 {dimension_numbers = #tpu.dot_dimension_numbers<[1], [0], [0], [1], [0, 0, 1, 1], [], []>} : vector<2x32xf32>, vector<32x96xf32>, vector<2x96xf32> -> vector<2x96xf32>
    %145 = vector.extract_strided_slice %143 {offsets = [0, 0], sizes = [2, 32], strides = [1, 1]} : vector<2x96xf32> to vector<2x32xf32>
    %146 = vector.extract_strided_slice %144 {offsets = [0, 0], sizes = [2, 32], strides = [1, 1]} : vector<2x96xf32> to vector<2x32xf32>
    %147 = arith.addf %145, %146 : vector<2x32xf32>
    %148 = arith.negf %147 : vector<2x32xf32>
    %149 = math.exp %148 : vector<2x32xf32>
    %cst_45 = arith.constant 1.000000e+00 : f32
    %150 = vector.broadcast %cst_45 : f32 to vector<2x32xf32>
    %151 = arith.addf %150, %149 : vector<2x32xf32>
    %152 = arith.divf %150, %151 : vector<2x32xf32>
    %153 = vector.extract_strided_slice %143 {offsets = [0, 32], sizes = [2, 32], strides = [1, 1]} : vector<2x96xf32> to vector<2x32xf32>
    %154 = vector.extract_strided_slice %144 {offsets = [0, 32], sizes = [2, 32], strides = [1, 1]} : vector<2x96xf32> to vector<2x32xf32>
    %155 = arith.addf %153, %154 : vector<2x32xf32>
    %156 = arith.negf %155 : vector<2x32xf32>
    %157 = math.exp %156 : vector<2x32xf32>
    %cst_46 = arith.constant 1.000000e+00 : f32
    %158 = vector.broadcast %cst_46 : f32 to vector<2x32xf32>
    %159 = arith.addf %158, %157 : vector<2x32xf32>
    %160 = arith.divf %158, %159 : vector<2x32xf32>
    %161 = vector.extract_strided_slice %143 {offsets = [0, 64], sizes = [2, 32], strides = [1, 1]} : vector<2x96xf32> to vector<2x32xf32>
    %162 = vector.extract_strided_slice %144 {offsets = [0, 64], sizes = [2, 32], strides = [1, 1]} : vector<2x96xf32> to vector<2x32xf32>
    %163 = vector.broadcast %4 : vector<1x32xf32> to vector<2x32xf32>
    %164 = arith.addf %162, %163 : vector<2x32xf32>
    %165 = arith.mulf %152, %164 : vector<2x32xf32>
    %166 = arith.addf %161, %165 : vector<2x32xf32>
    %167 = math.tanh %166 : vector<2x32xf32>
    %cst_47 = arith.constant 1.000000e+00 : f32
    %168 = vector.broadcast %cst_47 : f32 to vector<2x32xf32>
    %169 = arith.subf %168, %160 : vector<2x32xf32>
    %170 = arith.mulf %169, %167 : vector<2x32xf32>
    %171 = arith.mulf %160, %138 : vector<2x32xf32>
    %172 = arith.addf %170, %171 : vector<2x32xf32>
    %c0_48 = arith.constant 0 : index
    %c4_49 = arith.constant 4 : index
    %c0_50 = arith.constant 0 : index
    %173 = vector.load %arg4[%c0_48, %c4_49, %c0_50] : memref<2x8x32xf32, #tpu.memory_space<vmem>>, vector<2x1x32xf32>
    %174 = vector.shape_cast %173 : vector<2x1x32xf32> to vector<2x32xf32>
    %175 = vector.shape_cast %172 : vector<2x32xf32> to vector<2x1x32xf32>
    tpu.vector_store %arg4[%c0_48, %c4_49, %c0_50], %175 {strides = array<i32>} : memref<2x8x32xf32, #tpu.memory_space<vmem>>, vector<2x1x32xf32>,
    %c0_51 = arith.constant 0 : index
    %c5 = arith.constant 5 : index
    %c0_52 = arith.constant 0 : index
    %176 = vector.load %arg1[%c0_51, %c5, %c0_52] : memref<2x8x96xf32, #tpu.memory_space<vmem>>, vector<2x1x96xf32>
    %177 = vector.shape_cast %176 : vector<2x1x96xf32> to vector<2x96xf32>
    %cst_53 = arith.constant dense<0.000000e+00> : vector<2x96xf32>
    %178 = tpu.matmul %172, %3, %cst_53 {dimension_numbers = #tpu.dot_dimension_numbers<[1], [0], [0], [1], [0, 0, 1, 1], [], []>} : vector<2x32xf32>, vector<32x96xf32>, vector<2x96xf32> -> vector<2x96xf32>
    %179 = vector.extract_strided_slice %177 {offsets = [0, 0], sizes = [2, 32], strides = [1, 1]} : vector<2x96xf32> to vector<2x32xf32>
    %180 = vector.extract_strided_slice %178 {offsets = [0, 0], sizes = [2, 32], strides = [1, 1]} : vector<2x96xf32> to vector<2x32xf32>
    %181 = arith.addf %179, %180 : vector<2x32xf32>
    %182 = arith.negf %181 : vector<2x32xf32>
    %183 = math.exp %182 : vector<2x32xf32>
    %cst_54 = arith.constant 1.000000e+00 : f32
    %184 = vector.broadcast %cst_54 : f32 to vector<2x32xf32>
    %185 = arith.addf %184, %183 : vector<2x32xf32>
    %186 = arith.divf %184, %185 : vector<2x32xf32>
    %187 = vector.extract_strided_slice %177 {offsets = [0, 32], sizes = [2, 32], strides = [1, 1]} : vector<2x96xf32> to vector<2x32xf32>
    %188 = vector.extract_strided_slice %178 {offsets = [0, 32], sizes = [2, 32], strides = [1, 1]} : vector<2x96xf32> to vector<2x32xf32>
    %189 = arith.addf %187, %188 : vector<2x32xf32>
    %190 = arith.negf %189 : vector<2x32xf32>
    %191 = math.exp %190 : vector<2x32xf32>
    %cst_55 = arith.constant 1.000000e+00 : f32
    %192 = vector.broadcast %cst_55 : f32 to vector<2x32xf32>
    %193 = arith.addf %192, %191 : vector<2x32xf32>
    %194 = arith.divf %192, %193 : vector<2x32xf32>
    %195 = vector.extract_strided_slice %177 {offsets = [0, 64], sizes = [2, 32], strides = [1, 1]} : vector<2x96xf32> to vector<2x32xf32>
    %196 = vector.extract_strided_slice %178 {offsets = [0, 64], sizes = [2, 32], strides = [1, 1]} : vector<2x96xf32> to vector<2x32xf32>
    %197 = vector.broadcast %4 : vector<1x32xf32> to vector<2x32xf32>
    %198 = arith.addf %196, %197 : vector<2x32xf32>
    %199 = arith.mulf %186, %198 : vector<2x32xf32>
    %200 = arith.addf %195, %199 : vector<2x32xf32>
    %201 = math.tanh %200 : vector<2x32xf32>
    %cst_56 = arith.constant 1.000000e+00 : f32
    %202 = vector.broadcast %cst_56 : f32 to vector<2x32xf32>
    %203 = arith.subf %202, %194 : vector<2x32xf32>
    %204 = arith.mulf %203, %201 : vector<2x32xf32>
    %205 = arith.mulf %194, %172 : vector<2x32xf32>
    %206 = arith.addf %204, %205 : vector<2x32xf32>
    %c0_57 = arith.constant 0 : index
    %c5_58 = arith.constant 5 : index
    %c0_59 = arith.constant 0 : index
    %207 = vector.load %arg4[%c0_57, %c5_58, %c0_59] : memref<2x8x32xf32, #tpu.memory_space<vmem>>, vector<2x1x32xf32>
    %208 = vector.shape_cast %207 : vector<2x1x32xf32> to vector<2x32xf32>
    %209 = vector.shape_cast %206 : vector<2x32xf32> to vector<2x1x32xf32>
    tpu.vector_store %arg4[%c0_57, %c5_58, %c0_59], %209 {strides = array<i32>} : memref<2x8x32xf32, #tpu.memory_space<vmem>>, vector<2x1x32xf32>,
    %c0_60 = arith.constant 0 : index
    %c6 = arith.constant 6 : index
    %c0_61 = arith.constant 0 : index
    %210 = vector.load %arg1[%c0_60, %c6, %c0_61] : memref<2x8x96xf32, #tpu.memory_space<vmem>>, vector<2x1x96xf32>
    %211 = vector.shape_cast %210 : vector<2x1x96xf32> to vector<2x96xf32>
    %cst_62 = arith.constant dense<0.000000e+00> : vector<2x96xf32>
    %212 = tpu.matmul %206, %3, %cst_62 {dimension_numbers = #tpu.dot_dimension_numbers<[1], [0], [0], [1], [0, 0, 1, 1], [], []>} : vector<2x32xf32>, vector<32x96xf32>, vector<2x96xf32> -> vector<2x96xf32>
    %213 = vector.extract_strided_slice %211 {offsets = [0, 0], sizes = [2, 32], strides = [1, 1]} : vector<2x96xf32> to vector<2x32xf32>
    %214 = vector.extract_strided_slice %212 {offsets = [0, 0], sizes = [2, 32], strides = [1, 1]} : vector<2x96xf32> to vector<2x32xf32>
    %215 = arith.addf %213, %214 : vector<2x32xf32>
    %216 = arith.negf %215 : vector<2x32xf32>
    %217 = math.exp %216 : vector<2x32xf32>
    %cst_63 = arith.constant 1.000000e+00 : f32
    %218 = vector.broadcast %cst_63 : f32 to vector<2x32xf32>
    %219 = arith.addf %218, %217 : vector<2x32xf32>
    %220 = arith.divf %218, %219 : vector<2x32xf32>
    %221 = vector.extract_strided_slice %211 {offsets = [0, 32], sizes = [2, 32], strides = [1, 1]} : vector<2x96xf32> to vector<2x32xf32>
    %222 = vector.extract_strided_slice %212 {offsets = [0, 32], sizes = [2, 32], strides = [1, 1]} : vector<2x96xf32> to vector<2x32xf32>
    %223 = arith.addf %221, %222 : vector<2x32xf32>
    %224 = arith.negf %223 : vector<2x32xf32>
    %225 = math.exp %224 : vector<2x32xf32>
    %cst_64 = arith.constant 1.000000e+00 : f32
    %226 = vector.broadcast %cst_64 : f32 to vector<2x32xf32>
    %227 = arith.addf %226, %225 : vector<2x32xf32>
    %228 = arith.divf %226, %227 : vector<2x32xf32>
    %229 = vector.extract_strided_slice %211 {offsets = [0, 64], sizes = [2, 32], strides = [1, 1]} : vector<2x96xf32> to vector<2x32xf32>
    %230 = vector.extract_strided_slice %212 {offsets = [0, 64], sizes = [2, 32], strides = [1, 1]} : vector<2x96xf32> to vector<2x32xf32>
    %231 = vector.broadcast %4 : vector<1x32xf32> to vector<2x32xf32>
    %232 = arith.addf %230, %231 : vector<2x32xf32>
    %233 = arith.mulf %220, %232 : vector<2x32xf32>
    %234 = arith.addf %229, %233 : vector<2x32xf32>
    %235 = math.tanh %234 : vector<2x32xf32>
    %cst_65 = arith.constant 1.000000e+00 : f32
    %236 = vector.broadcast %cst_65 : f32 to vector<2x32xf32>
    %237 = arith.subf %236, %228 : vector<2x32xf32>
    %238 = arith.mulf %237, %235 : vector<2x32xf32>
    %239 = arith.mulf %228, %206 : vector<2x32xf32>
    %240 = arith.addf %238, %239 : vector<2x32xf32>
    %c0_66 = arith.constant 0 : index
    %c6_67 = arith.constant 6 : index
    %c0_68 = arith.constant 0 : index
    %241 = vector.load %arg4[%c0_66, %c6_67, %c0_68] : memref<2x8x32xf32, #tpu.memory_space<vmem>>, vector<2x1x32xf32>
    %242 = vector.shape_cast %241 : vector<2x1x32xf32> to vector<2x32xf32>
    %243 = vector.shape_cast %240 : vector<2x32xf32> to vector<2x1x32xf32>
    tpu.vector_store %arg4[%c0_66, %c6_67, %c0_68], %243 {strides = array<i32>} : memref<2x8x32xf32, #tpu.memory_space<vmem>>, vector<2x1x32xf32>,
    %c0_69 = arith.constant 0 : index
    %c7 = arith.constant 7 : index
    %c0_70 = arith.constant 0 : index
    %244 = vector.load %arg1[%c0_69, %c7, %c0_70] : memref<2x8x96xf32, #tpu.memory_space<vmem>>, vector<2x1x96xf32>
    %245 = vector.shape_cast %244 : vector<2x1x96xf32> to vector<2x96xf32>
    %cst_71 = arith.constant dense<0.000000e+00> : vector<2x96xf32>
    %246 = tpu.matmul %240, %3, %cst_71 {dimension_numbers = #tpu.dot_dimension_numbers<[1], [0], [0], [1], [0, 0, 1, 1], [], []>} : vector<2x32xf32>, vector<32x96xf32>, vector<2x96xf32> -> vector<2x96xf32>
    %247 = vector.extract_strided_slice %245 {offsets = [0, 0], sizes = [2, 32], strides = [1, 1]} : vector<2x96xf32> to vector<2x32xf32>
    %248 = vector.extract_strided_slice %246 {offsets = [0, 0], sizes = [2, 32], strides = [1, 1]} : vector<2x96xf32> to vector<2x32xf32>
    %249 = arith.addf %247, %248 : vector<2x32xf32>
    %250 = arith.negf %249 : vector<2x32xf32>
    %251 = math.exp %250 : vector<2x32xf32>
    %cst_72 = arith.constant 1.000000e+00 : f32
    %252 = vector.broadcast %cst_72 : f32 to vector<2x32xf32>
    %253 = arith.addf %252, %251 : vector<2x32xf32>
    %254 = arith.divf %252, %253 : vector<2x32xf32>
    %255 = vector.extract_strided_slice %245 {offsets = [0, 32], sizes = [2, 32], strides = [1, 1]} : vector<2x96xf32> to vector<2x32xf32>
    %256 = vector.extract_strided_slice %246 {offsets = [0, 32], sizes = [2, 32], strides = [1, 1]} : vector<2x96xf32> to vector<2x32xf32>
    %257 = arith.addf %255, %256 : vector<2x32xf32>
    %258 = arith.negf %257 : vector<2x32xf32>
    %259 = math.exp %258 : vector<2x32xf32>
    %cst_73 = arith.constant 1.000000e+00 : f32
    %260 = vector.broadcast %cst_73 : f32 to vector<2x32xf32>
    %261 = arith.addf %260, %259 : vector<2x32xf32>
    %262 = arith.divf %260, %261 : vector<2x32xf32>
    %263 = vector.extract_strided_slice %245 {offsets = [0, 64], sizes = [2, 32], strides = [1, 1]} : vector<2x96xf32> to vector<2x32xf32>
    %264 = vector.extract_strided_slice %246 {offsets = [0, 64], sizes = [2, 32], strides = [1, 1]} : vector<2x96xf32> to vector<2x32xf32>
    %265 = vector.broadcast %4 : vector<1x32xf32> to vector<2x32xf32>
    %266 = arith.addf %264, %265 : vector<2x32xf32>
    %267 = arith.mulf %254, %266 : vector<2x32xf32>
    %268 = arith.addf %263, %267 : vector<2x32xf32>
    %269 = math.tanh %268 : vector<2x32xf32>
    %cst_74 = arith.constant 1.000000e+00 : f32
    %270 = vector.broadcast %cst_74 : f32 to vector<2x32xf32>
    %271 = arith.subf %270, %262 : vector<2x32xf32>
    %272 = arith.mulf %271, %269 : vector<2x32xf32>
    %273 = arith.mulf %262, %240 : vector<2x32xf32>
    %274 = arith.addf %272, %273 : vector<2x32xf32>
    %c0_75 = arith.constant 0 : index
    %c7_76 = arith.constant 7 : index
    %c0_77 = arith.constant 0 : index
    %275 = vector.load %arg4[%c0_75, %c7_76, %c0_77] : memref<2x8x32xf32, #tpu.memory_space<vmem>>, vector<2x1x32xf32>
    %276 = vector.shape_cast %275 : vector<2x1x32xf32> to vector<2x32xf32>
    %277 = vector.shape_cast %274 : vector<2x32xf32> to vector<2x1x32xf32>
    tpu.vector_store %arg4[%c0_75, %c7_76, %c0_77], %277 {strides = array<i32>} : memref<2x8x32xf32, #tpu.memory_space<vmem>>, vector<2x1x32xf32>,
    %c0_78 = arith.constant 0 : index
    %c0_79 = arith.constant 0 : index
    %278 = vector.load %arg5[%c0_78, %c0_79] : memref<2x32xf32, #tpu.memory_space<vmem>>, vector<2x32xf32>
    tpu.vector_store %arg5[%c0_78, %c0_79], %274 {strides = array<i32>} : memref<2x32xf32, #tpu.memory_space<vmem>>, vector<2x32xf32>,
    return
  }
  func.func @transform_0(%arg0: i32) -> (i32, i32, i32) {
    %c0_i32 = arith.constant 0 : i32
    %c0_i32_0 = arith.constant 0 : i32
    %c0_i32_1 = arith.constant 0 : i32
    return %c0_i32, %arg0, %c0_i32_0 : i32, i32, i32
  }
  func.func @transform_1(%arg0: i32) -> (i32, i32) {
    %c0_i32 = arith.constant 0 : i32
    %c0_i32_0 = arith.constant 0 : i32
    %c0_i32_1 = arith.constant 0 : i32
    return %c0_i32, %c0_i32_0 : i32, i32
  }
  func.func @transform_2(%arg0: i32) -> (i32, i32) {
    %c0_i32 = arith.constant 0 : i32
    %c0_i32_0 = arith.constant 0 : i32
    %c0_i32_1 = arith.constant 0 : i32
    return %c0_i32, %c0_i32_0 : i32, i32
  }
  func.func @transform_3(%arg0: i32) -> (i32, i32, i32) {
    %c0_i32 = arith.constant 0 : i32
    %c0_i32_0 = arith.constant 0 : i32
    %c0_i32_1 = arith.constant 0 : i32
    return %c0_i32, %arg0, %c0_i32_0 : i32, i32, i32
  }
}

module attributes {stable_mosaic.version = 11 : i64} {
  func.func @_outmlp_kernel(%arg0: i32, %arg1: memref<16x32xf32, #tpu.memory_space<vmem>>, %arg2: memref<16x1xf32, #tpu.memory_space<vmem>>, %arg3: memref<16x1xf32, #tpu.memory_space<vmem>>, %arg4: memref<32x32xf32, #tpu.memory_space<vmem>>, %arg5: memref<1x32xf32, #tpu.memory_space<vmem>>, %arg6: memref<1x32xf32, #tpu.memory_space<vmem>>, %arg7: memref<1x32xf32, #tpu.memory_space<vmem>>, %arg8: memref<1x32xf32, #tpu.memory_space<vmem>>, %arg9: memref<1x32xf32, #tpu.memory_space<vmem>>, %arg10: memref<32x32xf32, #tpu.memory_space<vmem>>, %arg11: memref<1x32xf32, #tpu.memory_space<vmem>>, %arg12: memref<1x32xf32, #tpu.memory_space<vmem>>, %arg13: memref<1x32xf32, #tpu.memory_space<vmem>>, %arg14: memref<32x32xf32, #tpu.memory_space<vmem>>, %arg15: memref<1x32xf32, #tpu.memory_space<vmem>>, %arg16: memref<1x32xf32, #tpu.memory_space<vmem>>, %arg17: memref<1x32xf32, #tpu.memory_space<vmem>>, %arg18: memref<16x32xf32, #tpu.memory_space<vmem>>) attributes {dimension_semantics = [#tpu.dimension_semantics<parallel>], iteration_bounds = array<i64: 1>, scalar_prefetch = 0 : i64, scratch_operands = 0 : i64, tpu.core_type = #tpu.core_type<tc>, window_params = [{transform_indices = @transform_0, window_bounds = array<i64: 16, 32>}, {transform_indices = @transform_1, window_bounds = array<i64: 16, 1>}, {transform_indices = @transform_2, window_bounds = array<i64: 16, 1>}, {pipeline_mode = #tpu.pipeline_mode<synchronous>, transform_indices = @transform_3, window_bounds = array<i64: 32, 32>}, {pipeline_mode = #tpu.pipeline_mode<synchronous>, transform_indices = @transform_4, window_bounds = array<i64: 1, 32>}, {pipeline_mode = #tpu.pipeline_mode<synchronous>, transform_indices = @transform_5, window_bounds = array<i64: 1, 32>}, {pipeline_mode = #tpu.pipeline_mode<synchronous>, transform_indices = @transform_6, window_bounds = array<i64: 1, 32>}, {pipeline_mode = #tpu.pipeline_mode<synchronous>, transform_indices = @transform_7, window_bounds = array<i64: 1, 32>}, {pipeline_mode = #tpu.pipeline_mode<synchronous>, transform_indices = @transform_8, window_bounds = array<i64: 1, 32>}, {pipeline_mode = #tpu.pipeline_mode<synchronous>, transform_indices = @transform_9, window_bounds = array<i64: 32, 32>}, {pipeline_mode = #tpu.pipeline_mode<synchronous>, transform_indices = @transform_10, window_bounds = array<i64: 1, 32>}, {pipeline_mode = #tpu.pipeline_mode<synchronous>, transform_indices = @transform_11, window_bounds = array<i64: 1, 32>}, {pipeline_mode = #tpu.pipeline_mode<synchronous>, transform_indices = @transform_12, window_bounds = array<i64: 1, 32>}, {pipeline_mode = #tpu.pipeline_mode<synchronous>, transform_indices = @transform_13, window_bounds = array<i64: 32, 32>}, {pipeline_mode = #tpu.pipeline_mode<synchronous>, transform_indices = @transform_14, window_bounds = array<i64: 1, 32>}, {pipeline_mode = #tpu.pipeline_mode<synchronous>, transform_indices = @transform_15, window_bounds = array<i64: 1, 32>}, {pipeline_mode = #tpu.pipeline_mode<synchronous>, transform_indices = @transform_16, window_bounds = array<i64: 1, 32>}, {transform_indices = @transform_17, window_bounds = array<i64: 16, 32>}]} {
    %c0 = arith.constant 0 : index
    %c0_0 = arith.constant 0 : index
    %0 = vector.load %arg1[%c0, %c0_0] : memref<16x32xf32, #tpu.memory_space<vmem>>, vector<16x32xf32>
    %c0_1 = arith.constant 0 : index
    %c0_2 = arith.constant 0 : index
    %1 = vector.load %arg2[%c0_1, %c0_2] : memref<16x1xf32, #tpu.memory_space<vmem>>, vector<16x1xf32>
    %c0_3 = arith.constant 0 : index
    %c0_4 = arith.constant 0 : index
    %2 = vector.load %arg3[%c0_3, %c0_4] : memref<16x1xf32, #tpu.memory_space<vmem>>, vector<16x1xf32>
    %c0_5 = arith.constant 0 : index
    %c0_6 = arith.constant 0 : index
    %3 = vector.load %arg4[%c0_5, %c0_6] : memref<32x32xf32, #tpu.memory_space<vmem>>, vector<32x32xf32>
    %cst = arith.constant dense<0.000000e+00> : vector<16x32xf32>
    %4 = tpu.matmul %0, %3, %cst {dimension_numbers = #tpu.dot_dimension_numbers<[1], [0], [0], [1], [0, 0, 1, 1], [], []>} : vector<16x32xf32>, vector<32x32xf32>, vector<16x32xf32> -> vector<16x32xf32>
    %c0_7 = arith.constant 0 : index
    %c0_8 = arith.constant 0 : index
    %5 = vector.load %arg5[%c0_7, %c0_8] : memref<1x32xf32, #tpu.memory_space<vmem>>, vector<1x32xf32>
    %6 = vector.broadcast %1 : vector<16x1xf32> to vector<16x32xf32>
    %7 = vector.broadcast %5 : vector<1x32xf32> to vector<16x32xf32>
    %8 = arith.mulf %6, %7 : vector<16x32xf32>
    %9 = arith.addf %4, %8 : vector<16x32xf32>
    %c0_9 = arith.constant 0 : index
    %c0_10 = arith.constant 0 : index
    %10 = vector.load %arg6[%c0_9, %c0_10] : memref<1x32xf32, #tpu.memory_space<vmem>>, vector<1x32xf32>
    %11 = vector.broadcast %2 : vector<16x1xf32> to vector<16x32xf32>
    %12 = vector.broadcast %10 : vector<1x32xf32> to vector<16x32xf32>
    %13 = arith.mulf %11, %12 : vector<16x32xf32>
    %14 = arith.addf %9, %13 : vector<16x32xf32>
    %c0_11 = arith.constant 0 : index
    %c0_12 = arith.constant 0 : index
    %15 = vector.load %arg7[%c0_11, %c0_12] : memref<1x32xf32, #tpu.memory_space<vmem>>, vector<1x32xf32>
    %16 = vector.broadcast %15 : vector<1x32xf32> to vector<16x32xf32>
    %17 = arith.addf %14, %16 : vector<16x32xf32>
    %cst_13 = arith.constant dense<0.000000e+00> : vector<16xf32>
    %18 = vector.multi_reduction <add>, %17, %cst_13 [1] : vector<16x32xf32> to vector<16xf32>
    %19 = vector.shape_cast %18 : vector<16xf32> to vector<16x1xf32>
    %cst_14 = arith.constant 3.200000e+01 : f32
    %20 = vector.broadcast %cst_14 : f32 to vector<16x1xf32>
    %21 = arith.divf %19, %20 : vector<16x1xf32>
    %22 = vector.broadcast %21 : vector<16x1xf32> to vector<16x32xf32>
    %23 = arith.subf %17, %22 : vector<16x32xf32>
    %24 = arith.mulf %23, %23 : vector<16x32xf32>
    %cst_15 = arith.constant dense<0.000000e+00> : vector<16xf32>
    %25 = vector.multi_reduction <add>, %24, %cst_15 [1] : vector<16x32xf32> to vector<16xf32>
    %26 = vector.shape_cast %25 : vector<16xf32> to vector<16x1xf32>
    %cst_16 = arith.constant 3.200000e+01 : f32
    %27 = vector.broadcast %cst_16 : f32 to vector<16x1xf32>
    %28 = arith.divf %26, %27 : vector<16x1xf32>
    %29 = vector.broadcast %21 : vector<16x1xf32> to vector<16x32xf32>
    %30 = arith.subf %17, %29 : vector<16x32xf32>
    %cst_17 = arith.constant 9.99999974E-6 : f32
    %31 = vector.broadcast %cst_17 : f32 to vector<16x1xf32>
    %32 = arith.addf %28, %31 : vector<16x1xf32>
    %33 = math.rsqrt %32 : vector<16x1xf32>
    %34 = vector.broadcast %33 : vector<16x1xf32> to vector<16x32xf32>
    %35 = arith.mulf %30, %34 : vector<16x32xf32>
    %c0_18 = arith.constant 0 : index
    %c0_19 = arith.constant 0 : index
    %36 = vector.load %arg8[%c0_18, %c0_19] : memref<1x32xf32, #tpu.memory_space<vmem>>, vector<1x32xf32>
    %37 = vector.broadcast %36 : vector<1x32xf32> to vector<16x32xf32>
    %38 = arith.mulf %35, %37 : vector<16x32xf32>
    %c0_20 = arith.constant 0 : index
    %c0_21 = arith.constant 0 : index
    %39 = vector.load %arg9[%c0_20, %c0_21] : memref<1x32xf32, #tpu.memory_space<vmem>>, vector<1x32xf32>
    %40 = vector.broadcast %39 : vector<1x32xf32> to vector<16x32xf32>
    %41 = arith.addf %38, %40 : vector<16x32xf32>
    %cst_22 = arith.constant 0.000000e+00 : f32
    %42 = vector.broadcast %cst_22 : f32 to vector<16x32xf32>
    %43 = arith.cmpf oge, %41, %42 : vector<16x32xf32>
    %cst_23 = arith.constant 0.00999999977 : f32
    %44 = vector.broadcast %cst_23 : f32 to vector<16x32xf32>
    %45 = arith.mulf %44, %41 : vector<16x32xf32>
    %46 = arith.select %43, %41, %45 : vector<16x32xi1>, vector<16x32xf32>
    %c0_24 = arith.constant 0 : index
    %c0_25 = arith.constant 0 : index
    %47 = vector.load %arg10[%c0_24, %c0_25] : memref<32x32xf32, #tpu.memory_space<vmem>>, vector<32x32xf32>
    %cst_26 = arith.constant dense<0.000000e+00> : vector<16x32xf32>
    %48 = tpu.matmul %46, %47, %cst_26 {dimension_numbers = #tpu.dot_dimension_numbers<[1], [0], [0], [1], [0, 0, 1, 1], [], []>} : vector<16x32xf32>, vector<32x32xf32>, vector<16x32xf32> -> vector<16x32xf32>
    %c0_27 = arith.constant 0 : index
    %c0_28 = arith.constant 0 : index
    %49 = vector.load %arg11[%c0_27, %c0_28] : memref<1x32xf32, #tpu.memory_space<vmem>>, vector<1x32xf32>
    %50 = vector.broadcast %49 : vector<1x32xf32> to vector<16x32xf32>
    %51 = arith.addf %48, %50 : vector<16x32xf32>
    %cst_29 = arith.constant dense<0.000000e+00> : vector<16xf32>
    %52 = vector.multi_reduction <add>, %51, %cst_29 [1] : vector<16x32xf32> to vector<16xf32>
    %53 = vector.shape_cast %52 : vector<16xf32> to vector<16x1xf32>
    %cst_30 = arith.constant 3.200000e+01 : f32
    %54 = vector.broadcast %cst_30 : f32 to vector<16x1xf32>
    %55 = arith.divf %53, %54 : vector<16x1xf32>
    %56 = vector.broadcast %55 : vector<16x1xf32> to vector<16x32xf32>
    %57 = arith.subf %51, %56 : vector<16x32xf32>
    %58 = arith.mulf %57, %57 : vector<16x32xf32>
    %cst_31 = arith.constant dense<0.000000e+00> : vector<16xf32>
    %59 = vector.multi_reduction <add>, %58, %cst_31 [1] : vector<16x32xf32> to vector<16xf32>
    %60 = vector.shape_cast %59 : vector<16xf32> to vector<16x1xf32>
    %cst_32 = arith.constant 3.200000e+01 : f32
    %61 = vector.broadcast %cst_32 : f32 to vector<16x1xf32>
    %62 = arith.divf %60, %61 : vector<16x1xf32>
    %63 = vector.broadcast %55 : vector<16x1xf32> to vector<16x32xf32>
    %64 = arith.subf %51, %63 : vector<16x32xf32>
    %cst_33 = arith.constant 9.99999974E-6 : f32
    %65 = vector.broadcast %cst_33 : f32 to vector<16x1xf32>
    %66 = arith.addf %62, %65 : vector<16x1xf32>
    %67 = math.rsqrt %66 : vector<16x1xf32>
    %68 = vector.broadcast %67 : vector<16x1xf32> to vector<16x32xf32>
    %69 = arith.mulf %64, %68 : vector<16x32xf32>
    %c0_34 = arith.constant 0 : index
    %c0_35 = arith.constant 0 : index
    %70 = vector.load %arg12[%c0_34, %c0_35] : memref<1x32xf32, #tpu.memory_space<vmem>>, vector<1x32xf32>
    %71 = vector.broadcast %70 : vector<1x32xf32> to vector<16x32xf32>
    %72 = arith.mulf %69, %71 : vector<16x32xf32>
    %c0_36 = arith.constant 0 : index
    %c0_37 = arith.constant 0 : index
    %73 = vector.load %arg13[%c0_36, %c0_37] : memref<1x32xf32, #tpu.memory_space<vmem>>, vector<1x32xf32>
    %74 = vector.broadcast %73 : vector<1x32xf32> to vector<16x32xf32>
    %75 = arith.addf %72, %74 : vector<16x32xf32>
    %cst_38 = arith.constant 0.000000e+00 : f32
    %76 = vector.broadcast %cst_38 : f32 to vector<16x32xf32>
    %77 = arith.cmpf oge, %75, %76 : vector<16x32xf32>
    %cst_39 = arith.constant 0.00999999977 : f32
    %78 = vector.broadcast %cst_39 : f32 to vector<16x32xf32>
    %79 = arith.mulf %78, %75 : vector<16x32xf32>
    %80 = arith.select %77, %75, %79 : vector<16x32xi1>, vector<16x32xf32>
    %c0_40 = arith.constant 0 : index
    %c0_41 = arith.constant 0 : index
    %81 = vector.load %arg14[%c0_40, %c0_41] : memref<32x32xf32, #tpu.memory_space<vmem>>, vector<32x32xf32>
    %cst_42 = arith.constant dense<0.000000e+00> : vector<16x32xf32>
    %82 = tpu.matmul %80, %81, %cst_42 {dimension_numbers = #tpu.dot_dimension_numbers<[1], [0], [0], [1], [0, 0, 1, 1], [], []>} : vector<16x32xf32>, vector<32x32xf32>, vector<16x32xf32> -> vector<16x32xf32>
    %c0_43 = arith.constant 0 : index
    %c0_44 = arith.constant 0 : index
    %83 = vector.load %arg15[%c0_43, %c0_44] : memref<1x32xf32, #tpu.memory_space<vmem>>, vector<1x32xf32>
    %84 = vector.broadcast %83 : vector<1x32xf32> to vector<16x32xf32>
    %85 = arith.addf %82, %84 : vector<16x32xf32>
    %cst_45 = arith.constant dense<0.000000e+00> : vector<16xf32>
    %86 = vector.multi_reduction <add>, %85, %cst_45 [1] : vector<16x32xf32> to vector<16xf32>
    %87 = vector.shape_cast %86 : vector<16xf32> to vector<16x1xf32>
    %cst_46 = arith.constant 3.200000e+01 : f32
    %88 = vector.broadcast %cst_46 : f32 to vector<16x1xf32>
    %89 = arith.divf %87, %88 : vector<16x1xf32>
    %90 = vector.broadcast %89 : vector<16x1xf32> to vector<16x32xf32>
    %91 = arith.subf %85, %90 : vector<16x32xf32>
    %92 = arith.mulf %91, %91 : vector<16x32xf32>
    %cst_47 = arith.constant dense<0.000000e+00> : vector<16xf32>
    %93 = vector.multi_reduction <add>, %92, %cst_47 [1] : vector<16x32xf32> to vector<16xf32>
    %94 = vector.shape_cast %93 : vector<16xf32> to vector<16x1xf32>
    %cst_48 = arith.constant 3.200000e+01 : f32
    %95 = vector.broadcast %cst_48 : f32 to vector<16x1xf32>
    %96 = arith.divf %94, %95 : vector<16x1xf32>
    %97 = vector.broadcast %89 : vector<16x1xf32> to vector<16x32xf32>
    %98 = arith.subf %85, %97 : vector<16x32xf32>
    %cst_49 = arith.constant 9.99999974E-6 : f32
    %99 = vector.broadcast %cst_49 : f32 to vector<16x1xf32>
    %100 = arith.addf %96, %99 : vector<16x1xf32>
    %101 = math.rsqrt %100 : vector<16x1xf32>
    %102 = vector.broadcast %101 : vector<16x1xf32> to vector<16x32xf32>
    %103 = arith.mulf %98, %102 : vector<16x32xf32>
    %c0_50 = arith.constant 0 : index
    %c0_51 = arith.constant 0 : index
    %104 = vector.load %arg16[%c0_50, %c0_51] : memref<1x32xf32, #tpu.memory_space<vmem>>, vector<1x32xf32>
    %105 = vector.broadcast %104 : vector<1x32xf32> to vector<16x32xf32>
    %106 = arith.mulf %103, %105 : vector<16x32xf32>
    %c0_52 = arith.constant 0 : index
    %c0_53 = arith.constant 0 : index
    %107 = vector.load %arg17[%c0_52, %c0_53] : memref<1x32xf32, #tpu.memory_space<vmem>>, vector<1x32xf32>
    %108 = vector.broadcast %107 : vector<1x32xf32> to vector<16x32xf32>
    %109 = arith.addf %106, %108 : vector<16x32xf32>
    %cst_54 = arith.constant 0.000000e+00 : f32
    %110 = vector.broadcast %cst_54 : f32 to vector<16x32xf32>
    %111 = arith.cmpf oge, %109, %110 : vector<16x32xf32>
    %cst_55 = arith.constant 0.00999999977 : f32
    %112 = vector.broadcast %cst_55 : f32 to vector<16x32xf32>
    %113 = arith.mulf %112, %109 : vector<16x32xf32>
    %114 = arith.select %111, %109, %113 : vector<16x32xi1>, vector<16x32xf32>
    %c0_56 = arith.constant 0 : index
    %c0_57 = arith.constant 0 : index
    %115 = vector.load %arg18[%c0_56, %c0_57] : memref<16x32xf32, #tpu.memory_space<vmem>>, vector<16x32xf32>
    tpu.vector_store %arg18[%c0_56, %c0_57], %114 {strides = array<i32>} : memref<16x32xf32, #tpu.memory_space<vmem>>, vector<16x32xf32>,
    return
  }
  func.func @transform_0(%arg0: i32) -> (i32, i32) {
    %c0_i32 = arith.constant 0 : i32
    %c0_i32_0 = arith.constant 0 : i32
    return %arg0, %c0_i32 : i32, i32
  }
  func.func @transform_1(%arg0: i32) -> (i32, i32) {
    %c0_i32 = arith.constant 0 : i32
    %c0_i32_0 = arith.constant 0 : i32
    return %arg0, %c0_i32 : i32, i32
  }
  func.func @transform_2(%arg0: i32) -> (i32, i32) {
    %c0_i32 = arith.constant 0 : i32
    %c0_i32_0 = arith.constant 0 : i32
    return %arg0, %c0_i32 : i32, i32
  }
  func.func @transform_3(%arg0: i32) -> (i32, i32) {
    %c0_i32 = arith.constant 0 : i32
    %c0_i32_0 = arith.constant 0 : i32
    %c0_i32_1 = arith.constant 0 : i32
    return %c0_i32, %c0_i32_0 : i32, i32
  }
  func.func @transform_4(%arg0: i32) -> (i32, i32) {
    %c0_i32 = arith.constant 0 : i32
    %c0_i32_0 = arith.constant 0 : i32
    %c0_i32_1 = arith.constant 0 : i32
    return %c0_i32, %c0_i32_0 : i32, i32
  }
  func.func @transform_5(%arg0: i32) -> (i32, i32) {
    %c0_i32 = arith.constant 0 : i32
    %c0_i32_0 = arith.constant 0 : i32
    %c0_i32_1 = arith.constant 0 : i32
    return %c0_i32, %c0_i32_0 : i32, i32
  }
  func.func @transform_6(%arg0: i32) -> (i32, i32) {
    %c0_i32 = arith.constant 0 : i32
    %c0_i32_0 = arith.constant 0 : i32
    %c0_i32_1 = arith.constant 0 : i32
    return %c0_i32, %c0_i32_0 : i32, i32
  }
  func.func @transform_7(%arg0: i32) -> (i32, i32) {
    %c0_i32 = arith.constant 0 : i32
    %c0_i32_0 = arith.constant 0 : i32
    %c0_i32_1 = arith.constant 0 : i32
    return %c0_i32, %c0_i32_0 : i32, i32
  }
  func.func @transform_8(%arg0: i32) -> (i32, i32) {
    %c0_i32 = arith.constant 0 : i32
    %c0_i32_0 = arith.constant 0 : i32
    %c0_i32_1 = arith.constant 0 : i32
    return %c0_i32, %c0_i32_0 : i32, i32
  }
  func.func @transform_9(%arg0: i32) -> (i32, i32) {
    %c0_i32 = arith.constant 0 : i32
    %c0_i32_0 = arith.constant 0 : i32
    %c0_i32_1 = arith.constant 0 : i32
    return %c0_i32, %c0_i32_0 : i32, i32
  }
  func.func @transform_10(%arg0: i32) -> (i32, i32) {
    %c0_i32 = arith.constant 0 : i32
    %c0_i32_0 = arith.constant 0 : i32
    %c0_i32_1 = arith.constant 0 : i32
    return %c0_i32, %c0_i32_0 : i32, i32
  }
  func.func @transform_11(%arg0: i32) -> (i32, i32) {
    %c0_i32 = arith.constant 0 : i32
    %c0_i32_0 = arith.constant 0 : i32
    %c0_i32_1 = arith.constant 0 : i32
    return %c0_i32, %c0_i32_0 : i32, i32
  }
  func.func @transform_12(%arg0: i32) -> (i32, i32) {
    %c0_i32 = arith.constant 0 : i32
    %c0_i32_0 = arith.constant 0 : i32
    %c0_i32_1 = arith.constant 0 : i32
    return %c0_i32, %c0_i32_0 : i32, i32
  }
  func.func @transform_13(%arg0: i32) -> (i32, i32) {
    %c0_i32 = arith.constant 0 : i32
    %c0_i32_0 = arith.constant 0 : i32
    %c0_i32_1 = arith.constant 0 : i32
    return %c0_i32, %c0_i32_0 : i32, i32
  }
  func.func @transform_14(%arg0: i32) -> (i32, i32) {
    %c0_i32 = arith.constant 0 : i32
    %c0_i32_0 = arith.constant 0 : i32
    %c0_i32_1 = arith.constant 0 : i32
    return %c0_i32, %c0_i32_0 : i32, i32
  }
  func.func @transform_15(%arg0: i32) -> (i32, i32) {
    %c0_i32 = arith.constant 0 : i32
    %c0_i32_0 = arith.constant 0 : i32
    %c0_i32_1 = arith.constant 0 : i32
    return %c0_i32, %c0_i32_0 : i32, i32
  }
  func.func @transform_16(%arg0: i32) -> (i32, i32) {
    %c0_i32 = arith.constant 0 : i32
    %c0_i32_0 = arith.constant 0 : i32
    %c0_i32_1 = arith.constant 0 : i32
    return %c0_i32, %c0_i32_0 : i32, i32
  }
  func.func @transform_17(%arg0: i32) -> (i32, i32) {
    %c0_i32 = arith.constant 0 : i32
    %c0_i32_0 = arith.constant 0 : i32
    return %arg0, %c0_i32 : i32, i32
  }
}

</mosaic_0001>

<llo_original>
// kernel: gru_decoder_forward.5
$region0: #{gru_decoder_forward.5}
  #allocation0 [shape = 'u32[]', space=smem, size = 0x4, offset = 0x4, fixed_abs, tag = 'smem constant byte address 0x4 - core index']
  #allocation1 [shape = 'u32[144,128]{1,0:T(1,128)}', space=vmem, size = 0x12000, scoped, tag = 'internal scratch']
  %s0 = inlined_call_operand.vmem [shape: f32[16,32], index: 0, kind: input, shape index: {}]
  %s1 = inlined_call_operand.vmem [shape: f32[16,1], index: 1, kind: input, shape index: {}]
  %s2 = inlined_call_operand.vmem [shape: f32[16,1], index: 2, kind: input, shape index: {}]
  %s3 = inlined_call_operand.vmem [shape: f32[32,32], index: 3, kind: input, shape index: {}]
  %s4 = inlined_call_operand.vmem [shape: f32[1,32], index: 4, kind: input, shape index: {}]
  %s5 = inlined_call_operand.vmem [shape: f32[1,32], index: 5, kind: input, shape index: {}]
  %s6 = inlined_call_operand.vmem [shape: f32[1,32], index: 6, kind: input, shape index: {}]
  %s7 = inlined_call_operand.vmem [shape: f32[1,32], index: 7, kind: input, shape index: {}]
  %s8 = inlined_call_operand.vmem [shape: f32[1,32], index: 8, kind: input, shape index: {}]
  %s9 = inlined_call_operand.vmem [shape: f32[32,32], index: 9, kind: input, shape index: {}]
  %s10 = inlined_call_operand.vmem [shape: f32[1,32], index: 10, kind: input, shape index: {}]
  %s11 = inlined_call_operand.vmem [shape: f32[1,32], index: 11, kind: input, shape index: {}]
  %s12 = inlined_call_operand.vmem [shape: f32[1,32], index: 12, kind: input, shape index: {}]
  %s13 = inlined_call_operand.vmem [shape: f32[32,32], index: 13, kind: input, shape index: {}]
  %s14 = inlined_call_operand.vmem [shape: f32[1,32], index: 14, kind: input, shape index: {}]
  %s15 = inlined_call_operand.vmem [shape: f32[1,32], index: 15, kind: input, shape index: {}]
  %s16 = inlined_call_operand.vmem [shape: f32[1,32], index: 16, kind: input, shape index: {}]
  %s17 = inlined_call_operand.hbm [shape: f32[16,32], index: 17, kind: output, shape index: {}]
  %s18 = sld [smem:[#allocation0]]
  $region78: #{gru_decoder_forward.5} parent=0
    _
  %s20 = ssub.s32 1, %s18
  %s21 = scalar_select 0, %s20, %s18
  $region1: #{gru_decoder_forward.5} parent=0
    #allocation2 [shape = 'u8[8192]{0}', space=vmem, size = 0x2000, scoped, tag = 'output window, operand 0, single buffered']
    #allocation3 [shape = 's32[1]{0}', space=sflag, size = 0x4, scoped, tag = 'scoped memory for gru_decoder_forward.5']
    %22 = vsyncpa [#allocation3], 0
    // Predicated region
    $region2: #{gru_decoder_forward.5} parent=1 // pred_check
      _
    $region3: #{gru_decoder_forward.5} parent=1 // pred_check_branch
      %24 = sbr.rel (0) target = $region5
    $region4: #{gru_decoder_forward.5} parent=1 // pred_region
      _
    $region5: #{gru_decoder_forward.5} parent=1 // pred_fallthru
      _
    // Predicated region
    $region6: #{gru_decoder_forward.5} parent=1 // pred_check
      _
    $region7: #{gru_decoder_forward.5} parent=1 // pred_check_branch
      %26 = sbr.rel (0) target = $region9
    $region8: #{gru_decoder_forward.5} parent=1 // pred_region
      _
    $region9: #{gru_decoder_forward.5} parent=1 // pred_fallthru
      _
    // Predicated region
    $region10: #{gru_decoder_forward.5} parent=1 // pred_check
      _
    $region11: #{gru_decoder_forward.5} parent=1 // pred_check_branch
      %28 = sbr.rel (0) target = $region13
    $region12: #{gru_decoder_forward.5} parent=1 // pred_region
      _
    $region13: #{gru_decoder_forward.5} parent=1 // pred_fallthru
      _
    // Predicated region
    $region14: #{gru_decoder_forward.5} parent=1 // pred_check
      _
    $region15: #{gru_decoder_forward.5} parent=1 // pred_check_branch
      %30 = sbr.rel (0) target = $region17
    $region16: #{gru_decoder_forward.5} parent=1 // pred_region
      _
    $region17: #{gru_decoder_forward.5} parent=1 // pred_fallthru
      _
    // Predicated region
    $region18: #{gru_decoder_forward.5} parent=1 // pred_check
      _
    $region19: #{gru_decoder_forward.5} parent=1 // pred_check_branch
      %32 = sbr.rel (0) target = $region21
    $region20: #{gru_decoder_forward.5} parent=1 // pred_region
      _
    $region21: #{gru_decoder_forward.5} parent=1 // pred_fallthru
      _
    // Predicated region
    $region22: #{gru_decoder_forward.5} parent=1 // pred_check
      _
    $region23: #{gru_decoder_forward.5} parent=1 // pred_check_branch
      %34 = sbr.rel (0) target = $region25
    $region24: #{gru_decoder_forward.5} parent=1 // pred_region
      _
    $region25: #{gru_decoder_forward.5} parent=1 // pred_fallthru
      _
    // Predicated region
    $region26: #{gru_decoder_forward.5} parent=1 // pred_check
      _
    $region27: #{gru_decoder_forward.5} parent=1 // pred_check_branch
      %36 = sbr.rel (0) target = $region29
    $region28: #{gru_decoder_forward.5} parent=1 // pred_region
      _
    $region29: #{gru_decoder_forward.5} parent=1 // pred_fallthru
      _
    // Predicated region
    $region30: #{gru_decoder_forward.5} parent=1 // pred_check
      _
    $region31: #{gru_decoder_forward.5} parent=1 // pred_check_branch
      %38 = sbr.rel (0) target = $region33
    $region32: #{gru_decoder_forward.5} parent=1 // pred_region
      _
    $region33: #{gru_decoder_forward.5} parent=1 // pred_fallthru
      _
    // Predicated region
    $region34: #{gru_decoder_forward.5} parent=1 // pred_check
      _
    $region35: #{gru_decoder_forward.5} parent=1 // pred_check_branch
      %40 = sbr.rel (0) target = $region37
    $region36: #{gru_decoder_forward.5} parent=1 // pred_region
      _
    $region37: #{gru_decoder_forward.5} parent=1 // pred_fallthru
      _
    // Predicated region
    $region38: #{gru_decoder_forward.5} parent=1 // pred_check
      _
    $region39: #{gru_decoder_forward.5} parent=1 // pred_check_branch
      %42 = sbr.rel (0) target = $region41
    $region40: #{gru_decoder_forward.5} parent=1 // pred_region
      _
    $region41: #{gru_decoder_forward.5} parent=1 // pred_fallthru
      _
    // Predicated region
    $region42: #{gru_decoder_forward.5} parent=1 // pred_check
      _
    $region43: #{gru_decoder_forward.5} parent=1 // pred_check_branch
      %44 = sbr.rel (0) target = $region45
    $region44: #{gru_decoder_forward.5} parent=1 // pred_region
      _
    $region45: #{gru_decoder_forward.5} parent=1 // pred_fallthru
      _
    // Predicated region
    $region46: #{gru_decoder_forward.5} parent=1 // pred_check
      _
    $region47: #{gru_decoder_forward.5} parent=1 // pred_check_branch
      %46 = sbr.rel (0) target = $region49
    $region48: #{gru_decoder_forward.5} parent=1 // pred_region
      _
    $region49: #{gru_decoder_forward.5} parent=1 // pred_fallthru
      _
    // Predicated region
    $region50: #{gru_decoder_forward.5} parent=1 // pred_check
      _
    $region51: #{gru_decoder_forward.5} parent=1 // pred_check_branch
      %48 = sbr.rel (0) target = $region53
    $region52: #{gru_decoder_forward.5} parent=1 // pred_region
      _
    $region53: #{gru_decoder_forward.5} parent=1 // pred_fallthru
      _
    // Predicated region
    $region54: #{gru_decoder_forward.5} parent=1 // pred_check
      _
    $region55: #{gru_decoder_forward.5} parent=1 // pred_check_branch
      %50 = sbr.rel (0) target = $region57
    $region56: #{gru_decoder_forward.5} parent=1 // pred_region
      _
    $region57: #{gru_decoder_forward.5} parent=1 // pred_fallthru
      _
    // Predicated region
    $region58: #{gru_decoder_forward.5} parent=1 // pred_check
      _
    $region59: #{gru_decoder_forward.5} parent=1 // pred_check_branch
      %52 = sbr.rel (0) target = $region61
    $region60: #{gru_decoder_forward.5} parent=1 // pred_region
      _
    $region61: #{gru_decoder_forward.5} parent=1 // pred_fallthru
      _
    // Predicated region
    $region62: #{gru_decoder_forward.5} parent=1 // pred_check
      _
    $region63: #{gru_decoder_forward.5} parent=1 // pred_check_branch
      %54 = sbr.rel (0) target = $region65
    $region64: #{gru_decoder_forward.5} parent=1 // pred_region
      _
    $region65: #{gru_decoder_forward.5} parent=1 // pred_fallthru
      _
    // Predicated region
    $region66: #{gru_decoder_forward.5} parent=1 // pred_check
      _
    $region67: #{gru_decoder_forward.5} parent=1 // pred_check_branch
      %56 = sbr.rel (0) target = $region69
    $region68: #{gru_decoder_forward.5} parent=1 // pred_region
      _
    $region69: #{gru_decoder_forward.5} parent=1 // pred_fallthru
      _
    %v57 = vld [vmem:[%s0] sm:$0xff]
    %v58 = vld [vmem:[%s0 + $0x8] sm:$0xff]
    %v59 = vld [vmem:[%s1] sm:$0xff]
    %v60 = vld [vmem:[%s1 + $0x8] sm:$0xff]
    %v61 = vld [vmem:[%s2] sm:$0xff]
    %v62 = vld [vmem:[%s2 + $0x8] sm:$0xff]
    %v63 = vld [vmem:[%s3] sm:$0xff]
    %v64 = vld [vmem:[%s3 + $0x8] sm:$0xff]
    %v65 = vld [vmem:[%s3 + $0x10] sm:$0xff]
    %v66 = vld [vmem:[%s3 + $0x18] sm:$0xff]
    %v67 = vld [vmem:[%s4] sm:$0x1]
    %69 = vset.pattern.permute.xlu0 0
    %70 = vperm.xlu0 %69, %v59
    %v71 = vpop.permute.xlu0 %70
    %74 = vset.pattern.permute.xlu0 0
    %75 = vperm.xlu0 %74, %v60
    %v76 = vpop.permute.xlu0 %75
    %v79 = vlaneseq
    %v80 = vshrl.u32 %v79, 7
    %v81 = vsub.s32 0, %v80
    %v82 = vrot.slane %v67, %v81
    %v84 = vmul.f32 %v71, %v82
    %v85 = vmul.f32 %v76, %v82
    %vm86 = vcmask 261120
    %v88 = vsel %vm86, %v57, 0
    %v91 = vsel %vm86, %v58, 0
    %93 = vmatprep.subr.mxu0 0.0
    %94 = vmatpush1.msra.mxu0 %v63
    %95 = vmatprep.subr.mxu0 0.0
    %96 = vmatpush1.msra.mxu0 %v64
    %97 = vmatprep.subr.mxu0 0.0
    %98 = vmatpush1.msra.mxu0 %v65
    %99 = vmatprep.subr.mxu0 0.0
    %100 = vmatpush1.msra.mxu0 %v66
    %101 = vmatprep.subr.mxu0 0.0
    %102 = vmatpush1.msra.mxu0 0.0
    %103 = vmatprep.subr.mxu0 0.0
    %104 = vmatpush1.msra.mxu0 0.0
    %105 = vmatprep.subr.mxu0 0.0
    %106 = vmatpush1.msra.mxu0 0.0
    %107 = vmatprep.subr.mxu0 0.0
    %108 = vmatpush1.msra.mxu0 0.0
    %109 = vmatprep.subr.mxu0 0.0
    %110 = vmatpush1.msra.mxu0 0.0
    %111 = vmatprep.subr.mxu0 0.0
    %112 = vmatpush1.msra.mxu0 0.0
    %113 = vmatprep.subr.mxu0 0.0
    %114 = vmatpush1.msra.mxu0 0.0
    %115 = vmatprep.subr.mxu0 0.0
    %116 = vmatpush1.msra.mxu0 0.0
    %117 = vmatprep.subr.mxu0 0.0
    %118 = vmatpush1.msra.mxu0 0.0
    %119 = vmatprep.subr.mxu0 0.0
    %120 = vmatpush1.msra.mxu0 0.0
    %121 = vmatprep.subr.mxu0 0.0
    %122 = vmatpush1.msra.mxu0 0.0
    %123 = vmatprep.subr.mxu0 0.0
    %124 = vmatpush1.msra.mxu0 0.0
    %125 = vmatprep.subr.mxu0 0.0
    %126 = vmatpush1.msra.mxu0 0.0
    %127 = vmatprep.subr.mxu0 0.0
    %128 = vmatpush1.msra.mxu0 0.0
    %129 = vmatprep.subr.mxu0 0.0
    %130 = vmatpush1.msra.mxu0 0.0
    %131 = vmatprep.subr.mxu0 0.0
    %132 = vmatpush1.msra.mxu0 0.0
    %133 = vmatprep.subr.mxu0 0.0
    %134 = vmatpush1.msra.mxu0 0.0
    %135 = vmatprep.subr.mxu0 0.0
    %136 = vmatpush1.msra.mxu0 0.0
    %137 = vmatprep.subr.mxu0 0.0
    %138 = vmatpush1.msra.mxu0 0.0
    %139 = vmatprep.subr.mxu0 0.0
    %140 = vmatpush1.msra.mxu0 0.0
    %141 = vmatprep.subr.mxu0 0.0
    %142 = vmatpush1.msra.mxu0 0.0
    %143 = vmatprep.subr.mxu0 0.0
    %144 = vmatpush1.msra.mxu0 0.0
    %145 = vmatprep.subr.mxu0 0.0
    %146 = vmatpush1.msra.mxu0 0.0
    %147 = vmatprep.subr.mxu0 0.0
    %148 = vmatpush1.msra.mxu0 0.0
    %149 = vmatprep.subr.mxu0 0.0
    %150 = vmatpush1.msra.mxu0 0.0
    %151 = vmatprep.subr.mxu0 0.0
    %152 = vmatpush1.msra.mxu0 0.0
    %153 = vmatprep.subr.mxu0 0.0
    %154 = vmatpush1.msra.mxu0 0.0
    %155 = vmatprep.subr.mxu0 0.0
    %156 = vmatpush1.msra.mxu0 0.0
    %157 = vmatprep.mubr.f32.mxu0 0.0
    %158 = vmatmul.mubr.f32.gmra.mrb[0].mxu0 %v88
    %v159 = vpop.f32.mrb[0].mxu0
    %v160 = vadd.f32 %v84, %v159
    %v161 = vpop.f32.mrb[0].mxu0
    %162 = vmatprep.mubr.f32.mxu0 0.0
    %163 = vmatmul.mubr.f32.gmra.mrb[0].mxu0 %v91
    %v164 = vpop.f32.mrb[0].mxu0
    %v165 = vadd.f32 %v85, %v164
    %v166 = vpop.f32.mrb[0].mxu0
    %167 = vdwg.mxu0
    %v168 = vld [vmem:[%s5] sm:$0x1]
    %170 = vset.pattern.permute.xlu0 0
    %171 = vperm.xlu0 %170, %v61
    %v172 = vpop.permute.xlu0 %171
    %175 = vset.pattern.permute.xlu0 0
    %176 = vperm.xlu0 %175, %v62
    %v177 = vpop.permute.xlu0 %176
    %v180 = vlaneseq
    %v181 = vshrl.u32 %v180, 7
    %v182 = vsub.s32 0, %v181
    %v183 = vrot.slane %v168, %v182
    %v185 = vmul.f32 %v172, %v183
    %v186 = vmul.f32 %v177, %v183
    %v187 = vadd.f32 %v160, %v185
    %v188 = vadd.f32 %v165, %v186
    %v189 = vld [vmem:[%s6] sm:$0x1]
    %v191 = vlaneseq
    %v192 = vshrl.u32 %v191, 7
    %v193 = vsub.s32 0, %v192
    %v194 = vrot.slane %v189, %v193
    %v196 = vadd.f32 %v187, %v194
    %v197 = vadd.f32 %v188, %v194
    %v198 = vsel %vm86, %v196, 0.0
    %199 = vadd.xlane.f32.xlu0 %v198
    %v200 = vpop.xlane.xlu0 %199
    %v201 = vsel %vm86, %v197, 0.0
    %202 = vadd.xlane.f32.xlu0 %v201
    %v203 = vpop.xlane.xlu0 %202
    %v204 = vrcp.pop 32.0
    %v205 = vmul.f32 %v200, %v204
    %v206 = vmul.f32 %v203, %v204
    %v207 = vsub.f32 %v196, %v205
    %v208 = vsub.f32 %v197, %v206
    %v209 = vmul.f32 %v207, %v207
    %v210 = vmul.f32 %v208, %v208
    %v211 = vsel %vm86, %v209, 0.0
    %212 = vadd.xlane.f32.xlu0 %v211
    %v213 = vpop.xlane.xlu0 %212
    %v214 = vsel %vm86, %v210, 0.0
    %215 = vadd.xlane.f32.xlu0 %v214
    %v216 = vpop.xlane.xlu0 %215
    %v217 = vmul.f32 %v213, %v204
    %v218 = vmul.f32 %v216, %v204
    %v219 = vadd.f32 %v217, 1e-05
    %v220 = vadd.f32 %v218, 1e-05
    %v221 = vrsqrt.pop %v219
    %v222 = vrsqrt.pop %v220
    %v223 = vmul.f32 %v207, %v221
    %v224 = vmul.f32 %v208, %v222
    %v225 = vld [vmem:[%s7] sm:$0x1]
    %v227 = vlaneseq
    %v228 = vshrl.u32 %v227, 7
    %v229 = vsub.s32 0, %v228
    %v230 = vrot.slane %v225, %v229
    %v232 = vmul.f32 %v223, %v230
    %v233 = vmul.f32 %v224, %v230
    %v234 = vld [vmem:[%s8] sm:$0x1]
    %v236 = vlaneseq
    %v237 = vshrl.u32 %v236, 7
    %v238 = vsub.s32 0, %v237
    %v239 = vrot.slane %v234, %v238
    %v241 = vadd.f32 %v232, %v239
    %v242 = vadd.f32 %v233, %v239
    %vm243 = vcmp.ge.f32.partialorder %v241, 0.0
    %vm244 = vcmp.ge.f32.partialorder %v242, 0.0
    %v245 = vmul.f32 %v241, 0.01
    %v246 = vmul.f32 %v242, 0.01
    %v247 = vsel %vm243, %v241, %v245
    %v248 = vsel %vm244, %v242, %v246
    %v249 = vld [vmem:[%s9] sm:$0xff]
    %v250 = vld [vmem:[%s9 + $0x8] sm:$0xff]
    %v251 = vld [vmem:[%s9 + $0x10] sm:$0xff]
    %v252 = vld [vmem:[%s9 + $0x18] sm:$0xff]
    %v253 = vld [vmem:[%s10] sm:$0x1]
    %v255 = vlaneseq
    %v256 = vshrl.u32 %v255, 7
    %v257 = vsub.s32 0, %v256
    %v258 = vrot.slane %v253, %v257
    %v261 = vsel %vm86, %v247, 0
    %v264 = vsel %vm86, %v248, 0
    %266 = vmatprep.subr.mxu0 0.0
    %267 = vmatpush1.msra.mxu0 %v249
    %268 = vmatprep.subr.mxu0 0.0
    %269 = vmatpush1.msra.mxu0 %v250
    %270 = vmatprep.subr.mxu0 0.0
    %271 = vmatpush1.msra.mxu0 %v251
    %272 = vmatprep.subr.mxu0 0.0
    %273 = vmatpush1.msra.mxu0 %v252
    %274 = vmatprep.subr.mxu0 0.0
    %275 = vmatpush1.msra.mxu0 0.0
    %276 = vmatprep.subr.mxu0 0.0
    %277 = vmatpush1.msra.mxu0 0.0
    %278 = vmatprep.subr.mxu0 0.0
    %279 = vmatpush1.msra.mxu0 0.0
    %280 = vmatprep.subr.mxu0 0.0
    %281 = vmatpush1.msra.mxu0 0.0
    %282 = vmatprep.subr.mxu0 0.0
    %283 = vmatpush1.msra.mxu0 0.0
    %284 = vmatprep.subr.mxu0 0.0
    %285 = vmatpush1.msra.mxu0 0.0
    %286 = vmatprep.subr.mxu0 0.0
    %287 = vmatpush1.msra.mxu0 0.0
    %288 = vmatprep.subr.mxu0 0.0
    %289 = vmatpush1.msra.mxu0 0.0
    %290 = vmatprep.subr.mxu0 0.0
    %291 = vmatpush1.msra.mxu0 0.0
    %292 = vmatprep.subr.mxu0 0.0
    %293 = vmatpush1.msra.mxu0 0.0
    %294 = vmatprep.subr.mxu0 0.0
    %295 = vmatpush1.msra.mxu0 0.0
    %296 = vmatprep.subr.mxu0 0.0
    %297 = vmatpush1.msra.mxu0 0.0
    %298 = vmatprep.subr.mxu0 0.0
    %299 = vmatpush1.msra.mxu0 0.0
    %300 = vmatprep.subr.mxu0 0.0
    %301 = vmatpush1.msra.mxu0 0.0
    %302 = vmatprep.subr.mxu0 0.0
    %303 = vmatpush1.msra.mxu0 0.0
    %304 = vmatprep.subr.mxu0 0.0
    %305 = vmatpush1.msra.mxu0 0.0
    %306 = vmatprep.subr.mxu0 0.0
    %307 = vmatpush1.msra.mxu0 0.0
    %308 = vmatprep.subr.mxu0 0.0
    %309 = vmatpush1.msra.mxu0 0.0
    %310 = vmatprep.subr.mxu0 0.0
    %311 = vmatpush1.msra.mxu0 0.0
    %312 = vmatprep.subr.mxu0 0.0
    %313 = vmatpush1.msra.mxu0 0.0
    %314 = vmatprep.subr.mxu0 0.0
    %315 = vmatpush1.msra.mxu0 0.0
    %316 = vmatprep.subr.mxu0 0.0
    %317 = vmatpush1.msra.mxu0 0.0
    %318 = vmatprep.subr.mxu0 0.0
    %319 = vmatpush1.msra.mxu0 0.0
    %320 = vmatprep.subr.mxu0 0.0
    %321 = vmatpush1.msra.mxu0 0.0
    %322 = vmatprep.subr.mxu0 0.0
    %323 = vmatpush1.msra.mxu0 0.0
    %324 = vmatprep.subr.mxu0 0.0
    %325 = vmatpush1.msra.mxu0 0.0
    %326 = vmatprep.subr.mxu0 0.0
    %327 = vmatpush1.msra.mxu0 0.0
    %328 = vmatprep.subr.mxu0 0.0
    %329 = vmatpush1.msra.mxu0 0.0
    %330 = vmatprep.mubr.f32.mxu0 0.0
    %331 = vmatmul.mubr.f32.gmra.mrb[0].mxu0 %v261
    %v332 = vpop.f32.mrb[0].mxu0
    %v333 = vadd.f32 %v258, %v332
    %v334 = vpop.f32.mrb[0].mxu0
    %335 = vmatprep.mubr.f32.mxu0 0.0
    %336 = vmatmul.mubr.f32.gmra.mrb[0].mxu0 %v264
    %v337 = vpop.f32.mrb[0].mxu0
    %v338 = vadd.f32 %v258, %v337
    %v339 = vpop.f32.mrb[0].mxu0
    %340 = vdwg.mxu0
    %v341 = vsel %vm86, %v333, 0.0
    %342 = vadd.xlane.f32.xlu0 %v341
    %v343 = vpop.xlane.xlu0 %342
    %v344 = vsel %vm86, %v338, 0.0
    %345 = vadd.xlane.f32.xlu0 %v344
    %v346 = vpop.xlane.xlu0 %345
    %v347 = vmul.f32 %v343, %v204
    %v348 = vmul.f32 %v346, %v204
    %v349 = vsub.f32 %v333, %v347
    %v350 = vsub.f32 %v338, %v348
    %v351 = vmul.f32 %v349, %v349
    %v352 = vmul.f32 %v350, %v350
    %v353 = vsel %vm86, %v351, 0.0
    %354 = vadd.xlane.f32.xlu0 %v353
    %v355 = vpop.xlane.xlu0 %354
    %v356 = vsel %vm86, %v352, 0.0
    %357 = vadd.xlane.f32.xlu0 %v356
    %v358 = vpop.xlane.xlu0 %357
    %v359 = vmul.f32 %v355, %v204
    %v360 = vmul.f32 %v358, %v204
    %v361 = vadd.f32 %v359, 1e-05
    %v362 = vadd.f32 %v360, 1e-05
    %v363 = vrsqrt.pop %v361
    %v364 = vrsqrt.pop %v362
    %v365 = vmul.f32 %v349, %v363
    %v366 = vmul.f32 %v350, %v364
    %v367 = vld [vmem:[%s11] sm:$0x1]
    %v369 = vlaneseq
    %v370 = vshrl.u32 %v369, 7
    %v371 = vsub.s32 0, %v370
    %v372 = vrot.slane %v367, %v371
    %v374 = vmul.f32 %v365, %v372
    %v375 = vmul.f32 %v366, %v372
    %v376 = vld [vmem:[%s12] sm:$0x1]
    %v378 = vlaneseq
    %v379 = vshrl.u32 %v378, 7
    %v380 = vsub.s32 0, %v379
    %v381 = vrot.slane %v376, %v380
    %v383 = vadd.f32 %v374, %v381
    %v384 = vadd.f32 %v375, %v381
    %vm385 = vcmp.ge.f32.partialorder %v383, 0.0
    %vm386 = vcmp.ge.f32.partialorder %v384, 0.0
    %v387 = vmul.f32 %v383, 0.01
    %v388 = vmul.f32 %v384, 0.01
    %v389 = vsel %vm385, %v383, %v387
    %v390 = vsel %vm386, %v384, %v388
    %v391 = vld [vmem:[%s13] sm:$0xff]
    %v392 = vld [vmem:[%s13 + $0x8] sm:$0xff]
    %v393 = vld [vmem:[%s13 + $0x10] sm:$0xff]
    %v394 = vld [vmem:[%s13 + $0x18] sm:$0xff]
    %v395 = vld [vmem:[%s14] sm:$0x1]
    %v397 = vlaneseq
    %v398 = vshrl.u32 %v397, 7
    %v399 = vsub.s32 0, %v398
    %v400 = vrot.slane %v395, %v399
    %v403 = vsel %vm86, %v389, 0
    %v406 = vsel %vm86, %v390, 0
    %408 = vmatprep.subr.mxu0 0.0
    %409 = vmatpush1.msra.mxu0 %v391
    %410 = vmatprep.subr.mxu0 0.0
    %411 = vmatpush1.msra.mxu0 %v392
    %412 = vmatprep.subr.mxu0 0.0
    %413 = vmatpush1.msra.mxu0 %v393
    %414 = vmatprep.subr.mxu0 0.0
    %415 = vmatpush1.msra.mxu0 %v394
    %416 = vmatprep.subr.mxu0 0.0
    %417 = vmatpush1.msra.mxu0 0.0
    %418 = vmatprep.subr.mxu0 0.0
    %419 = vmatpush1.msra.mxu0 0.0
    %420 = vmatprep.subr.mxu0 0.0
    %421 = vmatpush1.msra.mxu0 0.0
    %422 = vmatprep.subr.mxu0 0.0
    %423 = vmatpush1.msra.mxu0 0.0
    %424 = vmatprep.subr.mxu0 0.0
    %425 = vmatpush1.msra.mxu0 0.0
    %426 = vmatprep.subr.mxu0 0.0
    %427 = vmatpush1.msra.mxu0 0.0
    %428 = vmatprep.subr.mxu0 0.0
    %429 = vmatpush1.msra.mxu0 0.0
    %430 = vmatprep.subr.mxu0 0.0
    %431 = vmatpush1.msra.mxu0 0.0
    %432 = vmatprep.subr.mxu0 0.0
    %433 = vmatpush1.msra.mxu0 0.0
    %434 = vmatprep.subr.mxu0 0.0
    %435 = vmatpush1.msra.mxu0 0.0
    %436 = vmatprep.subr.mxu0 0.0
    %437 = vmatpush1.msra.mxu0 0.0
    %438 = vmatprep.subr.mxu0 0.0
    %439 = vmatpush1.msra.mxu0 0.0
    %440 = vmatprep.subr.mxu0 0.0
    %441 = vmatpush1.msra.mxu0 0.0
    %442 = vmatprep.subr.mxu0 0.0
    %443 = vmatpush1.msra.mxu0 0.0
    %444 = vmatprep.subr.mxu0 0.0
    %445 = vmatpush1.msra.mxu0 0.0
    %446 = vmatprep.subr.mxu0 0.0
    %447 = vmatpush1.msra.mxu0 0.0
    %448 = vmatprep.subr.mxu0 0.0
    %449 = vmatpush1.msra.mxu0 0.0
    %450 = vmatprep.subr.mxu0 0.0
    %451 = vmatpush1.msra.mxu0 0.0
    %452 = vmatprep.subr.mxu0 0.0
    %453 = vmatpush1.msra.mxu0 0.0
    %454 = vmatprep.subr.mxu0 0.0
    %455 = vmatpush1.msra.mxu0 0.0
    %456 = vmatprep.subr.mxu0 0.0
    %457 = vmatpush1.msra.mxu0 0.0
    %458 = vmatprep.subr.mxu0 0.0
    %459 = vmatpush1.msra.mxu0 0.0
    %460 = vmatprep.subr.mxu0 0.0
    %461 = vmatpush1.msra.mxu0 0.0
    %462 = vmatprep.subr.mxu0 0.0
    %463 = vmatpush1.msra.mxu0 0.0
    %464 = vmatprep.subr.mxu0 0.0
    %465 = vmatpush1.msra.mxu0 0.0
    %466 = vmatprep.subr.mxu0 0.0
    %467 = vmatpush1.msra.mxu0 0.0
    %468 = vmatprep.subr.mxu0 0.0
    %469 = vmatpush1.msra.mxu0 0.0
    %470 = vmatprep.subr.mxu0 0.0
    %471 = vmatpush1.msra.mxu0 0.0
    %472 = vmatprep.mubr.f32.mxu0 0.0
    %473 = vmatmul.mubr.f32.gmra.mrb[0].mxu0 %v403
    %v474 = vpop.f32.mrb[0].mxu0
    %v475 = vadd.f32 %v400, %v474
    %v476 = vpop.f32.mrb[0].mxu0
    %477 = vmatprep.mubr.f32.mxu0 0.0
    %478 = vmatmul.mubr.f32.gmra.mrb[0].mxu0 %v406
    %v479 = vpop.f32.mrb[0].mxu0
    %v480 = vadd.f32 %v400, %v479
    %v481 = vpop.f32.mrb[0].mxu0
    %482 = vdwg.mxu0
    %v483 = vsel %vm86, %v475, 0.0
    %484 = vadd.xlane.f32.xlu0 %v483
    %v485 = vpop.xlane.xlu0 %484
    %v486 = vsel %vm86, %v480, 0.0
    %487 = vadd.xlane.f32.xlu0 %v486
    %v488 = vpop.xlane.xlu0 %487
    %v489 = vmul.f32 %v485, %v204
    %v490 = vmul.f32 %v488, %v204
    %v491 = vsub.f32 %v475, %v489
    %v492 = vsub.f32 %v480, %v490
    %v493 = vmul.f32 %v491, %v491
    %v494 = vmul.f32 %v492, %v492
    %v495 = vsel %vm86, %v493, 0.0
    %496 = vadd.xlane.f32.xlu0 %v495
    %v497 = vpop.xlane.xlu0 %496
    %v498 = vsel %vm86, %v494, 0.0
    %499 = vadd.xlane.f32.xlu0 %v498
    %v500 = vpop.xlane.xlu0 %499
    %v501 = vmul.f32 %v497, %v204
    %v502 = vmul.f32 %v500, %v204
    %v503 = vadd.f32 %v501, 1e-05
    %v504 = vadd.f32 %v502, 1e-05
    %v505 = vrsqrt.pop %v503
    %v506 = vrsqrt.pop %v504
    %v507 = vmul.f32 %v491, %v505
    %v508 = vmul.f32 %v492, %v506
    %v509 = vld [vmem:[%s15] sm:$0x1]
    %v511 = vlaneseq
    %v512 = vshrl.u32 %v511, 7
    %v513 = vsub.s32 0, %v512
    %v514 = vrot.slane %v509, %v513
    %v516 = vmul.f32 %v507, %v514
    %v517 = vmul.f32 %v508, %v514
    %v518 = vld [vmem:[%s16] sm:$0x1]
    %v520 = vlaneseq
    %v521 = vshrl.u32 %v520, 7
    %v522 = vsub.s32 0, %v521
    %v523 = vrot.slane %v518, %v522
    %v525 = vadd.f32 %v516, %v523
    %v526 = vadd.f32 %v517, %v523
    %vm527 = vcmp.ge.f32.partialorder %v525, 0.0
    %vm528 = vcmp.ge.f32.partialorder %v526, 0.0
    %v529 = vmul.f32 %v525, 0.01
    %v530 = vmul.f32 %v526, 0.01
    %v531 = vsel %vm527, %v525, %v529
    %v532 = vsel %vm528, %v526, %v530
    %533 = vst.msk [vmem:[#allocation2] sm:$0xff] %vm86, %v531
    %534 = vst.msk [vmem:[#allocation2 + $0x8] sm:$0xff] %vm86, %v532
    // Predicated region
    $region70: #{gru_decoder_forward.5} parent=1 // pred_check
      _
    $region71: #{gru_decoder_forward.5} parent=1 // pred_check_branch
      %536 = sbr.rel (0) target = $region73
    $region72: #{gru_decoder_forward.5} parent=1 // pred_region
      %s538 = ssub.s32 256, 256
      %539 = vsyncadd [#allocation3], %s538
      %s540 = sshll.u32 [#allocation2], 4
      %s541 = int_to_ptr.vmem [resolvable:$true] %s540
      %546 = dma.vmem_to_hbm [thread:$0]  %s541, 256, %s17, [#allocation3], 128, 128, 8
    $region73: #{gru_decoder_forward.5} parent=1 // pred_fallthru
      _
    // Predicated region
    $region74: #{gru_decoder_forward.5} parent=1 // pred_check
      _
    $region75: #{gru_decoder_forward.5} parent=1 // pred_check_branch
      %548 = sbr.rel (0) target = $region77
    $region76: #{gru_decoder_forward.5} parent=1 // pred_region
      %549 = dma.done [#allocation3], 256
    $region77: #{gru_decoder_forward.5} parent=1 // pred_fallthru
      _
    %550 = vsyncpa [#allocation3], 1

// kernel: gru_decoder_forward.3
$region0: #{gru_decoder_forward.3}
  #allocation0 [shape = 'u32[]', space=smem, size = 0x4, offset = 0x4, fixed_abs, tag = 'smem constant byte address 0x4 - core index']
  #allocation1 [shape = 'u32[144,128]{1,0:T(1,128)}', space=vmem, size = 0x12000, scoped, tag = 'internal scratch']
  %s0 = inlined_call_operand.smem [shape: u32[30], index: -1, kind: input, shape index: {}]
  %s1 = sld [smem:[%s0]]
  %s2 = scalar_lea.smem %s0, 1
  %s3 = sld [smem:[%s2]]
  %s4 = scalar_lea.smem %s0, 2
  %s5 = sld [smem:[%s4]]
  %s6 = scalar_lea.smem %s0, 3
  %s7 = sld [smem:[%s6]]
  %s8 = scalar_lea.smem %s0, 4
  %s9 = sld [smem:[%s8]]
  %s10 = scalar_lea.smem %s0, 5
  %s11 = sld [smem:[%s10]]
  %s12 = scalar_lea.smem %s0, 6
  %s13 = sld [smem:[%s12]]
  %s14 = scalar_lea.smem %s0, 7
  %s15 = sld [smem:[%s14]]
  %s16 = scalar_lea.smem %s0, 8
  %s17 = sld [smem:[%s16]]
  %s18 = scalar_lea.smem %s0, 9
  %s19 = sld [smem:[%s18]]
  %s20 = scalar_lea.smem %s0, 10
  %s21 = sld [smem:[%s20]]
  %s22 = scalar_lea.smem %s0, 11
  %s23 = sld [smem:[%s22]]
  %s24 = scalar_lea.smem %s0, 12
  %s25 = sld [smem:[%s24]]
  %s26 = scalar_lea.smem %s0, 13
  %s27 = sld [smem:[%s26]]
  %s28 = scalar_lea.smem %s0, 14
  %s29 = sld [smem:[%s28]]
  %s30 = scalar_lea.smem %s0, 15
  %s31 = sld [smem:[%s30]]
  %s32 = scalar_lea.smem %s0, 16
  %s33 = sld [smem:[%s32]]
  %s34 = scalar_lea.smem %s0, 17
  %s35 = sld [smem:[%s34]]
  %s36 = scalar_lea.smem %s0, 18
  %s37 = sld [smem:[%s36]]
  %s38 = scalar_lea.smem %s0, 19
  %s39 = sld [smem:[%s38]]
  %s40 = scalar_lea.smem %s0, 20
  %s41 = sld [smem:[%s40]]
  %s42 = scalar_lea.smem %s0, 21
  %s43 = sld [smem:[%s42]]
  %s44 = scalar_lea.smem %s0, 22
  %s45 = sld [smem:[%s44]]
  %s46 = scalar_lea.smem %s0, 23
  %s47 = sld [smem:[%s46]]
  %s48 = scalar_lea.smem %s0, 24
  %s49 = sld [smem:[%s48]]
  %s50 = scalar_lea.smem %s0, 25
  %s51 = sld [smem:[%s50]]
  %s52 = scalar_lea.smem %s0, 26
  %s53 = sld [smem:[%s52]]
  %s54 = scalar_lea.smem %s0, 27
  %s55 = sld [smem:[%s54]]
  %s56 = scalar_lea.smem %s0, 28
  %s57 = sld [smem:[%s56]]
  %s58 = scalar_lea.smem %s0, 29
  %s59 = sld [smem:[%s58]]
  %s60 = sld [smem:[#allocation0]]
  $region126: #{gru_decoder_forward.3} parent=0
    _
  %s62 = ssub.s32 1, %s60
  %s63 = scalar_select 0, %s62, %s60
  // Predicated region
  $region2: #{gru_decoder_forward.3} parent=0 // pred_check
    _
  $region3: #{gru_decoder_forward.3} parent=0 // pred_check_branch
    %65 = sbr.rel (0) target = $region5
  $region4: #{gru_decoder_forward.3} parent=0 // pred_region
    _
  $region5: #{gru_decoder_forward.3} parent=0 // pred_fallthru
    _
  // Predicated region
  $region6: #{gru_decoder_forward.3} parent=0 // pred_check
    _
  $region7: #{gru_decoder_forward.3} parent=0 // pred_check_branch
    %67 = sbr.rel (0) target = $region9
  $region8: #{gru_decoder_forward.3} parent=0 // pred_region
    _
  $region9: #{gru_decoder_forward.3} parent=0 // pred_fallthru
    _
  // Predicated region
  $region10: #{gru_decoder_forward.3} parent=0 // pred_check
    _
  $region11: #{gru_decoder_forward.3} parent=0 // pred_check_branch
    %69 = sbr.rel (0) target = $region13
  $region12: #{gru_decoder_forward.3} parent=0 // pred_region
    _
  $region13: #{gru_decoder_forward.3} parent=0 // pred_fallthru
    _
  // Predicated region
  $region14: #{gru_decoder_forward.3} parent=0 // pred_check
    _
  $region15: #{gru_decoder_forward.3} parent=0 // pred_check_branch
    %71 = sbr.rel (0) target = $region17
  $region16: #{gru_decoder_forward.3} parent=0 // pred_region
    _
  $region17: #{gru_decoder_forward.3} parent=0 // pred_fallthru
    _
  // Predicated region
  $region18: #{gru_decoder_forward.3} parent=0 // pred_check
    _
  $region19: #{gru_decoder_forward.3} parent=0 // pred_check_branch
    %73 = sbr.rel (0) target = $region21
  $region20: #{gru_decoder_forward.3} parent=0 // pred_region
    _
  $region21: #{gru_decoder_forward.3} parent=0 // pred_fallthru
    _
  // Predicated region
  $region22: #{gru_decoder_forward.3} parent=0 // pred_check
    _
  $region23: #{gru_decoder_forward.3} parent=0 // pred_check_branch
    %75 = sbr.rel (0) target = $region25
  $region24: #{gru_decoder_forward.3} parent=0 // pred_region
    _
  $region25: #{gru_decoder_forward.3} parent=0 // pred_fallthru
    _
  // Predicated region
  $region26: #{gru_decoder_forward.3} parent=0 // pred_check
    _
  $region27: #{gru_decoder_forward.3} parent=0 // pred_check_branch
    %77 = sbr.rel (0) target = $region29
  $region28: #{gru_decoder_forward.3} parent=0 // pred_region
    _
  $region29: #{gru_decoder_forward.3} parent=0 // pred_fallthru
    _
  // Predicated region
  $region30: #{gru_decoder_forward.3} parent=0 // pred_check
    _
  $region31: #{gru_decoder_forward.3} parent=0 // pred_check_branch
    %79 = sbr.rel (0) target = $region33
  $region32: #{gru_decoder_forward.3} parent=0 // pred_region
    _
  $region33: #{gru_decoder_forward.3} parent=0 // pred_fallthru
    _
  // Predicated region
  $region34: #{gru_decoder_forward.3} parent=0 // pred_check
    _
  $region35: #{gru_decoder_forward.3} parent=0 // pred_check_branch
    %81 = sbr.rel (0) target = $region37
  $region36: #{gru_decoder_forward.3} parent=0 // pred_region
    _
  $region37: #{gru_decoder_forward.3} parent=0 // pred_fallthru
    _
  // Predicated region
  $region38: #{gru_decoder_forward.3} parent=0 // pred_check
    _
  $region39: #{gru_decoder_forward.3} parent=0 // pred_check_branch
    %83 = sbr.rel (0) target = $region41
  $region40: #{gru_decoder_forward.3} parent=0 // pred_region
    _
  $region41: #{gru_decoder_forward.3} parent=0 // pred_fallthru
    _
  // Predicated region
  $region42: #{gru_decoder_forward.3} parent=0 // pred_check
    _
  $region43: #{gru_decoder_forward.3} parent=0 // pred_check_branch
    %85 = sbr.rel (0) target = $region45
  $region44: #{gru_decoder_forward.3} parent=0 // pred_region
    _
  $region45: #{gru_decoder_forward.3} parent=0 // pred_fallthru
    _
  // Predicated region
  $region46: #{gru_decoder_forward.3} parent=0 // pred_check
    _
  $region47: #{gru_decoder_forward.3} parent=0 // pred_check_branch
    %87 = sbr.rel (0) target = $region49
  $region48: #{gru_decoder_forward.3} parent=0 // pred_region
    _
  $region49: #{gru_decoder_forward.3} parent=0 // pred_fallthru
    _
  // Predicated region
  $region50: #{gru_decoder_forward.3} parent=0 // pred_check
    _
  $region51: #{gru_decoder_forward.3} parent=0 // pred_check_branch
    %89 = sbr.rel (0) target = $region53
  $region52: #{gru_decoder_forward.3} parent=0 // pred_region
    _
  $region53: #{gru_decoder_forward.3} parent=0 // pred_fallthru
    _
  // Predicated region
  $region54: #{gru_decoder_forward.3} parent=0 // pred_check
    _
  $region55: #{gru_decoder_forward.3} parent=0 // pred_check_branch
    %91 = sbr.rel (0) target = $region57
  $region56: #{gru_decoder_forward.3} parent=0 // pred_region
    _
  $region57: #{gru_decoder_forward.3} parent=0 // pred_fallthru
    _
  // Predicated region
  $region58: #{gru_decoder_forward.3} parent=0 // pred_check
    _
  $region59: #{gru_decoder_forward.3} parent=0 // pred_check_branch
    %93 = sbr.rel (0) target = $region61
  $region60: #{gru_decoder_forward.3} parent=0 // pred_region
    _
  $region61: #{gru_decoder_forward.3} parent=0 // pred_fallthru
    _
  // Predicated region
  $region62: #{gru_decoder_forward.3} parent=0 // pred_check
    _
  $region63: #{gru_decoder_forward.3} parent=0 // pred_check_branch
    %95 = sbr.rel (0) target = $region65
  $region64: #{gru_decoder_forward.3} parent=0 // pred_region
    _
  $region65: #{gru_decoder_forward.3} parent=0 // pred_fallthru
    _
  // Predicated region
  $region66: #{gru_decoder_forward.3} parent=0 // pred_check
    _
  $region67: #{gru_decoder_forward.3} parent=0 // pred_check_branch
    %97 = sbr.rel (0) target = $region69
  $region68: #{gru_decoder_forward.3} parent=0 // pred_region
    _
  $region69: #{gru_decoder_forward.3} parent=0 // pred_fallthru
    _
  // Predicated region
  $region70: #{gru_decoder_forward.3} parent=0 // pred_check
    _
  $region71: #{gru_decoder_forward.3} parent=0 // pred_check_branch
    %99 = sbr.rel (0) target = $region73
  $region72: #{gru_decoder_forward.3} parent=0 // pred_region
    _
  $region73: #{gru_decoder_forward.3} parent=0 // pred_fallthru
    _
  // Predicated region
  $region74: #{gru_decoder_forward.3} parent=0 // pred_check
    _
  $region75: #{gru_decoder_forward.3} parent=0 // pred_check_branch
    %101 = sbr.rel (0) target = $region77
  $region76: #{gru_decoder_forward.3} parent=0 // pred_region
    _
  $region77: #{gru_decoder_forward.3} parent=0 // pred_fallthru
    _
  // Predicated region
  $region78: #{gru_decoder_forward.3} parent=0 // pred_check
    _
  $region79: #{gru_decoder_forward.3} parent=0 // pred_check_branch
    %103 = sbr.rel (0) target = $region81
  $region80: #{gru_decoder_forward.3} parent=0 // pred_region
    _
  $region81: #{gru_decoder_forward.3} parent=0 // pred_fallthru
    _
  // Predicated region
  $region82: #{gru_decoder_forward.3} parent=0 // pred_check
    _
  $region83: #{gru_decoder_forward.3} parent=0 // pred_check_branch
    %105 = sbr.rel (0) target = $region85
  $region84: #{gru_decoder_forward.3} parent=0 // pred_region
    _
  $region85: #{gru_decoder_forward.3} parent=0 // pred_fallthru
    _
  // Predicated region
  $region86: #{gru_decoder_forward.3} parent=0 // pred_check
    _
  $region87: #{gru_decoder_forward.3} parent=0 // pred_check_branch
    %107 = sbr.rel (0) target = $region89
  $region88: #{gru_decoder_forward.3} parent=0 // pred_region
    _
  $region89: #{gru_decoder_forward.3} parent=0 // pred_fallthru
    _
  // Predicated region
  $region90: #{gru_decoder_forward.3} parent=0 // pred_check
    _
  $region91: #{gru_decoder_forward.3} parent=0 // pred_check_branch
    %109 = sbr.rel (0) target = $region93
  $region92: #{gru_decoder_forward.3} parent=0 // pred_region
    _
  $region93: #{gru_decoder_forward.3} parent=0 // pred_fallthru
    _
  // Predicated region
  $region94: #{gru_decoder_forward.3} parent=0 // pred_check
    _
  $region95: #{gru_decoder_forward.3} parent=0 // pred_check_branch
    %111 = sbr.rel (0) target = $region97
  $region96: #{gru_decoder_forward.3} parent=0 // pred_region
    _
  $region97: #{gru_decoder_forward.3} parent=0 // pred_fallthru
    _
  // Predicated region
  $region98: #{gru_decoder_forward.3} parent=0 // pred_check
    _
  $region99: #{gru_decoder_forward.3} parent=0 // pred_check_branch
    %113 = sbr.rel (0) target = $region101
  $region100: #{gru_decoder_forward.3} parent=0 // pred_region
    _
  $region101: #{gru_decoder_forward.3} parent=0 // pred_fallthru
    _
  // Predicated region
  $region102: #{gru_decoder_forward.3} parent=0 // pred_check
    _
  $region103: #{gru_decoder_forward.3} parent=0 // pred_check_branch
    %115 = sbr.rel (0) target = $region105
  $region104: #{gru_decoder_forward.3} parent=0 // pred_region
    _
  $region105: #{gru_decoder_forward.3} parent=0 // pred_fallthru
    _
  // Predicated region
  $region106: #{gru_decoder_forward.3} parent=0 // pred_check
    _
  $region107: #{gru_decoder_forward.3} parent=0 // pred_check_branch
    %117 = sbr.rel (0) target = $region109
  $region108: #{gru_decoder_forward.3} parent=0 // pred_region
    _
  $region109: #{gru_decoder_forward.3} parent=0 // pred_fallthru
    _
  // Predicated region
  $region110: #{gru_decoder_forward.3} parent=0 // pred_check
    _
  $region111: #{gru_decoder_forward.3} parent=0 // pred_check_branch
    %119 = sbr.rel (0) target = $region113
  $region112: #{gru_decoder_forward.3} parent=0 // pred_region
    _
  $region113: #{gru_decoder_forward.3} parent=0 // pred_fallthru
    _
  // Predicated region
  $region114: #{gru_decoder_forward.3} parent=0 // pred_check
    _
  $region115: #{gru_decoder_forward.3} parent=0 // pred_check_branch
    %121 = sbr.rel (0) target = $region117
  $region116: #{gru_decoder_forward.3} parent=0 // pred_region
    _
  $region117: #{gru_decoder_forward.3} parent=0 // pred_fallthru
    _
  %v122 = vld [vmem:[%s1] sm:$0xff]
  %v123 = vld [vmem:[%s1 + $0x8] sm:$0xff]
  %v124 = vld [vmem:[%s5] sm:$0x1]
  %126 = vset.pattern.permute.xlu0 0
  %127 = vperm.xlu0 %126, %v122
  %v128 = vpop.permute.xlu0 %127
  %131 = vset.pattern.permute.xlu0 0
  %132 = vperm.xlu0 %131, %v123
  %v133 = vpop.permute.xlu0 %132
  %v136 = vlaneseq
  %v137 = vshrl.u32 %v136, 7
  %v138 = vsub.s32 0, %v137
  %v139 = vrot.slane %v124, %v138
  %v141 = vmul.f32 %v128, %v139
  %v142 = vmul.f32 %v133, %v139
  %v143 = vld [vmem:[%s7] sm:$0x1]
  %v145 = vlaneseq
  %v146 = vshrl.u32 %v145, 7
  %v147 = vsub.s32 0, %v146
  %v148 = vrot.slane %v143, %v147
  %v150 = vadd.f32 %v141, %v148
  %v151 = vadd.f32 %v142, %v148
  %vm152 = vcmask 261120
  %v153 = vsel %vm152, %v150, 0.0
  %154 = vadd.xlane.f32.xlu0 %v153
  %v155 = vpop.xlane.xlu0 %154
  %v156 = vsel %vm152, %v151, 0.0
  %157 = vadd.xlane.f32.xlu0 %v156
  %v158 = vpop.xlane.xlu0 %157
  %v159 = vrcp.pop 32.0
  %v160 = vmul.f32 %v155, %v159
  %v161 = vmul.f32 %v158, %v159
  %v162 = vsub.f32 %v150, %v160
  %v163 = vsub.f32 %v151, %v161
  %v164 = vmul.f32 %v162, %v162
  %v165 = vmul.f32 %v163, %v163
  %v166 = vsel %vm152, %v164, 0.0
  %167 = vadd.xlane.f32.xlu0 %v166
  %v168 = vpop.xlane.xlu0 %167
  %v169 = vsel %vm152, %v165, 0.0
  %170 = vadd.xlane.f32.xlu0 %v169
  %v171 = vpop.xlane.xlu0 %170
  %v172 = vmul.f32 %v168, %v159
  %v173 = vmul.f32 %v171, %v159
  %v174 = vadd.f32 %v172, 1e-05
  %v175 = vadd.f32 %v173, 1e-05
  %v176 = vrsqrt.pop %v174
  %v177 = vrsqrt.pop %v175
  %v178 = vmul.f32 %v162, %v176
  %v179 = vmul.f32 %v163, %v177
  %v180 = vld [vmem:[%s9] sm:$0x1]
  %v182 = vlaneseq
  %v183 = vshrl.u32 %v182, 7
  %v184 = vsub.s32 0, %v183
  %v185 = vrot.slane %v180, %v184
  %v187 = vmul.f32 %v178, %v185
  %v188 = vmul.f32 %v179, %v185
  %v189 = vld [vmem:[%s11] sm:$0x1]
  %v191 = vlaneseq
  %v192 = vshrl.u32 %v191, 7
  %v193 = vsub.s32 0, %v192
  %v194 = vrot.slane %v189, %v193
  %v196 = vadd.f32 %v187, %v194
  %v197 = vadd.f32 %v188, %v194
  %vm198 = vcmp.ge.f32.partialorder %v196, 0.0
  %vm199 = vcmp.ge.f32.partialorder %v197, 0.0
  %v200 = vmul.f32 %v196, 0.01
  %v201 = vmul.f32 %v197, 0.01
  %v202 = vsel %vm198, %v196, %v200
  %v203 = vsel %vm199, %v197, %v201
  %v204 = vld [vmem:[%s13] sm:$0xff]
  %v205 = vld [vmem:[%s13 + $0x8] sm:$0xff]
  %v206 = vld [vmem:[%s13 + $0x10] sm:$0xff]
  %v207 = vld [vmem:[%s13 + $0x18] sm:$0xff]
  %v208 = vld [vmem:[%s15] sm:$0x1]
  %v210 = vlaneseq
  %v211 = vshrl.u32 %v210, 7
  %v212 = vsub.s32 0, %v211
  %v213 = vrot.slane %v208, %v212
  %v216 = vsel %vm152, %v202, 0
  %v219 = vsel %vm152, %v203, 0
  %221 = vmatprep.subr.mxu0 0.0
  %222 = vmatpush1.msra.mxu0 %v204
  %223 = vmatprep.subr.mxu0 0.0
  %224 = vmatpush1.msra.mxu0 %v205
  %225 = vmatprep.subr.mxu0 0.0
  %226 = vmatpush1.msra.mxu0 %v206
  %227 = vmatprep.subr.mxu0 0.0
  %228 = vmatpush1.msra.mxu0 %v207
  %229 = vmatprep.subr.mxu0 0.0
  %230 = vmatpush1.msra.mxu0 0.0
  %231 = vmatprep.subr.mxu0 0.0
  %232 = vmatpush1.msra.mxu0 0.0
  %233 = vmatprep.subr.mxu0 0.0
  %234 = vmatpush1.msra.mxu0 0.0
  %235 = vmatprep.subr.mxu0 0.0
  %236 = vmatpush1.msra.mxu0 0.0
  %237 = vmatprep.subr.mxu0 0.0
  %238 = vmatpush1.msra.mxu0 0.0
  %239 = vmatprep.subr.mxu0 0.0
  %240 = vmatpush1.msra.mxu0 0.0
  %241 = vmatprep.subr.mxu0 0.0
  %242 = vmatpush1.msra.mxu0 0.0
  %243 = vmatprep.subr.mxu0 0.0
  %244 = vmatpush1.msra.mxu0 0.0
  %245 = vmatprep.subr.mxu0 0.0
  %246 = vmatpush1.msra.mxu0 0.0
  %247 = vmatprep.subr.mxu0 0.0
  %248 = vmatpush1.msra.mxu0 0.0
  %249 = vmatprep.subr.mxu0 0.0
  %250 = vmatpush1.msra.mxu0 0.0
  %251 = vmatprep.subr.mxu0 0.0
  %252 = vmatpush1.msra.mxu0 0.0
  %253 = vmatprep.subr.mxu0 0.0
  %254 = vmatpush1.msra.mxu0 0.0
  %255 = vmatprep.subr.mxu0 0.0
  %256 = vmatpush1.msra.mxu0 0.0
  %257 = vmatprep.subr.mxu0 0.0
  %258 = vmatpush1.msra.mxu0 0.0
  %259 = vmatprep.subr.mxu0 0.0
  %260 = vmatpush1.msra.mxu0 0.0
  %261 = vmatprep.subr.mxu0 0.0
  %262 = vmatpush1.msra.mxu0 0.0
  %263 = vmatprep.subr.mxu0 0.0
  %264 = vmatpush1.msra.mxu0 0.0
  %265 = vmatprep.subr.mxu0 0.0
  %266 = vmatpush1.msra.mxu0 0.0
  %267 = vmatprep.subr.mxu0 0.0
  %268 = vmatpush1.msra.mxu0 0.0
  %269 = vmatprep.subr.mxu0 0.0
  %270 = vmatpush1.msra.mxu0 0.0
  %271 = vmatprep.subr.mxu0 0.0
  %272 = vmatpush1.msra.mxu0 0.0
  %273 = vmatprep.subr.mxu0 0.0
  %274 = vmatpush1.msra.mxu0 0.0
  %275 = vmatprep.subr.mxu0 0.0
  %276 = vmatpush1.msra.mxu0 0.0
  %277 = vmatprep.subr.mxu0 0.0
  %278 = vmatpush1.msra.mxu0 0.0
  %279 = vmatprep.subr.mxu0 0.0
  %280 = vmatpush1.msra.mxu0 0.0
  %281 = vmatprep.subr.mxu0 0.0
  %282 = vmatpush1.msra.mxu0 0.0
  %283 = vmatprep.subr.mxu0 0.0
  %284 = vmatpush1.msra.mxu0 0.0
  %285 = vmatprep.mubr.f32.mxu0 0.0
  %286 = vmatmul.mubr.f32.gmra.mrb[0].mxu0 %v216
  %v287 = vpop.f32.mrb[0].mxu0
  %v288 = vadd.f32 %v213, %v287
  %v289 = vpop.f32.mrb[0].mxu0
  %290 = vmatprep.mubr.f32.mxu0 0.0
  %291 = vmatmul.mubr.f32.gmra.mrb[0].mxu0 %v219
  %v292 = vpop.f32.mrb[0].mxu0
  %v293 = vadd.f32 %v213, %v292
  %v294 = vpop.f32.mrb[0].mxu0
  %295 = vdwg.mxu0
  %v296 = vsel %vm152, %v288, 0.0
  %297 = vadd.xlane.f32.xlu0 %v296
  %v298 = vpop.xlane.xlu0 %297
  %v299 = vsel %vm152, %v293, 0.0
  %300 = vadd.xlane.f32.xlu0 %v299
  %v301 = vpop.xlane.xlu0 %300
  %v302 = vmul.f32 %v298, %v159
  %v303 = vmul.f32 %v301, %v159
  %v304 = vsub.f32 %v288, %v302
  %v305 = vsub.f32 %v293, %v303
  %v306 = vmul.f32 %v304, %v304
  %v307 = vmul.f32 %v305, %v305
  %v308 = vsel %vm152, %v306, 0.0
  %309 = vadd.xlane.f32.xlu0 %v308
  %v310 = vpop.xlane.xlu0 %309
  %v311 = vsel %vm152, %v307, 0.0
  %312 = vadd.xlane.f32.xlu0 %v311
  %v313 = vpop.xlane.xlu0 %312
  %v314 = vmul.f32 %v310, %v159
  %v315 = vmul.f32 %v313, %v159
  %v316 = vadd.f32 %v314, 1e-05
  %v317 = vadd.f32 %v315, 1e-05
  %v318 = vrsqrt.pop %v316
  %v319 = vrsqrt.pop %v317
  %v320 = vmul.f32 %v304, %v318
  %v321 = vmul.f32 %v305, %v319
  %v322 = vld [vmem:[%s17] sm:$0x1]
  %v324 = vlaneseq
  %v325 = vshrl.u32 %v324, 7
  %v326 = vsub.s32 0, %v325
  %v327 = vrot.slane %v322, %v326
  %v329 = vmul.f32 %v320, %v327
  %v330 = vmul.f32 %v321, %v327
  %v331 = vld [vmem:[%s19] sm:$0x1]
  %v333 = vlaneseq
  %v334 = vshrl.u32 %v333, 7
  %v335 = vsub.s32 0, %v334
  %v336 = vrot.slane %v331, %v335
  %v338 = vadd.f32 %v329, %v336
  %v339 = vadd.f32 %v330, %v336
  %vm340 = vcmp.ge.f32.partialorder %v338, 0.0
  %vm341 = vcmp.ge.f32.partialorder %v339, 0.0
  %v342 = vmul.f32 %v338, 0.01
  %v343 = vmul.f32 %v339, 0.01
  %v344 = vsel %vm340, %v338, %v342
  %v345 = vsel %vm341, %v339, %v343
  %v346 = vld [vmem:[%s21] sm:$0xff]
  %v347 = vld [vmem:[%s21 + $0x8] sm:$0xff]
  %v348 = vld [vmem:[%s21 + $0x10] sm:$0xff]
  %v349 = vld [vmem:[%s21 + $0x18] sm:$0xff]
  %v350 = vld [vmem:[%s23] sm:$0x1]
  %v352 = vlaneseq
  %v353 = vshrl.u32 %v352, 7
  %v354 = vsub.s32 0, %v353
  %v355 = vrot.slane %v350, %v354
  %v358 = vsel %vm152, %v344, 0
  %v361 = vsel %vm152, %v345, 0
  %363 = vmatprep.subr.mxu0 0.0
  %364 = vmatpush1.msra.mxu0 %v346
  %365 = vmatprep.subr.mxu0 0.0
  %366 = vmatpush1.msra.mxu0 %v347
  %367 = vmatprep.subr.mxu0 0.0
  %368 = vmatpush1.msra.mxu0 %v348
  %369 = vmatprep.subr.mxu0 0.0
  %370 = vmatpush1.msra.mxu0 %v349
  %371 = vmatprep.subr.mxu0 0.0
  %372 = vmatpush1.msra.mxu0 0.0
  %373 = vmatprep.subr.mxu0 0.0
  %374 = vmatpush1.msra.mxu0 0.0
  %375 = vmatprep.subr.mxu0 0.0
  %376 = vmatpush1.msra.mxu0 0.0
  %377 = vmatprep.subr.mxu0 0.0
  %378 = vmatpush1.msra.mxu0 0.0
  %379 = vmatprep.subr.mxu0 0.0
  %380 = vmatpush1.msra.mxu0 0.0
  %381 = vmatprep.subr.mxu0 0.0
  %382 = vmatpush1.msra.mxu0 0.0
  %383 = vmatprep.subr.mxu0 0.0
  %384 = vmatpush1.msra.mxu0 0.0
  %385 = vmatprep.subr.mxu0 0.0
  %386 = vmatpush1.msra.mxu0 0.0
  %387 = vmatprep.subr.mxu0 0.0
  %388 = vmatpush1.msra.mxu0 0.0
  %389 = vmatprep.subr.mxu0 0.0
  %390 = vmatpush1.msra.mxu0 0.0
  %391 = vmatprep.subr.mxu0 0.0
  %392 = vmatpush1.msra.mxu0 0.0
  %393 = vmatprep.subr.mxu0 0.0
  %394 = vmatpush1.msra.mxu0 0.0
  %395 = vmatprep.subr.mxu0 0.0
  %396 = vmatpush1.msra.mxu0 0.0
  %397 = vmatprep.subr.mxu0 0.0
  %398 = vmatpush1.msra.mxu0 0.0
  %399 = vmatprep.subr.mxu0 0.0
  %400 = vmatpush1.msra.mxu0 0.0
  %401 = vmatprep.subr.mxu0 0.0
  %402 = vmatpush1.msra.mxu0 0.0
  %403 = vmatprep.subr.mxu0 0.0
  %404 = vmatpush1.msra.mxu0 0.0
  %405 = vmatprep.subr.mxu0 0.0
  %406 = vmatpush1.msra.mxu0 0.0
  %407 = vmatprep.subr.mxu0 0.0
  %408 = vmatpush1.msra.mxu0 0.0
  %409 = vmatprep.subr.mxu0 0.0
  %410 = vmatpush1.msra.mxu0 0.0
  %411 = vmatprep.subr.mxu0 0.0
  %412 = vmatpush1.msra.mxu0 0.0
  %413 = vmatprep.subr.mxu0 0.0
  %414 = vmatpush1.msra.mxu0 0.0
  %415 = vmatprep.subr.mxu0 0.0
  %416 = vmatpush1.msra.mxu0 0.0
  %417 = vmatprep.subr.mxu0 0.0
  %418 = vmatpush1.msra.mxu0 0.0
  %419 = vmatprep.subr.mxu0 0.0
  %420 = vmatpush1.msra.mxu0 0.0
  %421 = vmatprep.subr.mxu0 0.0
  %422 = vmatpush1.msra.mxu0 0.0
  %423 = vmatprep.subr.mxu0 0.0
  %424 = vmatpush1.msra.mxu0 0.0
  %425 = vmatprep.subr.mxu0 0.0
  %426 = vmatpush1.msra.mxu0 0.0
  %427 = vmatprep.mubr.f32.mxu0 0.0
  %428 = vmatmul.mubr.f32.gmra.mrb[0].mxu0 %v358
  %v429 = vpop.f32.mrb[0].mxu0
  %v430 = vadd.f32 %v355, %v429
  %v431 = vpop.f32.mrb[0].mxu0
  %432 = vmatprep.mubr.f32.mxu0 0.0
  %433 = vmatmul.mubr.f32.gmra.mrb[0].mxu0 %v361
  %v434 = vpop.f32.mrb[0].mxu0
  %v435 = vadd.f32 %v355, %v434
  %v436 = vpop.f32.mrb[0].mxu0
  %437 = vdwg.mxu0
  %v438 = vsel %vm152, %v430, 0.0
  %439 = vadd.xlane.f32.xlu0 %v438
  %v440 = vpop.xlane.xlu0 %439
  %v441 = vsel %vm152, %v435, 0.0
  %442 = vadd.xlane.f32.xlu0 %v441
  %v443 = vpop.xlane.xlu0 %442
  %v444 = vmul.f32 %v440, %v159
  %v445 = vmul.f32 %v443, %v159
  %v446 = vsub.f32 %v430, %v444
  %v447 = vsub.f32 %v435, %v445
  %v448 = vmul.f32 %v446, %v446
  %v449 = vmul.f32 %v447, %v447
  %v450 = vsel %vm152, %v448, 0.0
  %451 = vadd.xlane.f32.xlu0 %v450
  %v452 = vpop.xlane.xlu0 %451
  %v453 = vsel %vm152, %v449, 0.0
  %454 = vadd.xlane.f32.xlu0 %v453
  %v455 = vpop.xlane.xlu0 %454
  %v456 = vmul.f32 %v452, %v159
  %v457 = vmul.f32 %v455, %v159
  %v458 = vadd.f32 %v456, 1e-05
  %v459 = vadd.f32 %v457, 1e-05
  %v460 = vrsqrt.pop %v458
  %v461 = vrsqrt.pop %v459
  %v462 = vmul.f32 %v446, %v460
  %v463 = vmul.f32 %v447, %v461
  %v464 = vld [vmem:[%s25] sm:$0x1]
  %v466 = vlaneseq
  %v467 = vshrl.u32 %v466, 7
  %v468 = vsub.s32 0, %v467
  %v469 = vrot.slane %v464, %v468
  %v471 = vmul.f32 %v462, %v469
  %v472 = vmul.f32 %v463, %v469
  %v473 = vld [vmem:[%s27] sm:$0x1]
  %v475 = vlaneseq
  %v476 = vshrl.u32 %v475, 7
  %v477 = vsub.s32 0, %v476
  %v478 = vrot.slane %v473, %v477
  %v480 = vadd.f32 %v471, %v478
  %v481 = vadd.f32 %v472, %v478
  %vm482 = vcmp.ge.f32.partialorder %v480, 0.0
  %vm483 = vcmp.ge.f32.partialorder %v481, 0.0
  %v484 = vmul.f32 %v480, 0.01
  %v485 = vmul.f32 %v481, 0.01
  %v486 = vsel %vm482, %v480, %v484
  %v487 = vsel %vm483, %v481, %v485
  %v488 = vld [vmem:[%s3] sm:$0xff]
  %v489 = vld [vmem:[%s3 + $0x8] sm:$0xff]
  %v490 = vld [vmem:[%s29] sm:$0x1]
  %492 = vset.pattern.permute.xlu0 0
  %493 = vperm.xlu0 %492, %v488
  %v494 = vpop.permute.xlu0 %493
  %497 = vset.pattern.permute.xlu0 0
  %498 = vperm.xlu0 %497, %v489
  %v499 = vpop.permute.xlu0 %498
  %v502 = vlaneseq
  %v503 = vshrl.u32 %v502, 7
  %v504 = vsub.s32 0, %v503
  %v505 = vrot.slane %v490, %v504
  %v507 = vmul.f32 %v494, %v505
  %v508 = vmul.f32 %v499, %v505
  %v509 = vld [vmem:[%s31] sm:$0x1]
  %v511 = vlaneseq
  %v512 = vshrl.u32 %v511, 7
  %v513 = vsub.s32 0, %v512
  %v514 = vrot.slane %v509, %v513
  %v516 = vadd.f32 %v507, %v514
  %v517 = vadd.f32 %v508, %v514
  %v518 = vsel %vm152, %v516, 0.0
  %519 = vadd.xlane.f32.xlu0 %v518
  %v520 = vpop.xlane.xlu0 %519
  %v521 = vsel %vm152, %v517, 0.0
  %522 = vadd.xlane.f32.xlu0 %v521
  %v523 = vpop.xlane.xlu0 %522
  %v524 = vmul.f32 %v520, %v159
  %v525 = vmul.f32 %v523, %v159
  %v526 = vsub.f32 %v516, %v524
  %v527 = vsub.f32 %v517, %v525
  %v528 = vmul.f32 %v526, %v526
  %v529 = vmul.f32 %v527, %v527
  %v530 = vsel %vm152, %v528, 0.0
  %531 = vadd.xlane.f32.xlu0 %v530
  %v532 = vpop.xlane.xlu0 %531
  %v533 = vsel %vm152, %v529, 0.0
  %534 = vadd.xlane.f32.xlu0 %v533
  %v535 = vpop.xlane.xlu0 %534
  %v536 = vmul.f32 %v532, %v159
  %v537 = vmul.f32 %v535, %v159
  %v538 = vadd.f32 %v536, 1e-05
  %v539 = vadd.f32 %v537, 1e-05
  %v540 = vrsqrt.pop %v538
  %v541 = vrsqrt.pop %v539
  %v542 = vmul.f32 %v526, %v540
  %v543 = vmul.f32 %v527, %v541
  %v544 = vld [vmem:[%s33] sm:$0x1]
  %v546 = vlaneseq
  %v547 = vshrl.u32 %v546, 7
  %v548 = vsub.s32 0, %v547
  %v549 = vrot.slane %v544, %v548
  %v551 = vmul.f32 %v542, %v549
  %v552 = vmul.f32 %v543, %v549
  %v553 = vld [vmem:[%s35] sm:$0x1]
  %v555 = vlaneseq
  %v556 = vshrl.u32 %v555, 7
  %v557 = vsub.s32 0, %v556
  %v558 = vrot.slane %v553, %v557
  %v560 = vadd.f32 %v551, %v558
  %v561 = vadd.f32 %v552, %v558
  %vm562 = vcmp.ge.f32.partialorder %v560, 0.0
  %vm563 = vcmp.ge.f32.partialorder %v561, 0.0
  %v564 = vmul.f32 %v560, 0.01
  %v565 = vmul.f32 %v561, 0.01
  %v566 = vsel %vm562, %v560, %v564
  %v567 = vsel %vm563, %v561, %v565
  %v568 = vld [vmem:[%s37] sm:$0xff]
  %v569 = vld [vmem:[%s37 + $0x8] sm:$0xff]
  %v570 = vld [vmem:[%s37 + $0x10] sm:$0xff]
  %v571 = vld [vmem:[%s37 + $0x18] sm:$0xff]
  %v572 = vld [vmem:[%s39] sm:$0x1]
  %v574 = vlaneseq
  %v575 = vshrl.u32 %v574, 7
  %v576 = vsub.s32 0, %v575
  %v577 = vrot.slane %v572, %v576
  %v580 = vsel %vm152, %v566, 0
  %v583 = vsel %vm152, %v567, 0
  %585 = vmatprep.subr.mxu0 0.0
  %586 = vmatpush1.msra.mxu0 %v568
  %587 = vmatprep.subr.mxu0 0.0
  %588 = vmatpush1.msra.mxu0 %v569
  %589 = vmatprep.subr.mxu0 0.0
  %590 = vmatpush1.msra.mxu0 %v570
  %591 = vmatprep.subr.mxu0 0.0
  %592 = vmatpush1.msra.mxu0 %v571
  %593 = vmatprep.subr.mxu0 0.0
  %594 = vmatpush1.msra.mxu0 0.0
  %595 = vmatprep.subr.mxu0 0.0
  %596 = vmatpush1.msra.mxu0 0.0
  %597 = vmatprep.subr.mxu0 0.0
  %598 = vmatpush1.msra.mxu0 0.0
  %599 = vmatprep.subr.mxu0 0.0
  %600 = vmatpush1.msra.mxu0 0.0
  %601 = vmatprep.subr.mxu0 0.0
  %602 = vmatpush1.msra.mxu0 0.0
  %603 = vmatprep.subr.mxu0 0.0
  %604 = vmatpush1.msra.mxu0 0.0
  %605 = vmatprep.subr.mxu0 0.0
  %606 = vmatpush1.msra.mxu0 0.0
  %607 = vmatprep.subr.mxu0 0.0
  %608 = vmatpush1.msra.mxu0 0.0
  %609 = vmatprep.subr.mxu0 0.0
  %610 = vmatpush1.msra.mxu0 0.0
  %611 = vmatprep.subr.mxu0 0.0
  %612 = vmatpush1.msra.mxu0 0.0
  %613 = vmatprep.subr.mxu0 0.0
  %614 = vmatpush1.msra.mxu0 0.0
  %615 = vmatprep.subr.mxu0 0.0
  %616 = vmatpush1.msra.mxu0 0.0
  %617 = vmatprep.subr.mxu0 0.0
  %618 = vmatpush1.msra.mxu0 0.0
  %619 = vmatprep.subr.mxu0 0.0
  %620 = vmatpush1.msra.mxu0 0.0
  %621 = vmatprep.subr.mxu0 0.0
  %622 = vmatpush1.msra.mxu0 0.0
  %623 = vmatprep.subr.mxu0 0.0
  %624 = vmatpush1.msra.mxu0 0.0
  %625 = vmatprep.subr.mxu0 0.0
  %626 = vmatpush1.msra.mxu0 0.0
  %627 = vmatprep.subr.mxu0 0.0
  %628 = vmatpush1.msra.mxu0 0.0
  %629 = vmatprep.subr.mxu0 0.0
  %630 = vmatpush1.msra.mxu0 0.0
  %631 = vmatprep.subr.mxu0 0.0
  %632 = vmatpush1.msra.mxu0 0.0
  %633 = vmatprep.subr.mxu0 0.0
  %634 = vmatpush1.msra.mxu0 0.0
  %635 = vmatprep.subr.mxu0 0.0
  %636 = vmatpush1.msra.mxu0 0.0
  %637 = vmatprep.subr.mxu0 0.0
  %638 = vmatpush1.msra.mxu0 0.0
  %639 = vmatprep.subr.mxu0 0.0
  %640 = vmatpush1.msra.mxu0 0.0
  %641 = vmatprep.subr.mxu0 0.0
  %642 = vmatpush1.msra.mxu0 0.0
  %643 = vmatprep.subr.mxu0 0.0
  %644 = vmatpush1.msra.mxu0 0.0
  %645 = vmatprep.subr.mxu0 0.0
  %646 = vmatpush1.msra.mxu0 0.0
  %647 = vmatprep.subr.mxu0 0.0
  %648 = vmatpush1.msra.mxu0 0.0
  %649 = vmatprep.mubr.f32.mxu0 0.0
  %650 = vmatmul.mubr.f32.gmra.mrb[0].mxu0 %v580
  %v651 = vpop.f32.mrb[0].mxu0
  %v652 = vadd.f32 %v577, %v651
  %v653 = vpop.f32.mrb[0].mxu0
  %654 = vmatprep.mubr.f32.mxu0 0.0
  %655 = vmatmul.mubr.f32.gmra.mrb[0].mxu0 %v583
  %v656 = vpop.f32.mrb[0].mxu0
  %v657 = vadd.f32 %v577, %v656
  %v658 = vpop.f32.mrb[0].mxu0
  %659 = vdwg.mxu0
  %v660 = vsel %vm152, %v652, 0.0
  %661 = vadd.xlane.f32.xlu0 %v660
  %v662 = vpop.xlane.xlu0 %661
  %v663 = vsel %vm152, %v657, 0.0
  %664 = vadd.xlane.f32.xlu0 %v663
  %v665 = vpop.xlane.xlu0 %664
  %v666 = vmul.f32 %v662, %v159
  %v667 = vmul.f32 %v665, %v159
  %v668 = vsub.f32 %v652, %v666
  %v669 = vsub.f32 %v657, %v667
  %v670 = vmul.f32 %v668, %v668
  %v671 = vmul.f32 %v669, %v669
  %v672 = vsel %vm152, %v670, 0.0
  %673 = vadd.xlane.f32.xlu0 %v672
  %v674 = vpop.xlane.xlu0 %673
  %v675 = vsel %vm152, %v671, 0.0
  %676 = vadd.xlane.f32.xlu0 %v675
  %v677 = vpop.xlane.xlu0 %676
  %v678 = vmul.f32 %v674, %v159
  %v679 = vmul.f32 %v677, %v159
  %v680 = vadd.f32 %v678, 1e-05
  %v681 = vadd.f32 %v679, 1e-05
  %v682 = vrsqrt.pop %v680
  %v683 = vrsqrt.pop %v681
  %v684 = vmul.f32 %v668, %v682
  %v685 = vmul.f32 %v669, %v683
  %v686 = vld [vmem:[%s41] sm:$0x1]
  %v688 = vlaneseq
  %v689 = vshrl.u32 %v688, 7
  %v690 = vsub.s32 0, %v689
  %v691 = vrot.slane %v686, %v690
  %v693 = vmul.f32 %v684, %v691
  %v694 = vmul.f32 %v685, %v691
  %v695 = vld [vmem:[%s43] sm:$0x1]
  %v697 = vlaneseq
  %v698 = vshrl.u32 %v697, 7
  %v699 = vsub.s32 0, %v698
  %v700 = vrot.slane %v695, %v699
  %v702 = vadd.f32 %v693, %v700
  %v703 = vadd.f32 %v694, %v700
  %vm704 = vcmp.ge.f32.partialorder %v702, 0.0
  %vm705 = vcmp.ge.f32.partialorder %v703, 0.0
  %v706 = vmul.f32 %v702, 0.01
  %v707 = vmul.f32 %v703, 0.01
  %v708 = vsel %vm704, %v702, %v706
  %v709 = vsel %vm705, %v703, %v707
  %v710 = vld [vmem:[%s45] sm:$0xff]
  %v711 = vld [vmem:[%s45 + $0x8] sm:$0xff]
  %v712 = vld [vmem:[%s45 + $0x10] sm:$0xff]
  %v713 = vld [vmem:[%s45 + $0x18] sm:$0xff]
  %v714 = vld [vmem:[%s47] sm:$0x1]
  %v716 = vlaneseq
  %v717 = vshrl.u32 %v716, 7
  %v718 = vsub.s32 0, %v717
  %v719 = vrot.slane %v714, %v718
  %v722 = vsel %vm152, %v708, 0
  %v725 = vsel %vm152, %v709, 0
  %727 = vmatprep.subr.mxu0 0.0
  %728 = vmatpush1.msra.mxu0 %v710
  %729 = vmatprep.subr.mxu0 0.0
  %730 = vmatpush1.msra.mxu0 %v711
  %731 = vmatprep.subr.mxu0 0.0
  %732 = vmatpush1.msra.mxu0 %v712
  %733 = vmatprep.subr.mxu0 0.0
  %734 = vmatpush1.msra.mxu0 %v713
  %735 = vmatprep.subr.mxu0 0.0
  %736 = vmatpush1.msra.mxu0 0.0
  %737 = vmatprep.subr.mxu0 0.0
  %738 = vmatpush1.msra.mxu0 0.0
  %739 = vmatprep.subr.mxu0 0.0
  %740 = vmatpush1.msra.mxu0 0.0
  %741 = vmatprep.subr.mxu0 0.0
  %742 = vmatpush1.msra.mxu0 0.0
  %743 = vmatprep.subr.mxu0 0.0
  %744 = vmatpush1.msra.mxu0 0.0
  %745 = vmatprep.subr.mxu0 0.0
  %746 = vmatpush1.msra.mxu0 0.0
  %747 = vmatprep.subr.mxu0 0.0
  %748 = vmatpush1.msra.mxu0 0.0
  %749 = vmatprep.subr.mxu0 0.0
  %750 = vmatpush1.msra.mxu0 0.0
  %751 = vmatprep.subr.mxu0 0.0
  %752 = vmatpush1.msra.mxu0 0.0
  %753 = vmatprep.subr.mxu0 0.0
  %754 = vmatpush1.msra.mxu0 0.0
  %755 = vmatprep.subr.mxu0 0.0
  %756 = vmatpush1.msra.mxu0 0.0
  %757 = vmatprep.subr.mxu0 0.0
  %758 = vmatpush1.msra.mxu0 0.0
  %759 = vmatprep.subr.mxu0 0.0
  %760 = vmatpush1.msra.mxu0 0.0
  %761 = vmatprep.subr.mxu0 0.0
  %762 = vmatpush1.msra.mxu0 0.0
  %763 = vmatprep.subr.mxu0 0.0
  %764 = vmatpush1.msra.mxu0 0.0
  %765 = vmatprep.subr.mxu0 0.0
  %766 = vmatpush1.msra.mxu0 0.0
  %767 = vmatprep.subr.mxu0 0.0
  %768 = vmatpush1.msra.mxu0 0.0
  %769 = vmatprep.subr.mxu0 0.0
  %770 = vmatpush1.msra.mxu0 0.0
  %771 = vmatprep.subr.mxu0 0.0
  %772 = vmatpush1.msra.mxu0 0.0
  %773 = vmatprep.subr.mxu0 0.0
  %774 = vmatpush1.msra.mxu0 0.0
  %775 = vmatprep.subr.mxu0 0.0
  %776 = vmatpush1.msra.mxu0 0.0
  %777 = vmatprep.subr.mxu0 0.0
  %778 = vmatpush1.msra.mxu0 0.0
  %779 = vmatprep.subr.mxu0 0.0
  %780 = vmatpush1.msra.mxu0 0.0
  %781 = vmatprep.subr.mxu0 0.0
  %782 = vmatpush1.msra.mxu0 0.0
  %783 = vmatprep.subr.mxu0 0.0
  %784 = vmatpush1.msra.mxu0 0.0
  %785 = vmatprep.subr.mxu0 0.0
  %786 = vmatpush1.msra.mxu0 0.0
  %787 = vmatprep.subr.mxu0 0.0
  %788 = vmatpush1.msra.mxu0 0.0
  %789 = vmatprep.subr.mxu0 0.0
  %790 = vmatpush1.msra.mxu0 0.0
  %791 = vmatprep.mubr.f32.mxu0 0.0
  %792 = vmatmul.mubr.f32.gmra.mrb[0].mxu0 %v722
  %v793 = vpop.f32.mrb[0].mxu0
  %v794 = vadd.f32 %v719, %v793
  %v795 = vpop.f32.mrb[0].mxu0
  %796 = vmatprep.mubr.f32.mxu0 0.0
  %797 = vmatmul.mubr.f32.gmra.mrb[0].mxu0 %v725
  %v798 = vpop.f32.mrb[0].mxu0
  %v799 = vadd.f32 %v719, %v798
  %v800 = vpop.f32.mrb[0].mxu0
  %801 = vdwg.mxu0
  %v802 = vsel %vm152, %v794, 0.0
  %803 = vadd.xlane.f32.xlu0 %v802
  %v804 = vpop.xlane.xlu0 %803
  %v805 = vsel %vm152, %v799, 0.0
  %806 = vadd.xlane.f32.xlu0 %v805
  %v807 = vpop.xlane.xlu0 %806
  %v808 = vmul.f32 %v804, %v159
  %v809 = vmul.f32 %v807, %v159
  %v810 = vsub.f32 %v794, %v808
  %v811 = vsub.f32 %v799, %v809
  %v812 = vmul.f32 %v810, %v810
  %v813 = vmul.f32 %v811, %v811
  %v814 = vsel %vm152, %v812, 0.0
  %815 = vadd.xlane.f32.xlu0 %v814
  %v816 = vpop.xlane.xlu0 %815
  %v817 = vsel %vm152, %v813, 0.0
  %818 = vadd.xlane.f32.xlu0 %v817
  %v819 = vpop.xlane.xlu0 %818
  %v820 = vmul.f32 %v816, %v159
  %v821 = vmul.f32 %v819, %v159
  %v822 = vadd.f32 %v820, 1e-05
  %v823 = vadd.f32 %v821, 1e-05
  %v824 = vrsqrt.pop %v822
  %v825 = vrsqrt.pop %v823
  %v826 = vmul.f32 %v810, %v824
  %v827 = vmul.f32 %v811, %v825
  %v828 = vld [vmem:[%s49] sm:$0x1]
  %v830 = vlaneseq
  %v831 = vshrl.u32 %v830, 7
  %v832 = vsub.s32 0, %v831
  %v833 = vrot.slane %v828, %v832
  %v835 = vmul.f32 %v826, %v833
  %v836 = vmul.f32 %v827, %v833
  %v837 = vld [vmem:[%s51] sm:$0x1]
  %v839 = vlaneseq
  %v840 = vshrl.u32 %v839, 7
  %v841 = vsub.s32 0, %v840
  %v842 = vrot.slane %v837, %v841
  %v844 = vadd.f32 %v835, %v842
  %v845 = vadd.f32 %v836, %v842
  %vm846 = vcmp.ge.f32.partialorder %v844, 0.0
  %vm847 = vcmp.ge.f32.partialorder %v845, 0.0
  %v848 = vmul.f32 %v844, 0.01
  %v849 = vmul.f32 %v845, 0.01
  %v850 = vsel %vm846, %v844, %v848
  %v851 = vsel %vm847, %v845, %v849
  %v852 = vld [vmem:[%s53] sm:$0xff]
  %v853 = vld [vmem:[%s53 + $0x8] sm:$0xff]
  %v854 = vld [vmem:[%s53 + $0x10] sm:$0xff]
  %v855 = vld [vmem:[%s53 + $0x18] sm:$0xff]
  %v856 = vld [vmem:[%s55] sm:$0xff]
  %v857 = vld [vmem:[%s55 + $0x8] sm:$0xff]
  %v858 = vld [vmem:[%s55 + $0x10] sm:$0xff]
  %v859 = vld [vmem:[%s55 + $0x18] sm:$0xff]
  %v861 = vsel %vm152, %v850, 0
  %v864 = vsel %vm152, %v851, 0
  %866 = vmatprep.subr.mxu0 0.0
  %867 = vmatpush1.msra.mxu0 %v856
  %868 = vmatprep.subr.mxu0 0.0
  %869 = vmatpush1.msra.mxu0 %v857
  %870 = vmatprep.subr.mxu0 0.0
  %871 = vmatpush1.msra.mxu0 %v858
  %872 = vmatprep.subr.mxu0 0.0
  %873 = vmatpush1.msra.mxu0 %v859
  %874 = vmatprep.subr.mxu0 0.0
  %875 = vmatpush1.msra.mxu0 0.0
  %876 = vmatprep.subr.mxu0 0.0
  %877 = vmatpush1.msra.mxu0 0.0
  %878 = vmatprep.subr.mxu0 0.0
  %879 = vmatpush1.msra.mxu0 0.0
  %880 = vmatprep.subr.mxu0 0.0
  %881 = vmatpush1.msra.mxu0 0.0
  %882 = vmatprep.subr.mxu0 0.0
  %883 = vmatpush1.msra.mxu0 0.0
  %884 = vmatprep.subr.mxu0 0.0
  %885 = vmatpush1.msra.mxu0 0.0
  %886 = vmatprep.subr.mxu0 0.0
  %887 = vmatpush1.msra.mxu0 0.0
  %888 = vmatprep.subr.mxu0 0.0
  %889 = vmatpush1.msra.mxu0 0.0
  %890 = vmatprep.subr.mxu0 0.0
  %891 = vmatpush1.msra.mxu0 0.0
  %892 = vmatprep.subr.mxu0 0.0
  %893 = vmatpush1.msra.mxu0 0.0
  %894 = vmatprep.subr.mxu0 0.0
  %895 = vmatpush1.msra.mxu0 0.0
  %896 = vmatprep.subr.mxu0 0.0
  %897 = vmatpush1.msra.mxu0 0.0
  %898 = vmatprep.subr.mxu0 0.0
  %899 = vmatpush1.msra.mxu0 0.0
  %900 = vmatprep.subr.mxu0 0.0
  %901 = vmatpush1.msra.mxu0 0.0
  %902 = vmatprep.subr.mxu0 0.0
  %903 = vmatpush1.msra.mxu0 0.0
  %904 = vmatprep.subr.mxu0 0.0
  %905 = vmatpush1.msra.mxu0 0.0
  %906 = vmatprep.subr.mxu0 0.0
  %907 = vmatpush1.msra.mxu0 0.0
  %908 = vmatprep.subr.mxu0 0.0
  %909 = vmatpush1.msra.mxu0 0.0
  %910 = vmatprep.subr.mxu0 0.0
  %911 = vmatpush1.msra.mxu0 0.0
  %912 = vmatprep.subr.mxu0 0.0
  %913 = vmatpush1.msra.mxu0 0.0
  %914 = vmatprep.subr.mxu0 0.0
  %915 = vmatpush1.msra.mxu0 0.0
  %916 = vmatprep.subr.mxu0 0.0
  %917 = vmatpush1.msra.mxu0 0.0
  %918 = vmatprep.subr.mxu0 0.0
  %919 = vmatpush1.msra.mxu0 0.0
  %920 = vmatprep.subr.mxu0 0.0
  %921 = vmatpush1.msra.mxu0 0.0
  %922 = vmatprep.subr.mxu0 0.0
  %923 = vmatpush1.msra.mxu0 0.0
  %924 = vmatprep.subr.mxu0 0.0
  %925 = vmatpush1.msra.mxu0 0.0
  %926 = vmatprep.subr.mxu0 0.0
  %927 = vmatpush1.msra.mxu0 0.0
  %928 = vmatprep.subr.mxu0 0.0
  %929 = vmatpush1.msra.mxu0 0.0
  %930 = vmatprep.mubr.f32.mxu0 0.0
  %931 = vmatmul.mubr.f32.gmra.mrb[0].mxu0 %v861
  %v932 = vpop.f32.mrb[0].mxu0
  %v933 = vadd.f32 0.0, %v932
  %v934 = vpop.f32.mrb[0].mxu0
  %935 = vmatprep.mubr.f32.mxu0 0.0
  %936 = vmatmul.mubr.f32.gmra.mrb[0].mxu0 %v864
  %v937 = vpop.f32.mrb[0].mxu0
  %v938 = vadd.f32 0.0, %v937
  %v939 = vpop.f32.mrb[0].mxu0
  %940 = vdwg.mxu0
  %v942 = vsel %vm152, %v486, 0
  %v945 = vsel %vm152, %v487, 0
  %947 = vmatprep.subr.mxu0 0.0
  %948 = vmatpush1.msra.mxu0 %v852
  %949 = vmatprep.subr.mxu0 0.0
  %950 = vmatpush1.msra.mxu0 %v853
  %951 = vmatprep.subr.mxu0 0.0
  %952 = vmatpush1.msra.mxu0 %v854
  %953 = vmatprep.subr.mxu0 0.0
  %954 = vmatpush1.msra.mxu0 %v855
  %955 = vmatprep.subr.mxu0 0.0
  %956 = vmatpush1.msra.mxu0 0.0
  %957 = vmatprep.subr.mxu0 0.0
  %958 = vmatpush1.msra.mxu0 0.0
  %959 = vmatprep.subr.mxu0 0.0
  %960 = vmatpush1.msra.mxu0 0.0
  %961 = vmatprep.subr.mxu0 0.0
  %962 = vmatpush1.msra.mxu0 0.0
  %963 = vmatprep.subr.mxu0 0.0
  %964 = vmatpush1.msra.mxu0 0.0
  %965 = vmatprep.subr.mxu0 0.0
  %966 = vmatpush1.msra.mxu0 0.0
  %967 = vmatprep.subr.mxu0 0.0
  %968 = vmatpush1.msra.mxu0 0.0
  %969 = vmatprep.subr.mxu0 0.0
  %970 = vmatpush1.msra.mxu0 0.0
  %971 = vmatprep.subr.mxu0 0.0
  %972 = vmatpush1.msra.mxu0 0.0
  %973 = vmatprep.subr.mxu0 0.0
  %974 = vmatpush1.msra.mxu0 0.0
  %975 = vmatprep.subr.mxu0 0.0
  %976 = vmatpush1.msra.mxu0 0.0
  %977 = vmatprep.subr.mxu0 0.0
  %978 = vmatpush1.msra.mxu0 0.0
  %979 = vmatprep.subr.mxu0 0.0
  %980 = vmatpush1.msra.mxu0 0.0
  %981 = vmatprep.subr.mxu0 0.0
  %982 = vmatpush1.msra.mxu0 0.0
  %983 = vmatprep.subr.mxu0 0.0
  %984 = vmatpush1.msra.mxu0 0.0
  %985 = vmatprep.subr.mxu0 0.0
  %986 = vmatpush1.msra.mxu0 0.0
  %987 = vmatprep.subr.mxu0 0.0
  %988 = vmatpush1.msra.mxu0 0.0
  %989 = vmatprep.subr.mxu0 0.0
  %990 = vmatpush1.msra.mxu0 0.0
  %991 = vmatprep.subr.mxu0 0.0
  %992 = vmatpush1.msra.mxu0 0.0
  %993 = vmatprep.subr.mxu0 0.0
  %994 = vmatpush1.msra.mxu0 0.0
  %995 = vmatprep.subr.mxu0 0.0
  %996 = vmatpush1.msra.mxu0 0.0
  %997 = vmatprep.subr.mxu0 0.0
  %998 = vmatpush1.msra.mxu0 0.0
  %999 = vmatprep.subr.mxu0 0.0
  %1000 = vmatpush1.msra.mxu0 0.0
  %1001 = vmatprep.subr.mxu0 0.0
  %1002 = vmatpush1.msra.mxu0 0.0
  %1003 = vmatprep.subr.mxu0 0.0
  %1004 = vmatpush1.msra.mxu0 0.0
  %1005 = vmatprep.subr.mxu0 0.0
  %1006 = vmatpush1.msra.mxu0 0.0
  %1007 = vmatprep.subr.mxu0 0.0
  %1008 = vmatpush1.msra.mxu0 0.0
  %1009 = vmatprep.subr.mxu0 0.0
  %1010 = vmatpush1.msra.mxu0 0.0
  %1011 = vmatprep.mubr.f32.mxu0 0.0
  %1012 = vmatmul.mubr.f32.gmra.mrb[0].mxu0 %v942
  %v1013 = vpop.f32.mrb[0].mxu0
  %v1014 = vadd.f32 %v933, %v1013
  %v1015 = vpop.f32.mrb[0].mxu0
  %1016 = vmatprep.mubr.f32.mxu0 0.0
  %1017 = vmatmul.mubr.f32.gmra.mrb[0].mxu0 %v945
  %v1018 = vpop.f32.mrb[0].mxu0
  %v1019 = vadd.f32 %v938, %v1018
  %v1020 = vpop.f32.mrb[0].mxu0
  %1021 = vdwg.mxu0
  %v1022 = vld [vmem:[%s57] sm:$0x1]
  %v1024 = vlaneseq
  %v1025 = vshrl.u32 %v1024, 7
  %v1026 = vsub.s32 0, %v1025
  %v1027 = vrot.slane %v1022, %v1026
  %v1029 = vadd.f32 %v1014, %v1027
  %v1030 = vadd.f32 %v1019, %v1027
  %vm1031 = vcmask 785408
  %1032 = vst.msk [vmem:[%s59] sm:$0xff] %vm1031, %v1029
  %1033 = vst.msk [vmem:[%s59 + $0x8] sm:$0xff] %vm1031, %v1030
  // Predicated region
  $region118: #{gru_decoder_forward.3} parent=0 // pred_check
    _
  $region119: #{gru_decoder_forward.3} parent=0 // pred_check_branch
    %1035 = sbr.rel (0) target = $region121
  $region120: #{gru_decoder_forward.3} parent=0 // pred_region
    _
  $region121: #{gru_decoder_forward.3} parent=0 // pred_fallthru
    _
  // Predicated region
  $region122: #{gru_decoder_forward.3} parent=0 // pred_check
    _
  $region123: #{gru_decoder_forward.3} parent=0 // pred_check_branch
    %1037 = sbr.rel (0) target = $region125
  $region124: #{gru_decoder_forward.3} parent=0 // pred_region
    _
  $region125: #{gru_decoder_forward.3} parent=0 // pred_fallthru
    _

// kernel: gru_decoder_forward.4
$region0: #{gru_decoder_forward.4}
  #allocation0 [shape = 'u32[]', space=smem, size = 0x4, offset = 0x4, fixed_abs, tag = 'smem constant byte address 0x4 - core index']
  #allocation1 [shape = 'u32[144,128]{1,0:T(1,128)}', space=vmem, size = 0x12000, scoped, tag = 'internal scratch']
  #allocation2 [shape = 'f32[2,32]{1,0:T(2,128)}', space=vmem, size = 0x400, scoped, tag = 'scratch operand']
  %s0 = inlined_call_operand.vmem [shape: f32[2,8,96], index: 0, kind: input, shape index: {}]
  %s1 = inlined_call_operand.vmem [shape: f32[32,96], index: 1, kind: input, shape index: {}]
  %s2 = inlined_call_operand.vmem [shape: f32[1,32], index: 2, kind: input, shape index: {}]
  %s3 = inlined_call_operand.vmem [shape: f32[2,8,32], index: 3, kind: output, shape index: {}]
  %s4 = sld [smem:[#allocation0]]
  $region26: #{gru_decoder_forward.4} parent=0
    _
  %s6 = ssub.s32 1, %s4
  %s7 = scalar_select 0, %s6, %s4
  // Predicated region
  $region2: #{gru_decoder_forward.4} parent=0 // pred_check
    _
  $region3: #{gru_decoder_forward.4} parent=0 // pred_check_branch
    %9 = sbr.rel (0) target = $region5
  $region4: #{gru_decoder_forward.4} parent=0 // pred_region
    _
  $region5: #{gru_decoder_forward.4} parent=0 // pred_fallthru
    _
  // Predicated region
  $region6: #{gru_decoder_forward.4} parent=0 // pred_check
    _
  $region7: #{gru_decoder_forward.4} parent=0 // pred_check_branch
    %11 = sbr.rel (0) target = $region9
  $region8: #{gru_decoder_forward.4} parent=0 // pred_region
    _
  $region9: #{gru_decoder_forward.4} parent=0 // pred_fallthru
    _
  // Predicated region
  $region10: #{gru_decoder_forward.4} parent=0 // pred_check
    _
  $region11: #{gru_decoder_forward.4} parent=0 // pred_check_branch
    %13 = sbr.rel (0) target = $region13
  $region12: #{gru_decoder_forward.4} parent=0 // pred_region
    _
  $region13: #{gru_decoder_forward.4} parent=0 // pred_fallthru
    _
  %p14 = scmp.eq.s32.totalorder 0, 0
  // Predicated region
  $region14: #{gru_decoder_forward.4} parent=0 // pred_check
    %p15 = pneg %p14
  $region15: #{gru_decoder_forward.4} parent=0 // pred_check_branch
    %17 = sbr.rel (%p15) target = $region17
  $region16: #{gru_decoder_forward.4} parent=0 // pred_region
    %vm18 = vcmask 254976
    %19 = vst.msk [vmem:[#allocation2] sm:$0x3] %vm18, 0.0
  $region17: #{gru_decoder_forward.4} parent=0 // pred_fallthru
    _
  %v20 = vld [vmem:[%s1] sm:$0xff]
  %v21 = vld [vmem:[%s1 + $0x8] sm:$0xff]
  %v22 = vld [vmem:[%s1 + $0x10] sm:$0xff]
  %v23 = vld [vmem:[%s1 + $0x18] sm:$0xff]
  %v24 = vld [vmem:[%s2] sm:$0x1]
  %v25 = vld [vmem:[#allocation2] sm:$0x3]
  %v26 = vld [vmem:[%s0] sm:$0x1]
  %v27 = vld [vmem:[%s0 + $0x8] sm:$0x1]
  %vm28 = vcmask 261120
  %v30 = vsel %vm28, %v25, 0
  %32 = vmatprep.subr.mxu0 0.0
  %33 = vmatpush1.msra.mxu0 %v20
  %34 = vmatprep.subr.mxu0 0.0
  %35 = vmatpush1.msra.mxu0 %v21
  %36 = vmatprep.subr.mxu0 0.0
  %37 = vmatpush1.msra.mxu0 %v22
  %38 = vmatprep.subr.mxu0 0.0
  %39 = vmatpush1.msra.mxu0 %v23
  %40 = vmatprep.subr.mxu0 0.0
  %41 = vmatpush1.msra.mxu0 0.0
  %42 = vmatprep.subr.mxu0 0.0
  %43 = vmatpush1.msra.mxu0 0.0
  %44 = vmatprep.subr.mxu0 0.0
  %45 = vmatpush1.msra.mxu0 0.0
  %46 = vmatprep.subr.mxu0 0.0
  %47 = vmatpush1.msra.mxu0 0.0
  %48 = vmatprep.subr.mxu0 0.0
  %49 = vmatpush1.msra.mxu0 0.0
  %50 = vmatprep.subr.mxu0 0.0
  %51 = vmatpush1.msra.mxu0 0.0
  %52 = vmatprep.subr.mxu0 0.0
  %53 = vmatpush1.msra.mxu0 0.0
  %54 = vmatprep.subr.mxu0 0.0
  %55 = vmatpush1.msra.mxu0 0.0
  %56 = vmatprep.subr.mxu0 0.0
  %57 = vmatpush1.msra.mxu0 0.0
  %58 = vmatprep.subr.mxu0 0.0
  %59 = vmatpush1.msra.mxu0 0.0
  %60 = vmatprep.subr.mxu0 0.0
  %61 = vmatpush1.msra.mxu0 0.0
  %62 = vmatprep.subr.mxu0 0.0
  %63 = vmatpush1.msra.mxu0 0.0
  %64 = vmatprep.subr.mxu0 0.0
  %65 = vmatpush1.msra.mxu0 0.0
  %66 = vmatprep.subr.mxu0 0.0
  %67 = vmatpush1.msra.mxu0 0.0
  %68 = vmatprep.subr.mxu0 0.0
  %69 = vmatpush1.msra.mxu0 0.0
  %70 = vmatprep.subr.mxu0 0.0
  %71 = vmatpush1.msra.mxu0 0.0
  %72 = vmatprep.subr.mxu0 0.0
  %73 = vmatpush1.msra.mxu0 0.0
  %74 = vmatprep.subr.mxu0 0.0
  %75 = vmatpush1.msra.mxu0 0.0
  %76 = vmatprep.subr.mxu0 0.0
  %77 = vmatpush1.msra.mxu0 0.0
  %78 = vmatprep.subr.mxu0 0.0
  %79 = vmatpush1.msra.mxu0 0.0
  %80 = vmatprep.subr.mxu0 0.0
  %81 = vmatpush1.msra.mxu0 0.0
  %82 = vmatprep.subr.mxu0 0.0
  %83 = vmatpush1.msra.mxu0 0.0
  %84 = vmatprep.subr.mxu0 0.0
  %85 = vmatpush1.msra.mxu0 0.0
  %86 = vmatprep.subr.mxu0 0.0
  %87 = vmatpush1.msra.mxu0 0.0
  %88 = vmatprep.subr.mxu0 0.0
  %89 = vmatpush1.msra.mxu0 0.0
  %90 = vmatprep.subr.mxu0 0.0
  %91 = vmatpush1.msra.mxu0 0.0
  %92 = vmatprep.subr.mxu0 0.0
  %93 = vmatpush1.msra.mxu0 0.0
  %94 = vmatprep.subr.mxu0 0.0
  %95 = vmatpush1.msra.mxu0 0.0
  %96 = vmatprep.mubr.f32.mxu0 0.0
  %97 = vmatmul.mubr.f32.gmra.mrb[0].mxu0 %v30
  %v98 = vpop.f32.mrb[0].mxu0
  %v99 = vadd.f32 0.0, %v98
  %v100 = vpop.f32.mrb[0].mxu0
  %101 = vdwg.mxu0
  %v103 = vrot.slane %v99, 1
  %v106 = vadd.f32 %v26, %v99
  %v107 = vadd.f32 %v27, %v103
  %v108 = vxor.u32 %v106, 2147483648
  %v109 = vxor.u32 %v107, 2147483648
  %v110 = vmul.f32 %v108, 1.442695
  %v111 = vpow.pop %v110
  %v112 = vmul.f32 %v109, 1.442695
  %v113 = vpow.pop %v112
  %v114 = vadd.f32 %v111, 1.0
  %v115 = vadd.f32 %v113, 1.0
  %v116 = vrcp.pop %v114
  %v117 = vmul.f32 1.0, %v116
  %v118 = vrcp.pop %v115
  %v119 = vmul.f32 1.0, %v118
  %v121 = vlaneseq
  %v122 = vshrl.u32 %v121, 7
  %v123 = vsub.s32 0, %v122
  %v124 = vrot.slane %v24, %v123
  %125 = vrot.lane.b32.xlu0 %v124, 64
  %v126 = vpop.permute.xlu0 %125
  %v128 = vadd.f32 %v99, %v126
  %v130 = vrot.slane %v128, 1
  %131 = vrot.lane.b32.xlu0 %v128, 64
  %v132 = vpop.permute.xlu0 %131
  %133 = vrot.lane.b32.xlu0 %v130, 64
  %v134 = vpop.permute.xlu0 %133
  %v137 = vmul.f32 %v117, %v132
  %v138 = vmul.f32 %v119, %v134
  %141 = vrot.lane.b32.xlu0 %v137, 64
  %v142 = vpop.permute.xlu0 %141
  %143 = vrot.lane.b32.xlu0 %v138, 64
  %v144 = vpop.permute.xlu0 %143
  %v147 = vadd.f32 %v26, %v142
  %v148 = vadd.f32 %v27, %v144
  %v149 = vtanh.pop %v147
  %v150 = vtanh.pop %v148
  %v151 = vsub.f32 1.0, %v117
  %v152 = vsub.f32 1.0, %v119
  %155 = vrot.lane.b32.xlu0 %v149, 96
  %v156 = vpop.permute.xlu0 %155
  %157 = vrot.lane.b32.xlu0 %v150, 96
  %v158 = vpop.permute.xlu0 %157
  %v161 = vmul.f32 %v151, %v156
  %v162 = vmul.f32 %v152, %v158
  %v163 = vrot.slane %v25, 1
  %164 = vrot.lane.b32.xlu0 %v25, 32
  %v165 = vpop.permute.xlu0 %164
  %166 = vrot.lane.b32.xlu0 %v163, 32
  %v167 = vpop.permute.xlu0 %166
  %v170 = vmul.f32 %v117, %v165
  %v171 = vmul.f32 %v119, %v167
  %v172 = vadd.f32 %v161, %v170
  %v173 = vadd.f32 %v162, %v171
  %176 = vrot.lane.b32.xlu0 %v172, 96
  %v177 = vpop.permute.xlu0 %176
  %178 = vrot.lane.b32.xlu0 %v173, 96
  %v179 = vpop.permute.xlu0 %178
  %vm182 = vcmask 253952
  %183 = vst.msk [vmem:[%s3] sm:$0x1] %vm182, %v177
  %184 = vst.msk [vmem:[%s3 + $0x8] sm:$0x1] %vm182, %v179
  %v185 = vld [vmem:[%s0 + $0x1] sm:$0x1]
  %v186 = vld [vmem:[%s0 + $0x9] sm:$0x1]
  %v187 = vrot.slane %v173, 7
  %vm188 = vcmask 1041409
  %v189 = vsel %vm188, %v187, %v172
  %190 = vrot.lane.b32.xlu0 %v189, 96
  %v191 = vpop.permute.xlu0 %190
  %v192 = vsel %vm28, %v191, 0
  %194 = vmatprep.subr.mxu0 0.0
  %195 = vmatpush1.msra.mxu0 %v20
  %196 = vmatprep.subr.mxu0 0.0
  %197 = vmatpush1.msra.mxu0 %v21
  %198 = vmatprep.subr.mxu0 0.0
  %199 = vmatpush1.msra.mxu0 %v22
  %200 = vmatprep.subr.mxu0 0.0
  %201 = vmatpush1.msra.mxu0 %v23
  %202 = vmatprep.subr.mxu0 0.0
  %203 = vmatpush1.msra.mxu0 0.0
  %204 = vmatprep.subr.mxu0 0.0
  %205 = vmatpush1.msra.mxu0 0.0
  %206 = vmatprep.subr.mxu0 0.0
  %207 = vmatpush1.msra.mxu0 0.0
  %208 = vmatprep.subr.mxu0 0.0
  %209 = vmatpush1.msra.mxu0 0.0
  %210 = vmatprep.subr.mxu0 0.0
  %211 = vmatpush1.msra.mxu0 0.0
  %212 = vmatprep.subr.mxu0 0.0
  %213 = vmatpush1.msra.mxu0 0.0
  %214 = vmatprep.subr.mxu0 0.0
  %215 = vmatpush1.msra.mxu0 0.0
  %216 = vmatprep.subr.mxu0 0.0
  %217 = vmatpush1.msra.mxu0 0.0
  %218 = vmatprep.subr.mxu0 0.0
  %219 = vmatpush1.msra.mxu0 0.0
  %220 = vmatprep.subr.mxu0 0.0
  %221 = vmatpush1.msra.mxu0 0.0
  %222 = vmatprep.subr.mxu0 0.0
  %223 = vmatpush1.msra.mxu0 0.0
  %224 = vmatprep.subr.mxu0 0.0
  %225 = vmatpush1.msra.mxu0 0.0
  %226 = vmatprep.subr.mxu0 0.0
  %227 = vmatpush1.msra.mxu0 0.0
  %228 = vmatprep.subr.mxu0 0.0
  %229 = vmatpush1.msra.mxu0 0.0
  %230 = vmatprep.subr.mxu0 0.0
  %231 = vmatpush1.msra.mxu0 0.0
  %232 = vmatprep.subr.mxu0 0.0
  %233 = vmatpush1.msra.mxu0 0.0
  %234 = vmatprep.subr.mxu0 0.0
  %235 = vmatpush1.msra.mxu0 0.0
  %236 = vmatprep.subr.mxu0 0.0
  %237 = vmatpush1.msra.mxu0 0.0
  %238 = vmatprep.subr.mxu0 0.0
  %239 = vmatpush1.msra.mxu0 0.0
  %240 = vmatprep.subr.mxu0 0.0
  %241 = vmatpush1.msra.mxu0 0.0
  %242 = vmatprep.subr.mxu0 0.0
  %243 = vmatpush1.msra.mxu0 0.0
  %244 = vmatprep.subr.mxu0 0.0
  %245 = vmatpush1.msra.mxu0 0.0
  %246 = vmatprep.subr.mxu0 0.0
  %247 = vmatpush1.msra.mxu0 0.0
  %248 = vmatprep.subr.mxu0 0.0
  %249 = vmatpush1.msra.mxu0 0.0
  %250 = vmatprep.subr.mxu0 0.0
  %251 = vmatpush1.msra.mxu0 0.0
  %252 = vmatprep.subr.mxu0 0.0
  %253 = vmatpush1.msra.mxu0 0.0
  %254 = vmatprep.subr.mxu0 0.0
  %255 = vmatpush1.msra.mxu0 0.0
  %256 = vmatprep.subr.mxu0 0.0
  %257 = vmatpush1.msra.mxu0 0.0
  %258 = vmatprep.mubr.f32.mxu0 0.0
  %259 = vmatmul.mubr.f32.gmra.mrb[0].mxu0 %v192
  %v260 = vpop.f32.mrb[0].mxu0
  %v261 = vadd.f32 0.0, %v260
  %v262 = vpop.f32.mrb[0].mxu0
  %263 = vdwg.mxu0
  %v265 = vrot.slane %v261, 1
  %v268 = vadd.f32 %v185, %v261
  %v269 = vadd.f32 %v186, %v265
  %v270 = vxor.u32 %v268, 2147483648
  %v271 = vxor.u32 %v269, 2147483648
  %v272 = vmul.f32 %v270, 1.442695
  %v273 = vpow.pop %v272
  %v274 = vmul.f32 %v271, 1.442695
  %v275 = vpow.pop %v274
  %v276 = vadd.f32 %v273, 1.0
  %v277 = vadd.f32 %v275, 1.0
  %v278 = vrcp.pop %v276
  %v279 = vmul.f32 1.0, %v278
  %v280 = vrcp.pop %v277
  %v281 = vmul.f32 1.0, %v280
  %v282 = vadd.f32 %v261, %v126
  %v284 = vrot.slane %v282, 1
  %285 = vrot.lane.b32.xlu0 %v282, 64
  %v286 = vpop.permute.xlu0 %285
  %287 = vrot.lane.b32.xlu0 %v284, 64
  %v288 = vpop.permute.xlu0 %287
  %v291 = vmul.f32 %v279, %v286
  %v292 = vmul.f32 %v281, %v288
  %295 = vrot.lane.b32.xlu0 %v291, 64
  %v296 = vpop.permute.xlu0 %295
  %297 = vrot.lane.b32.xlu0 %v292, 64
  %v298 = vpop.permute.xlu0 %297
  %v301 = vadd.f32 %v185, %v296
  %v302 = vadd.f32 %v186, %v298
  %v303 = vtanh.pop %v301
  %v304 = vtanh.pop %v302
  %v305 = vsub.f32 1.0, %v279
  %v306 = vsub.f32 1.0, %v281
  %309 = vrot.lane.b32.xlu0 %v303, 96
  %v310 = vpop.permute.xlu0 %309
  %311 = vrot.lane.b32.xlu0 %v304, 96
  %v312 = vpop.permute.xlu0 %311
  %v315 = vmul.f32 %v305, %v310
  %v316 = vmul.f32 %v306, %v312
  %v317 = vmul.f32 %v279, %v172
  %v318 = vmul.f32 %v281, %v173
  %v319 = vadd.f32 %v315, %v317
  %v320 = vadd.f32 %v316, %v318
  %323 = vrot.lane.b32.xlu0 %v319, 96
  %v324 = vpop.permute.xlu0 %323
  %325 = vrot.lane.b32.xlu0 %v320, 96
  %v326 = vpop.permute.xlu0 %325
  %329 = vst.msk [vmem:[%s3 + $0x1] sm:$0x1] %vm182, %v324
  %330 = vst.msk [vmem:[%s3 + $0x9] sm:$0x1] %vm182, %v326
  %v331 = vld [vmem:[%s0 + $0x2] sm:$0x1]
  %v332 = vld [vmem:[%s0 + $0xa] sm:$0x1]
  %v333 = vrot.slane %v320, 7
  %v334 = vsel %vm188, %v333, %v319
  %335 = vrot.lane.b32.xlu0 %v334, 96
  %v336 = vpop.permute.xlu0 %335
  %v337 = vsel %vm28, %v336, 0
  %339 = vmatprep.subr.mxu0 0.0
  %340 = vmatpush1.msra.mxu0 %v20
  %341 = vmatprep.subr.mxu0 0.0
  %342 = vmatpush1.msra.mxu0 %v21
  %343 = vmatprep.subr.mxu0 0.0
  %344 = vmatpush1.msra.mxu0 %v22
  %345 = vmatprep.subr.mxu0 0.0
  %346 = vmatpush1.msra.mxu0 %v23
  %347 = vmatprep.subr.mxu0 0.0
  %348 = vmatpush1.msra.mxu0 0.0
  %349 = vmatprep.subr.mxu0 0.0
  %350 = vmatpush1.msra.mxu0 0.0
  %351 = vmatprep.subr.mxu0 0.0
  %352 = vmatpush1.msra.mxu0 0.0
  %353 = vmatprep.subr.mxu0 0.0
  %354 = vmatpush1.msra.mxu0 0.0
  %355 = vmatprep.subr.mxu0 0.0
  %356 = vmatpush1.msra.mxu0 0.0
  %357 = vmatprep.subr.mxu0 0.0
  %358 = vmatpush1.msra.mxu0 0.0
  %359 = vmatprep.subr.mxu0 0.0
  %360 = vmatpush1.msra.mxu0 0.0
  %361 = vmatprep.subr.mxu0 0.0
  %362 = vmatpush1.msra.mxu0 0.0
  %363 = vmatprep.subr.mxu0 0.0
  %364 = vmatpush1.msra.mxu0 0.0
  %365 = vmatprep.subr.mxu0 0.0
  %366 = vmatpush1.msra.mxu0 0.0
  %367 = vmatprep.subr.mxu0 0.0
  %368 = vmatpush1.msra.mxu0 0.0
  %369 = vmatprep.subr.mxu0 0.0
  %370 = vmatpush1.msra.mxu0 0.0
  %371 = vmatprep.subr.mxu0 0.0
  %372 = vmatpush1.msra.mxu0 0.0
  %373 = vmatprep.subr.mxu0 0.0
  %374 = vmatpush1.msra.mxu0 0.0
  %375 = vmatprep.subr.mxu0 0.0
  %376 = vmatpush1.msra.mxu0 0.0
  %377 = vmatprep.subr.mxu0 0.0
  %378 = vmatpush1.msra.mxu0 0.0
  %379 = vmatprep.subr.mxu0 0.0
  %380 = vmatpush1.msra.mxu0 0.0
  %381 = vmatprep.subr.mxu0 0.0
  %382 = vmatpush1.msra.mxu0 0.0
  %383 = vmatprep.subr.mxu0 0.0
  %384 = vmatpush1.msra.mxu0 0.0
  %385 = vmatprep.subr.mxu0 0.0
  %386 = vmatpush1.msra.mxu0 0.0
  %387 = vmatprep.subr.mxu0 0.0
  %388 = vmatpush1.msra.mxu0 0.0
  %389 = vmatprep.subr.mxu0 0.0
  %390 = vmatpush1.msra.mxu0 0.0
  %391 = vmatprep.subr.mxu0 0.0
  %392 = vmatpush1.msra.mxu0 0.0
  %393 = vmatprep.subr.mxu0 0.0
  %394 = vmatpush1.msra.mxu0 0.0
  %395 = vmatprep.subr.mxu0 0.0
  %396 = vmatpush1.msra.mxu0 0.0
  %397 = vmatprep.subr.mxu0 0.0
  %398 = vmatpush1.msra.mxu0 0.0
  %399 = vmatprep.subr.mxu0 0.0
  %400 = vmatpush1.msra.mxu0 0.0
  %401 = vmatprep.subr.mxu0 0.0
  %402 = vmatpush1.msra.mxu0 0.0
  %403 = vmatprep.mubr.f32.mxu0 0.0
  %404 = vmatmul.mubr.f32.gmra.mrb[0].mxu0 %v337
  %v405 = vpop.f32.mrb[0].mxu0
  %v406 = vadd.f32 0.0, %v405
  %v407 = vpop.f32.mrb[0].mxu0
  %408 = vdwg.mxu0
  %v410 = vrot.slane %v406, 1
  %v413 = vadd.f32 %v331, %v406
  %v414 = vadd.f32 %v332, %v410
  %v415 = vxor.u32 %v413, 2147483648
  %v416 = vxor.u32 %v414, 2147483648
  %v417 = vmul.f32 %v415, 1.442695
  %v418 = vpow.pop %v417
  %v419 = vmul.f32 %v416, 1.442695
  %v420 = vpow.pop %v419
  %v421 = vadd.f32 %v418, 1.0
  %v422 = vadd.f32 %v420, 1.0
  %v423 = vrcp.pop %v421
  %v424 = vmul.f32 1.0, %v423
  %v425 = vrcp.pop %v422
  %v426 = vmul.f32 1.0, %v425
  %v427 = vadd.f32 %v406, %v126
  %v429 = vrot.slane %v427, 1
  %430 = vrot.lane.b32.xlu0 %v427, 64
  %v431 = vpop.permute.xlu0 %430
  %432 = vrot.lane.b32.xlu0 %v429, 64
  %v433 = vpop.permute.xlu0 %432
  %v436 = vmul.f32 %v424, %v431
  %v437 = vmul.f32 %v426, %v433
  %440 = vrot.lane.b32.xlu0 %v436, 64
  %v441 = vpop.permute.xlu0 %440
  %442 = vrot.lane.b32.xlu0 %v437, 64
  %v443 = vpop.permute.xlu0 %442
  %v446 = vadd.f32 %v331, %v441
  %v447 = vadd.f32 %v332, %v443
  %v448 = vtanh.pop %v446
  %v449 = vtanh.pop %v447
  %v450 = vsub.f32 1.0, %v424
  %v451 = vsub.f32 1.0, %v426
  %454 = vrot.lane.b32.xlu0 %v448, 96
  %v455 = vpop.permute.xlu0 %454
  %456 = vrot.lane.b32.xlu0 %v449, 96
  %v457 = vpop.permute.xlu0 %456
  %v460 = vmul.f32 %v450, %v455
  %v461 = vmul.f32 %v451, %v457
  %v462 = vmul.f32 %v424, %v319
  %v463 = vmul.f32 %v426, %v320
  %v464 = vadd.f32 %v460, %v462
  %v465 = vadd.f32 %v461, %v463
  %468 = vrot.lane.b32.xlu0 %v464, 96
  %v469 = vpop.permute.xlu0 %468
  %470 = vrot.lane.b32.xlu0 %v465, 96
  %v471 = vpop.permute.xlu0 %470
  %474 = vst.msk [vmem:[%s3 + $0x2] sm:$0x1] %vm182, %v469
  %475 = vst.msk [vmem:[%s3 + $0xa] sm:$0x1] %vm182, %v471
  %v476 = vld [vmem:[%s0 + $0x3] sm:$0x1]
  %v477 = vld [vmem:[%s0 + $0xb] sm:$0x1]
  %v478 = vrot.slane %v465, 7
  %v479 = vsel %vm188, %v478, %v464
  %480 = vrot.lane.b32.xlu0 %v479, 96
  %v481 = vpop.permute.xlu0 %480
  %v482 = vsel %vm28, %v481, 0
  %484 = vmatprep.subr.mxu0 0.0
  %485 = vmatpush1.msra.mxu0 %v20
  %486 = vmatprep.subr.mxu0 0.0
  %487 = vmatpush1.msra.mxu0 %v21
  %488 = vmatprep.subr.mxu0 0.0
  %489 = vmatpush1.msra.mxu0 %v22
  %490 = vmatprep.subr.mxu0 0.0
  %491 = vmatpush1.msra.mxu0 %v23
  %492 = vmatprep.subr.mxu0 0.0
  %493 = vmatpush1.msra.mxu0 0.0
  %494 = vmatprep.subr.mxu0 0.0
  %495 = vmatpush1.msra.mxu0 0.0
  %496 = vmatprep.subr.mxu0 0.0
  %497 = vmatpush1.msra.mxu0 0.0
  %498 = vmatprep.subr.mxu0 0.0
  %499 = vmatpush1.msra.mxu0 0.0
  %500 = vmatprep.subr.mxu0 0.0
  %501 = vmatpush1.msra.mxu0 0.0
  %502 = vmatprep.subr.mxu0 0.0
  %503 = vmatpush1.msra.mxu0 0.0
  %504 = vmatprep.subr.mxu0 0.0
  %505 = vmatpush1.msra.mxu0 0.0
  %506 = vmatprep.subr.mxu0 0.0
  %507 = vmatpush1.msra.mxu0 0.0
  %508 = vmatprep.subr.mxu0 0.0
  %509 = vmatpush1.msra.mxu0 0.0
  %510 = vmatprep.subr.mxu0 0.0
  %511 = vmatpush1.msra.mxu0 0.0
  %512 = vmatprep.subr.mxu0 0.0
  %513 = vmatpush1.msra.mxu0 0.0
  %514 = vmatprep.subr.mxu0 0.0
  %515 = vmatpush1.msra.mxu0 0.0
  %516 = vmatprep.subr.mxu0 0.0
  %517 = vmatpush1.msra.mxu0 0.0
  %518 = vmatprep.subr.mxu0 0.0
  %519 = vmatpush1.msra.mxu0 0.0
  %520 = vmatprep.subr.mxu0 0.0
  %521 = vmatpush1.msra.mxu0 0.0
  %522 = vmatprep.subr.mxu0 0.0
  %523 = vmatpush1.msra.mxu0 0.0
  %524 = vmatprep.subr.mxu0 0.0
  %525 = vmatpush1.msra.mxu0 0.0
  %526 = vmatprep.subr.mxu0 0.0
  %527 = vmatpush1.msra.mxu0 0.0
  %528 = vmatprep.subr.mxu0 0.0
  %529 = vmatpush1.msra.mxu0 0.0
  %530 = vmatprep.subr.mxu0 0.0
  %531 = vmatpush1.msra.mxu0 0.0
  %532 = vmatprep.subr.mxu0 0.0
  %533 = vmatpush1.msra.mxu0 0.0
  %534 = vmatprep.subr.mxu0 0.0
  %535 = vmatpush1.msra.mxu0 0.0
  %536 = vmatprep.subr.mxu0 0.0
  %537 = vmatpush1.msra.mxu0 0.0
  %538 = vmatprep.subr.mxu0 0.0
  %539 = vmatpush1.msra.mxu0 0.0
  %540 = vmatprep.subr.mxu0 0.0
  %541 = vmatpush1.msra.mxu0 0.0
  %542 = vmatprep.subr.mxu0 0.0
  %543 = vmatpush1.msra.mxu0 0.0
  %544 = vmatprep.subr.mxu0 0.0
  %545 = vmatpush1.msra.mxu0 0.0
  %546 = vmatprep.subr.mxu0 0.0
  %547 = vmatpush1.msra.mxu0 0.0
  %548 = vmatprep.mubr.f32.mxu0 0.0
  %549 = vmatmul.mubr.f32.gmra.mrb[0].mxu0 %v482
  %v550 = vpop.f32.mrb[0].mxu0
  %v551 = vadd.f32 0.0, %v550
  %v552 = vpop.f32.mrb[0].mxu0
  %553 = vdwg.mxu0
  %v555 = vrot.slane %v551, 1
  %v558 = vadd.f32 %v476, %v551
  %v559 = vadd.f32 %v477, %v555
  %v560 = vxor.u32 %v558, 2147483648
  %v561 = vxor.u32 %v559, 2147483648
  %v562 = vmul.f32 %v560, 1.442695
  %v563 = vpow.pop %v562
  %v564 = vmul.f32 %v561, 1.442695
  %v565 = vpow.pop %v564
  %v566 = vadd.f32 %v563, 1.0
  %v567 = vadd.f32 %v565, 1.0
  %v568 = vrcp.pop %v566
  %v569 = vmul.f32 1.0, %v568
  %v570 = vrcp.pop %v567
  %v571 = vmul.f32 1.0, %v570
  %v572 = vadd.f32 %v551, %v126
  %v574 = vrot.slane %v572, 1
  %575 = vrot.lane.b32.xlu0 %v572, 64
  %v576 = vpop.permute.xlu0 %575
  %577 = vrot.lane.b32.xlu0 %v574, 64
  %v578 = vpop.permute.xlu0 %577
  %v581 = vmul.f32 %v569, %v576
  %v582 = vmul.f32 %v571, %v578
  %585 = vrot.lane.b32.xlu0 %v581, 64
  %v586 = vpop.permute.xlu0 %585
  %587 = vrot.lane.b32.xlu0 %v582, 64
  %v588 = vpop.permute.xlu0 %587
  %v591 = vadd.f32 %v476, %v586
  %v592 = vadd.f32 %v477, %v588
  %v593 = vtanh.pop %v591
  %v594 = vtanh.pop %v592
  %v595 = vsub.f32 1.0, %v569
  %v596 = vsub.f32 1.0, %v571
  %599 = vrot.lane.b32.xlu0 %v593, 96
  %v600 = vpop.permute.xlu0 %599
  %601 = vrot.lane.b32.xlu0 %v594, 96
  %v602 = vpop.permute.xlu0 %601
  %v605 = vmul.f32 %v595, %v600
  %v606 = vmul.f32 %v596, %v602
  %v607 = vmul.f32 %v569, %v464
  %v608 = vmul.f32 %v571, %v465
  %v609 = vadd.f32 %v605, %v607
  %v610 = vadd.f32 %v606, %v608
  %613 = vrot.lane.b32.xlu0 %v609, 96
  %v614 = vpop.permute.xlu0 %613
  %615 = vrot.lane.b32.xlu0 %v610, 96
  %v616 = vpop.permute.xlu0 %615
  %619 = vst.msk [vmem:[%s3 + $0x3] sm:$0x1] %vm182, %v614
  %620 = vst.msk [vmem:[%s3 + $0xb] sm:$0x1] %vm182, %v616
  %v621 = vld [vmem:[%s0 + $0x4] sm:$0x1]
  %v622 = vld [vmem:[%s0 + $0xc] sm:$0x1]
  %v623 = vrot.slane %v610, 7
  %v624 = vsel %vm188, %v623, %v609
  %625 = vrot.lane.b32.xlu0 %v624, 96
  %v626 = vpop.permute.xlu0 %625
  %v627 = vsel %vm28, %v626, 0
  %629 = vmatprep.subr.mxu0 0.0
  %630 = vmatpush1.msra.mxu0 %v20
  %631 = vmatprep.subr.mxu0 0.0
  %632 = vmatpush1.msra.mxu0 %v21
  %633 = vmatprep.subr.mxu0 0.0
  %634 = vmatpush1.msra.mxu0 %v22
  %635 = vmatprep.subr.mxu0 0.0
  %636 = vmatpush1.msra.mxu0 %v23
  %637 = vmatprep.subr.mxu0 0.0
  %638 = vmatpush1.msra.mxu0 0.0
  %639 = vmatprep.subr.mxu0 0.0
  %640 = vmatpush1.msra.mxu0 0.0
  %641 = vmatprep.subr.mxu0 0.0
  %642 = vmatpush1.msra.mxu0 0.0
  %643 = vmatprep.subr.mxu0 0.0
  %644 = vmatpush1.msra.mxu0 0.0
  %645 = vmatprep.subr.mxu0 0.0
  %646 = vmatpush1.msra.mxu0 0.0
  %647 = vmatprep.subr.mxu0 0.0
  %648 = vmatpush1.msra.mxu0 0.0
  %649 = vmatprep.subr.mxu0 0.0
  %650 = vmatpush1.msra.mxu0 0.0
  %651 = vmatprep.subr.mxu0 0.0
  %652 = vmatpush1.msra.mxu0 0.0
  %653 = vmatprep.subr.mxu0 0.0
  %654 = vmatpush1.msra.mxu0 0.0
  %655 = vmatprep.subr.mxu0 0.0
  %656 = vmatpush1.msra.mxu0 0.0
  %657 = vmatprep.subr.mxu0 0.0
  %658 = vmatpush1.msra.mxu0 0.0
  %659 = vmatprep.subr.mxu0 0.0
  %660 = vmatpush1.msra.mxu0 0.0
  %661 = vmatprep.subr.mxu0 0.0
  %662 = vmatpush1.msra.mxu0 0.0
  %663 = vmatprep.subr.mxu0 0.0
  %664 = vmatpush1.msra.mxu0 0.0
  %665 = vmatprep.subr.mxu0 0.0
  %666 = vmatpush1.msra.mxu0 0.0
  %667 = vmatprep.subr.mxu0 0.0
  %668 = vmatpush1.msra.mxu0 0.0
  %669 = vmatprep.subr.mxu0 0.0
  %670 = vmatpush1.msra.mxu0 0.0
  %671 = vmatprep.subr.mxu0 0.0
  %672 = vmatpush1.msra.mxu0 0.0
  %673 = vmatprep.subr.mxu0 0.0
  %674 = vmatpush1.msra.mxu0 0.0
  %675 = vmatprep.subr.mxu0 0.0
  %676 = vmatpush1.msra.mxu0 0.0
  %677 = vmatprep.subr.mxu0 0.0
  %678 = vmatpush1.msra.mxu0 0.0
  %679 = vmatprep.subr.mxu0 0.0
  %680 = vmatpush1.msra.mxu0 0.0
  %681 = vmatprep.subr.mxu0 0.0
  %682 = vmatpush1.msra.mxu0 0.0
  %683 = vmatprep.subr.mxu0 0.0
  %684 = vmatpush1.msra.mxu0 0.0
  %685 = vmatprep.subr.mxu0 0.0
  %686 = vmatpush1.msra.mxu0 0.0
  %687 = vmatprep.subr.mxu0 0.0
  %688 = vmatpush1.msra.mxu0 0.0
  %689 = vmatprep.subr.mxu0 0.0
  %690 = vmatpush1.msra.mxu0 0.0
  %691 = vmatprep.subr.mxu0 0.0
  %692 = vmatpush1.msra.mxu0 0.0
  %693 = vmatprep.mubr.f32.mxu0 0.0
  %694 = vmatmul.mubr.f32.gmra.mrb[0].mxu0 %v627
  %v695 = vpop.f32.mrb[0].mxu0
  %v696 = vadd.f32 0.0, %v695
  %v697 = vpop.f32.mrb[0].mxu0
  %698 = vdwg.mxu0
  %v700 = vrot.slane %v696, 1
  %v703 = vadd.f32 %v621, %v696
  %v704 = vadd.f32 %v622, %v700
  %v705 = vxor.u32 %v703, 2147483648
  %v706 = vxor.u32 %v704, 2147483648
  %v707 = vmul.f32 %v705, 1.442695
  %v708 = vpow.pop %v707
  %v709 = vmul.f32 %v706, 1.442695
  %v710 = vpow.pop %v709
  %v711 = vadd.f32 %v708, 1.0
  %v712 = vadd.f32 %v710, 1.0
  %v713 = vrcp.pop %v711
  %v714 = vmul.f32 1.0, %v713
  %v715 = vrcp.pop %v712
  %v716 = vmul.f32 1.0, %v715
  %v717 = vadd.f32 %v696, %v126
  %v719 = vrot.slane %v717, 1
  %720 = vrot.lane.b32.xlu0 %v717, 64
  %v721 = vpop.permute.xlu0 %720
  %722 = vrot.lane.b32.xlu0 %v719, 64
  %v723 = vpop.permute.xlu0 %722
  %v726 = vmul.f32 %v714, %v721
  %v727 = vmul.f32 %v716, %v723
  %730 = vrot.lane.b32.xlu0 %v726, 64
  %v731 = vpop.permute.xlu0 %730
  %732 = vrot.lane.b32.xlu0 %v727, 64
  %v733 = vpop.permute.xlu0 %732
  %v736 = vadd.f32 %v621, %v731
  %v737 = vadd.f32 %v622, %v733
  %v738 = vtanh.pop %v736
  %v739 = vtanh.pop %v737
  %v740 = vsub.f32 1.0, %v714
  %v741 = vsub.f32 1.0, %v716
  %744 = vrot.lane.b32.xlu0 %v738, 96
  %v745 = vpop.permute.xlu0 %744
  %746 = vrot.lane.b32.xlu0 %v739, 96
  %v747 = vpop.permute.xlu0 %746
  %v750 = vmul.f32 %v740, %v745
  %v751 = vmul.f32 %v741, %v747
  %v752 = vmul.f32 %v714, %v609
  %v753 = vmul.f32 %v716, %v610
  %v754 = vadd.f32 %v750, %v752
  %v755 = vadd.f32 %v751, %v753
  %758 = vrot.lane.b32.xlu0 %v754, 96
  %v759 = vpop.permute.xlu0 %758
  %760 = vrot.lane.b32.xlu0 %v755, 96
  %v761 = vpop.permute.xlu0 %760
  %764 = vst.msk [vmem:[%s3 + $0x4] sm:$0x1] %vm182, %v759
  %765 = vst.msk [vmem:[%s3 + $0xc] sm:$0x1] %vm182, %v761
  %v766 = vld [vmem:[%s0 + $0x5] sm:$0x1]
  %v767 = vld [vmem:[%s0 + $0xd] sm:$0x1]
  %v768 = vrot.slane %v755, 7
  %v769 = vsel %vm188, %v768, %v754
  %770 = vrot.lane.b32.xlu0 %v769, 96
  %v771 = vpop.permute.xlu0 %770
  %v772 = vsel %vm28, %v771, 0
  %774 = vmatprep.subr.mxu0 0.0
  %775 = vmatpush1.msra.mxu0 %v20
  %776 = vmatprep.subr.mxu0 0.0
  %777 = vmatpush1.msra.mxu0 %v21
  %778 = vmatprep.subr.mxu0 0.0
  %779 = vmatpush1.msra.mxu0 %v22
  %780 = vmatprep.subr.mxu0 0.0
  %781 = vmatpush1.msra.mxu0 %v23
  %782 = vmatprep.subr.mxu0 0.0
  %783 = vmatpush1.msra.mxu0 0.0
  %784 = vmatprep.subr.mxu0 0.0
  %785 = vmatpush1.msra.mxu0 0.0
  %786 = vmatprep.subr.mxu0 0.0
  %787 = vmatpush1.msra.mxu0 0.0
  %788 = vmatprep.subr.mxu0 0.0
  %789 = vmatpush1.msra.mxu0 0.0
  %790 = vmatprep.subr.mxu0 0.0
  %791 = vmatpush1.msra.mxu0 0.0
  %792 = vmatprep.subr.mxu0 0.0
  %793 = vmatpush1.msra.mxu0 0.0
  %794 = vmatprep.subr.mxu0 0.0
  %795 = vmatpush1.msra.mxu0 0.0
  %796 = vmatprep.subr.mxu0 0.0
  %797 = vmatpush1.msra.mxu0 0.0
  %798 = vmatprep.subr.mxu0 0.0
  %799 = vmatpush1.msra.mxu0 0.0
  %800 = vmatprep.subr.mxu0 0.0
  %801 = vmatpush1.msra.mxu0 0.0
  %802 = vmatprep.subr.mxu0 0.0
  %803 = vmatpush1.msra.mxu0 0.0
  %804 = vmatprep.subr.mxu0 0.0
  %805 = vmatpush1.msra.mxu0 0.0
  %806 = vmatprep.subr.mxu0 0.0
  %807 = vmatpush1.msra.mxu0 0.0
  %808 = vmatprep.subr.mxu0 0.0
  %809 = vmatpush1.msra.mxu0 0.0
  %810 = vmatprep.subr.mxu0 0.0
  %811 = vmatpush1.msra.mxu0 0.0
  %812 = vmatprep.subr.mxu0 0.0
  %813 = vmatpush1.msra.mxu0 0.0
  %814 = vmatprep.subr.mxu0 0.0
  %815 = vmatpush1.msra.mxu0 0.0
  %816 = vmatprep.subr.mxu0 0.0
  %817 = vmatpush1.msra.mxu0 0.0
  %818 = vmatprep.subr.mxu0 0.0
  %819 = vmatpush1.msra.mxu0 0.0
  %820 = vmatprep.subr.mxu0 0.0
  %821 = vmatpush1.msra.mxu0 0.0
  %822 = vmatprep.subr.mxu0 0.0
  %823 = vmatpush1.msra.mxu0 0.0
  %824 = vmatprep.subr.mxu0 0.0
  %825 = vmatpush1.msra.mxu0 0.0
  %826 = vmatprep.subr.mxu0 0.0
  %827 = vmatpush1.msra.mxu0 0.0
  %828 = vmatprep.subr.mxu0 0.0
  %829 = vmatpush1.msra.mxu0 0.0
  %830 = vmatprep.subr.mxu0 0.0
  %831 = vmatpush1.msra.mxu0 0.0
  %832 = vmatprep.subr.mxu0 0.0
  %833 = vmatpush1.msra.mxu0 0.0
  %834 = vmatprep.subr.mxu0 0.0
  %835 = vmatpush1.msra.mxu0 0.0
  %836 = vmatprep.subr.mxu0 0.0
  %837 = vmatpush1.msra.mxu0 0.0
  %838 = vmatprep.mubr.f32.mxu0 0.0
  %839 = vmatmul.mubr.f32.gmra.mrb[0].mxu0 %v772
  %v840 = vpop.f32.mrb[0].mxu0
  %v841 = vadd.f32 0.0, %v840
  %v842 = vpop.f32.mrb[0].mxu0
  %843 = vdwg.mxu0
  %v845 = vrot.slane %v841, 1
  %v848 = vadd.f32 %v766, %v841
  %v849 = vadd.f32 %v767, %v845
  %v850 = vxor.u32 %v848, 2147483648
  %v851 = vxor.u32 %v849, 2147483648
  %v852 = vmul.f32 %v850, 1.442695
  %v853 = vpow.pop %v852
  %v854 = vmul.f32 %v851, 1.442695
  %v855 = vpow.pop %v854
  %v856 = vadd.f32 %v853, 1.0
  %v857 = vadd.f32 %v855, 1.0
  %v858 = vrcp.pop %v856
  %v859 = vmul.f32 1.0, %v858
  %v860 = vrcp.pop %v857
  %v861 = vmul.f32 1.0, %v860
  %v862 = vadd.f32 %v841, %v126
  %v864 = vrot.slane %v862, 1
  %865 = vrot.lane.b32.xlu0 %v862, 64
  %v866 = vpop.permute.xlu0 %865
  %867 = vrot.lane.b32.xlu0 %v864, 64
  %v868 = vpop.permute.xlu0 %867
  %v871 = vmul.f32 %v859, %v866
  %v872 = vmul.f32 %v861, %v868
  %875 = vrot.lane.b32.xlu0 %v871, 64
  %v876 = vpop.permute.xlu0 %875
  %877 = vrot.lane.b32.xlu0 %v872, 64
  %v878 = vpop.permute.xlu0 %877
  %v881 = vadd.f32 %v766, %v876
  %v882 = vadd.f32 %v767, %v878
  %v883 = vtanh.pop %v881
  %v884 = vtanh.pop %v882
  %v885 = vsub.f32 1.0, %v859
  %v886 = vsub.f32 1.0, %v861
  %889 = vrot.lane.b32.xlu0 %v883, 96
  %v890 = vpop.permute.xlu0 %889
  %891 = vrot.lane.b32.xlu0 %v884, 96
  %v892 = vpop.permute.xlu0 %891
  %v895 = vmul.f32 %v885, %v890
  %v896 = vmul.f32 %v886, %v892
  %v897 = vmul.f32 %v859, %v754
  %v898 = vmul.f32 %v861, %v755
  %v899 = vadd.f32 %v895, %v897
  %v900 = vadd.f32 %v896, %v898
  %903 = vrot.lane.b32.xlu0 %v899, 96
  %v904 = vpop.permute.xlu0 %903
  %905 = vrot.lane.b32.xlu0 %v900, 96
  %v906 = vpop.permute.xlu0 %905
  %909 = vst.msk [vmem:[%s3 + $0x5] sm:$0x1] %vm182, %v904
  %910 = vst.msk [vmem:[%s3 + $0xd] sm:$0x1] %vm182, %v906
  %v911 = vld [vmem:[%s0 + $0x6] sm:$0x1]
  %v912 = vld [vmem:[%s0 + $0xe] sm:$0x1]
  %v913 = vrot.slane %v900, 7
  %v914 = vsel %vm188, %v913, %v899
  %915 = vrot.lane.b32.xlu0 %v914, 96
  %v916 = vpop.permute.xlu0 %915
  %v917 = vsel %vm28, %v916, 0
  %919 = vmatprep.subr.mxu0 0.0
  %920 = vmatpush1.msra.mxu0 %v20
  %921 = vmatprep.subr.mxu0 0.0
  %922 = vmatpush1.msra.mxu0 %v21
  %923 = vmatprep.subr.mxu0 0.0
  %924 = vmatpush1.msra.mxu0 %v22
  %925 = vmatprep.subr.mxu0 0.0
  %926 = vmatpush1.msra.mxu0 %v23
  %927 = vmatprep.subr.mxu0 0.0
  %928 = vmatpush1.msra.mxu0 0.0
  %929 = vmatprep.subr.mxu0 0.0
  %930 = vmatpush1.msra.mxu0 0.0
  %931 = vmatprep.subr.mxu0 0.0
  %932 = vmatpush1.msra.mxu0 0.0
  %933 = vmatprep.subr.mxu0 0.0
  %934 = vmatpush1.msra.mxu0 0.0
  %935 = vmatprep.subr.mxu0 0.0
  %936 = vmatpush1.msra.mxu0 0.0
  %937 = vmatprep.subr.mxu0 0.0
  %938 = vmatpush1.msra.mxu0 0.0
  %939 = vmatprep.subr.mxu0 0.0
  %940 = vmatpush1.msra.mxu0 0.0
  %941 = vmatprep.subr.mxu0 0.0
  %942 = vmatpush1.msra.mxu0 0.0
  %943 = vmatprep.subr.mxu0 0.0
  %944 = vmatpush1.msra.mxu0 0.0
  %945 = vmatprep.subr.mxu0 0.0
  %946 = vmatpush1.msra.mxu0 0.0
  %947 = vmatprep.subr.mxu0 0.0
  %948 = vmatpush1.msra.mxu0 0.0
  %949 = vmatprep.subr.mxu0 0.0
  %950 = vmatpush1.msra.mxu0 0.0
  %951 = vmatprep.subr.mxu0 0.0
  %952 = vmatpush1.msra.mxu0 0.0
  %953 = vmatprep.subr.mxu0 0.0
  %954 = vmatpush1.msra.mxu0 0.0
  %955 = vmatprep.subr.mxu0 0.0
  %956 = vmatpush1.msra.mxu0 0.0
  %957 = vmatprep.subr.mxu0 0.0
  %958 = vmatpush1.msra.mxu0 0.0
  %959 = vmatprep.subr.mxu0 0.0
  %960 = vmatpush1.msra.mxu0 0.0
  %961 = vmatprep.subr.mxu0 0.0
  %962 = vmatpush1.msra.mxu0 0.0
  %963 = vmatprep.subr.mxu0 0.0
  %964 = vmatpush1.msra.mxu0 0.0
  %965 = vmatprep.subr.mxu0 0.0
  %966 = vmatpush1.msra.mxu0 0.0
  %967 = vmatprep.subr.mxu0 0.0
  %968 = vmatpush1.msra.mxu0 0.0
  %969 = vmatprep.subr.mxu0 0.0
  %970 = vmatpush1.msra.mxu0 0.0
  %971 = vmatprep.subr.mxu0 0.0
  %972 = vmatpush1.msra.mxu0 0.0
  %973 = vmatprep.subr.mxu0 0.0
  %974 = vmatpush1.msra.mxu0 0.0
  %975 = vmatprep.subr.mxu0 0.0
  %976 = vmatpush1.msra.mxu0 0.0
  %977 = vmatprep.subr.mxu0 0.0
  %978 = vmatpush1.msra.mxu0 0.0
  %979 = vmatprep.subr.mxu0 0.0
  %980 = vmatpush1.msra.mxu0 0.0
  %981 = vmatprep.subr.mxu0 0.0
  %982 = vmatpush1.msra.mxu0 0.0
  %983 = vmatprep.mubr.f32.mxu0 0.0
  %984 = vmatmul.mubr.f32.gmra.mrb[0].mxu0 %v917
  %v985 = vpop.f32.mrb[0].mxu0
  %v986 = vadd.f32 0.0, %v985
  %v987 = vpop.f32.mrb[0].mxu0
  %988 = vdwg.mxu0
  %v990 = vrot.slane %v986, 1
  %v993 = vadd.f32 %v911, %v986
  %v994 = vadd.f32 %v912, %v990
  %v995 = vxor.u32 %v993, 2147483648
  %v996 = vxor.u32 %v994, 2147483648
  %v997 = vmul.f32 %v995, 1.442695
  %v998 = vpow.pop %v997
  %v999 = vmul.f32 %v996, 1.442695
  %v1000 = vpow.pop %v999
  %v1001 = vadd.f32 %v998, 1.0
  %v1002 = vadd.f32 %v1000, 1.0
  %v1003 = vrcp.pop %v1001
  %v1004 = vmul.f32 1.0, %v1003
  %v1005 = vrcp.pop %v1002
  %v1006 = vmul.f32 1.0, %v1005
  %v1007 = vadd.f32 %v986, %v126
  %v1009 = vrot.slane %v1007, 1
  %1010 = vrot.lane.b32.xlu0 %v1007, 64
  %v1011 = vpop.permute.xlu0 %1010
  %1012 = vrot.lane.b32.xlu0 %v1009, 64
  %v1013 = vpop.permute.xlu0 %1012
  %v1016 = vmul.f32 %v1004, %v1011
  %v1017 = vmul.f32 %v1006, %v1013
  %1020 = vrot.lane.b32.xlu0 %v1016, 64
  %v1021 = vpop.permute.xlu0 %1020
  %1022 = vrot.lane.b32.xlu0 %v1017, 64
  %v1023 = vpop.permute.xlu0 %1022
  %v1026 = vadd.f32 %v911, %v1021
  %v1027 = vadd.f32 %v912, %v1023
  %v1028 = vtanh.pop %v1026
  %v1029 = vtanh.pop %v1027
  %v1030 = vsub.f32 1.0, %v1004
  %v1031 = vsub.f32 1.0, %v1006
  %1034 = vrot.lane.b32.xlu0 %v1028, 96
  %v1035 = vpop.permute.xlu0 %1034
  %1036 = vrot.lane.b32.xlu0 %v1029, 96
  %v1037 = vpop.permute.xlu0 %1036
  %v1040 = vmul.f32 %v1030, %v1035
  %v1041 = vmul.f32 %v1031, %v1037
  %v1042 = vmul.f32 %v1004, %v899
  %v1043 = vmul.f32 %v1006, %v900
  %v1044 = vadd.f32 %v1040, %v1042
  %v1045 = vadd.f32 %v1041, %v1043
  %1048 = vrot.lane.b32.xlu0 %v1044, 96
  %v1049 = vpop.permute.xlu0 %1048
  %1050 = vrot.lane.b32.xlu0 %v1045, 96
  %v1051 = vpop.permute.xlu0 %1050
  %1054 = vst.msk [vmem:[%s3 + $0x6] sm:$0x1] %vm182, %v1049
  %1055 = vst.msk [vmem:[%s3 + $0xe] sm:$0x1] %vm182, %v1051
  %v1056 = vld [vmem:[%s0 + $0x7] sm:$0x1]
  %v1057 = vld [vmem:[%s0 + $0xf] sm:$0x1]
  %v1058 = vrot.slane %v1045, 7
  %v1059 = vsel %vm188, %v1058, %v1044
  %1060 = vrot.lane.b32.xlu0 %v1059, 96
  %v1061 = vpop.permute.xlu0 %1060
  %v1062 = vsel %vm28, %v1061, 0
  %1064 = vmatprep.subr.mxu0 0.0
  %1065 = vmatpush1.msra.mxu0 %v20
  %1066 = vmatprep.subr.mxu0 0.0
  %1067 = vmatpush1.msra.mxu0 %v21
  %1068 = vmatprep.subr.mxu0 0.0
  %1069 = vmatpush1.msra.mxu0 %v22
  %1070 = vmatprep.subr.mxu0 0.0
  %1071 = vmatpush1.msra.mxu0 %v23
  %1072 = vmatprep.subr.mxu0 0.0
  %1073 = vmatpush1.msra.mxu0 0.0
  %1074 = vmatprep.subr.mxu0 0.0
  %1075 = vmatpush1.msra.mxu0 0.0
  %1076 = vmatprep.subr.mxu0 0.0
  %1077 = vmatpush1.msra.mxu0 0.0
  %1078 = vmatprep.subr.mxu0 0.0
  %1079 = vmatpush1.msra.mxu0 0.0
  %1080 = vmatprep.subr.mxu0 0.0
  %1081 = vmatpush1.msra.mxu0 0.0
  %1082 = vmatprep.subr.mxu0 0.0
  %1083 = vmatpush1.msra.mxu0 0.0
  %1084 = vmatprep.subr.mxu0 0.0
  %1085 = vmatpush1.msra.mxu0 0.0
  %1086 = vmatprep.subr.mxu0 0.0
  %1087 = vmatpush1.msra.mxu0 0.0
  %1088 = vmatprep.subr.mxu0 0.0
  %1089 = vmatpush1.msra.mxu0 0.0
  %1090 = vmatprep.subr.mxu0 0.0
  %1091 = vmatpush1.msra.mxu0 0.0
  %1092 = vmatprep.subr.mxu0 0.0
  %1093 = vmatpush1.msra.mxu0 0.0
  %1094 = vmatprep.subr.mxu0 0.0
  %1095 = vmatpush1.msra.mxu0 0.0
  %1096 = vmatprep.subr.mxu0 0.0
  %1097 = vmatpush1.msra.mxu0 0.0
  %1098 = vmatprep.subr.mxu0 0.0
  %1099 = vmatpush1.msra.mxu0 0.0
  %1100 = vmatprep.subr.mxu0 0.0
  %1101 = vmatpush1.msra.mxu0 0.0
  %1102 = vmatprep.subr.mxu0 0.0
  %1103 = vmatpush1.msra.mxu0 0.0
  %1104 = vmatprep.subr.mxu0 0.0
  %1105 = vmatpush1.msra.mxu0 0.0
  %1106 = vmatprep.subr.mxu0 0.0
  %1107 = vmatpush1.msra.mxu0 0.0
  %1108 = vmatprep.subr.mxu0 0.0
  %1109 = vmatpush1.msra.mxu0 0.0
  %1110 = vmatprep.subr.mxu0 0.0
  %1111 = vmatpush1.msra.mxu0 0.0
  %1112 = vmatprep.subr.mxu0 0.0
  %1113 = vmatpush1.msra.mxu0 0.0
  %1114 = vmatprep.subr.mxu0 0.0
  %1115 = vmatpush1.msra.mxu0 0.0
  %1116 = vmatprep.subr.mxu0 0.0
  %1117 = vmatpush1.msra.mxu0 0.0
  %1118 = vmatprep.subr.mxu0 0.0
  %1119 = vmatpush1.msra.mxu0 0.0
  %1120 = vmatprep.subr.mxu0 0.0
  %1121 = vmatpush1.msra.mxu0 0.0
  %1122 = vmatprep.subr.mxu0 0.0
  %1123 = vmatpush1.msra.mxu0 0.0
  %1124 = vmatprep.subr.mxu0 0.0
  %1125 = vmatpush1.msra.mxu0 0.0
  %1126 = vmatprep.subr.mxu0 0.0
  %1127 = vmatpush1.msra.mxu0 0.0
  %1128 = vmatprep.mubr.f32.mxu0 0.0
  %1129 = vmatmul.mubr.f32.gmra.mrb[0].mxu0 %v1062
  %v1130 = vpop.f32.mrb[0].mxu0
  %v1131 = vadd.f32 0.0, %v1130
  %v1132 = vpop.f32.mrb[0].mxu0
  %1133 = vdwg.mxu0
  %v1135 = vrot.slane %v1131, 1
  %v1138 = vadd.f32 %v1056, %v1131
  %v1139 = vadd.f32 %v1057, %v1135
  %v1140 = vxor.u32 %v1138, 2147483648
  %v1141 = vxor.u32 %v1139, 2147483648
  %v1142 = vmul.f32 %v1140, 1.442695
  %v1143 = vpow.pop %v1142
  %v1144 = vmul.f32 %v1141, 1.442695
  %v1145 = vpow.pop %v1144
  %v1146 = vadd.f32 %v1143, 1.0
  %v1147 = vadd.f32 %v1145, 1.0
  %v1148 = vrcp.pop %v1146
  %v1149 = vmul.f32 1.0, %v1148
  %v1150 = vrcp.pop %v1147
  %v1151 = vmul.f32 1.0, %v1150
  %v1152 = vadd.f32 %v1131, %v126
  %v1154 = vrot.slane %v1152, 1
  %1155 = vrot.lane.b32.xlu0 %v1152, 64
  %v1156 = vpop.permute.xlu0 %1155
  %1157 = vrot.lane.b32.xlu0 %v1154, 64
  %v1158 = vpop.permute.xlu0 %1157
  %v1161 = vmul.f32 %v1149, %v1156
  %v1162 = vmul.f32 %v1151, %v1158
  %1165 = vrot.lane.b32.xlu0 %v1161, 64
  %v1166 = vpop.permute.xlu0 %1165
  %1167 = vrot.lane.b32.xlu0 %v1162, 64
  %v1168 = vpop.permute.xlu0 %1167
  %v1171 = vadd.f32 %v1056, %v1166
  %v1172 = vadd.f32 %v1057, %v1168
  %v1173 = vtanh.pop %v1171
  %v1174 = vtanh.pop %v1172
  %v1175 = vsub.f32 1.0, %v1149
  %v1176 = vsub.f32 1.0, %v1151
  %1179 = vrot.lane.b32.xlu0 %v1173, 96
  %v1180 = vpop.permute.xlu0 %1179
  %1181 = vrot.lane.b32.xlu0 %v1174, 96
  %v1182 = vpop.permute.xlu0 %1181
  %v1185 = vmul.f32 %v1175, %v1180
  %v1186 = vmul.f32 %v1176, %v1182
  %v1187 = vmul.f32 %v1149, %v1044
  %v1188 = vmul.f32 %v1151, %v1045
  %v1189 = vadd.f32 %v1185, %v1187
  %v1190 = vadd.f32 %v1186, %v1188
  %1193 = vrot.lane.b32.xlu0 %v1189, 96
  %v1194 = vpop.permute.xlu0 %1193
  %1195 = vrot.lane.b32.xlu0 %v1190, 96
  %v1196 = vpop.permute.xlu0 %1195
  %1199 = vst.msk [vmem:[%s3 + $0x7] sm:$0x1] %vm182, %v1194
  %1200 = vst.msk [vmem:[%s3 + $0xf] sm:$0x1] %vm182, %v1196
  %v1201 = vrot.slane %v1190, 7
  %v1202 = vsel %vm188, %v1201, %v1189
  %1203 = vrot.lane.b32.xlu0 %v1202, 96
  %v1204 = vpop.permute.xlu0 %1203
  %vm1206 = vcmask 254976
  %1207 = vst.msk [vmem:[#allocation2] sm:$0x3] %vm1206, %v1204
  // Predicated region
  $region18: #{gru_decoder_forward.4} parent=0 // pred_check
    _
  $region19: #{gru_decoder_forward.4} parent=0 // pred_check_branch
    %1209 = sbr.rel (0) target = $region21
  $region20: #{gru_decoder_forward.4} parent=0 // pred_region
    _
  $region21: #{gru_decoder_forward.4} parent=0 // pred_fallthru
    _
  // Predicated region
  $region22: #{gru_decoder_forward.4} parent=0 // pred_check
    _
  $region23: #{gru_decoder_forward.4} parent=0 // pred_check_branch
    %1211 = sbr.rel (0) target = $region25
  $region24: #{gru_decoder_forward.4} parent=0 // pred_region
    _
  $region25: #{gru_decoder_forward.4} parent=0 // pred_fallthru
    _

</llo_original>
